<compile_context>
chip_gen: v7x
topology: tpu7x:2x2x1
jax: 0.10.0
libtpu: 0.0.40
codegen_flags: <defaults>
</compile_context>

<pallas_src>
import functools

import jax
import jax.numpy as jnp
from jax.experimental import pallas as pl
from jax.experimental.pallas import tpu as pltpu

EPS = 1e-5
LANE = 128


def _round_up(v, m):
    return (v + m - 1) // m * m


def _vmem_limit(block_bytes):
    # double-buffered pipeline blocks + slack for in-kernel temporaries
    need = 2 * block_bytes + (8 << 20)
    return int(min(64 << 20, max(32 << 20, need)))


# ---------------------------------------------------------------------------
# Kernels
# ---------------------------------------------------------------------------
def _conv1_kernel(x_ref, w1_ref, *rest, taps, sc_tap, wrow, ho, wo, has_sc):
    """conv3x3(stride) on the phase-decomposed input (+ fused 1x1 shortcut conv).

    x_ref  : (1, n_phase, Lph, cin_pad) bf16  phase-decomposed, zero-margined input
    w1_ref : (9*cin_pad, cout_pad) bf16       K-concatenated tap weights (resident)
    y1_ref : (1, L1, cout_pad) bf16           halo layout: pixel (i,j) at (i+1)*wrow+(j+1)
    s*/q*  : (1, 1, cout_pad) f32             per-image sum / sum of squares
    """
    if has_sc:
        wsc_ref, y1_ref, s1_ref, q1_ref, ysc_ref, ssc_ref, qsc_ref = rest
    else:
        y1_ref, s1_ref, q1_ref = rest

    l1 = y1_ref.shape[1]
    # One K = 9*cin_pad matmul instead of 9 accumulating K = cin_pad dots.
    xs = [x_ref[0, ph, pl.ds(off, l1), :] for (ph, off) in taps]
    acc = jnp.dot(jnp.concatenate(xs, axis=1), w1_ref[...],
                  preferred_element_type=jnp.float32)

    # Keep only real output pixels: the halo rows/cols of the layout (and the
    # wrap-around garbage columns) are zeroed so they pollute neither the BN
    # statistics nor the downstream conv taps.
    p = jax.lax.broadcasted_iota(jnp.int32, (l1, 1), 0)
    c = p % wrow
    keep = (c >= 1) & (c <= wo) & (p >= wrow) & (p < (ho + 1) * wrow)
    acc = jnp.where(keep, acc, 0.0)
    y1_ref[0] = acc.astype(y1_ref.dtype)
    s1_ref[0] = jnp.sum(acc, axis=0, keepdims=True)
    q1_ref[0] = jnp.sum(acc * acc, axis=0, keepdims=True)

    if has_sc:
        qc = ysc_ref.shape[1]
        ph, off = sc_tap
        accs = jnp.dot(x_ref[0, ph, pl.ds(off, qc), :], wsc_ref[...],
                       preferred_element_type=jnp.float32)
        pc = jax.lax.broadcasted_iota(jnp.int32, (qc, 1), 0)
        accs = jnp.where((pc % wrow) < wo, accs, 0.0)
        ysc_ref[0] = accs.astype(ysc_ref.dtype)
        ssc_ref[0] = jnp.sum(accs, axis=0, keepdims=True)
        qsc_ref[0] = jnp.sum(accs * accs, axis=0, keepdims=True)


def _conv2_kernel(y1_ref, sc_ref, sh_ref, w2_ref, y2_ref, s2_ref, q2_ref, xbuf,
                  *, wrow, ho, wo):
    """Fused BN1 (folded scale/shift) + ReLU on the input, then conv3x3 stride 1.

    y1_ref : (1, L1, cpad) bf16   raw conv1 output, halo layout
    sc/sh  : (1, cpad) f32        folded BN1 scale / shift (resident)
    w2_ref : (9*cpad, cpad) bf16  resident tap weights
    y2_ref : (1, Qc, cpad) bf16   raw conv2 output, compact layout
    xbuf   : VMEM (L1, cpad) bf16 activated, halo-re-zeroed conv2 operand
    """
    l1 = y1_ref.shape[1]
    qc = y2_ref.shape[1]

    u = jnp.maximum(y1_ref[0].astype(jnp.float32) * sc_ref[...] + sh_ref[...], 0.0)
    p = jax.lax.broadcasted_iota(jnp.int32, (l1, 1), 0)
    c = p % wrow
    keep = (c >= 1) & (c <= wo) & (p >= wrow) & (p < (ho + 1) * wrow)
    xbuf[...] = jnp.where(keep, u, 0.0).astype(xbuf.dtype)

    xs = [xbuf[pl.ds(dh * wrow + dw, qc), :] for dh in range(3) for dw in range(3)]
    acc = jnp.dot(jnp.concatenate(xs, axis=1), w2_ref[...],
                  preferred_element_type=jnp.float32)
    pc = jax.lax.broadcasted_iota(jnp.int32, (qc, 1), 0)
    acc = jnp.where((pc % wrow) < wo, acc, 0.0)
    y2_ref[0] = acc.astype(y2_ref.dtype)
    s2_ref[0] = jnp.sum(acc, axis=0, keepdims=True)
    q2_ref[0] = jnp.sum(acc * acc, axis=0, keepdims=True)


def _final_kernel(*refs, has_proj, res_off):
    """BN2 + shortcut (folded BN_sc or identity) + final ReLU in one FMA pass."""
    if has_proj:
        y2_ref, s2_ref, b2_ref, ysc_ref, ssc_ref, bsc_ref, out_ref = refs
        res = ysc_ref[0].astype(jnp.float32) * ssc_ref[...] + bsc_ref[...]
    else:
        y2_ref, s2_ref, b2_ref, x_ref, out_ref = refs
        q = y2_ref.shape[1]
        res = x_ref[0, 0, pl.ds(res_off, q), :].astype(jnp.float32)
    y = y2_ref[0].astype(jnp.float32) * s2_ref[...] + b2_ref[...]
    out_ref[0] = jnp.maximum(y + res, 0.0)


# ---------------------------------------------------------------------------
# Batch-norm folding (tiny vectors, plain JAX)
# ---------------------------------------------------------------------------
def _fold_bn(psum, psq, gamma, beta, count):
    mean = jnp.sum(psum[:, 0, :], axis=0) / count
    var = jnp.maximum(jnp.sum(psq[:, 0, :], axis=0) / count - mean * mean, 0.0)
    s = gamma * jax.lax.rsqrt(var + EPS)
    return s.reshape(1, -1), (beta - mean * s).reshape(1, -1)


# ---------------------------------------------------------------------------
# Parameters
# ---------------------------------------------------------------------------
def init_basic_block_params(key, in_channel, out_channel, stride):
    k1, k2, k3 = jax.random.split(key, 3)
    params = {
        "w1": 0.1 * jax.random.normal(k1, (out_channel, in_channel, 3, 3), jnp.float32),
        "g1": jnp.ones((out_channel,), jnp.float32),
        "b1": jnp.zeros((out_channel,), jnp.float32),
        "w2": 0.1 * jax.random.normal(k2, (out_channel, out_channel, 3, 3), jnp.float32),
        "g2": jnp.ones((out_channel,), jnp.float32),
        "b2": jnp.zeros((out_channel,), jnp.float32),
    }
    if in_channel != out_channel or stride != 1:
        params["ws"] = 0.1 * jax.random.normal(
            k3, (out_channel, in_channel, 1, 1), jnp.float32)
        params["gs"] = jnp.ones((out_channel,), jnp.float32)
        params["bs"] = jnp.zeros((out_channel,), jnp.float32)
    return params


def _prep_conv_weight(w_oihw, cin_pad, cout_pad):
    """(O,I,kh,kw) -> K-concatenated (kh*kw*cin_pad, cout_pad) bf16 (tap-major)."""
    co, ci, kh, kw = w_oihw.shape
    w = jnp.transpose(w_oihw, (2, 3, 1, 0))
    w = jnp.pad(w, ((0, 0), (0, 0), (0, cin_pad - ci), (0, cout_pad - co)))
    return w.reshape(kh * kw * cin_pad, cout_pad).astype(jnp.bfloat16)


def _prep_vec(v, cpad):
    return jnp.pad(v.astype(jnp.float32), (0, cpad - v.shape[0]))


def prepare_basic_block_params(params, in_channel, out_channel):
    """One-time weight reshape / 128-lane padding / bf16 cast (hoisted)."""
    cin_pad = _round_up(in_channel, LANE)
    cout_pad = _round_up(out_channel, LANE)
    prep = {
        "w1": _prep_conv_weight(params["w1"], cin_pad, cout_pad),
        "g1": _prep_vec(params["g1"], cout_pad),
        "b1": _prep_vec(params["b1"], cout_pad),
        "w2": _prep_conv_weight(params["w2"], cout_pad, cout_pad),
        "g2": _prep_vec(params["g2"], cout_pad),
        "b2": _prep_vec(params["b2"], cout_pad),
    }
    if "ws" in params:
        prep["ws"] = _prep_conv_weight(params["ws"], cin_pad, cout_pad)
        prep["gs"] = _prep_vec(params["gs"], cout_pad)
        prep["bs"] = _prep_vec(params["bs"], cout_pad)
    return prep


# ---------------------------------------------------------------------------
# BasicBlock forward
# ---------------------------------------------------------------------------
@functools.partial(jax.jit, static_argnames=("stride", "out_channel"))
def basic_block_forward(x_nchw, prep, *, stride, out_channel):
    st = stride
    x = jnp.transpose(x_nchw, (0, 2, 3, 1)).astype(jnp.float32)     # NCHW -> NHWC
    n, h, w, cin = x.shape
    cin_pad = _round_up(cin, LANE)
    cout_pad = _round_up(out_channel, LANE)
    x = jnp.pad(x, ((0, 0), (0, 0), (0, 0), (0, cin_pad - cin)))    # lane-dense C

    ho = (h + 2 - 3) // st + 1
    wo = (w + 2 - 3) // st + 1
    wrow = wo + 3                      # shared row pitch of every flat layout
    e = 2 // st                        # max per-phase tap offset (rows / cols)
    hph = ho + 4 + e                   # per-phase rows (covers all tap reads)
    margin = 1 + st                    # conv pad(1) + one halo output row worth
    sp = min(st, 3)
    n_ph = sp * sp
    lph = hph * wrow
    l1 = (ho + 3) * wrow               # halo-layout length (conv1 output)
    qc = ho * wrow                     # compact-layout length
    has_proj = "ws" in prep

    # Phase-decomposed, zero-margined input; built once, stored bf16.
    xp = jnp.pad(x, ((0, 0),
                     (margin, st * hph - h - margin),
                     (margin, st * wrow - w - margin),
                     (0, 0))).astype(jnp.bfloat16)
    phases = [xp[:, a::st, b::st, :] for a in range(sp) for b in range(sp)]
    xph = jnp.stack(phases, axis=1).reshape(n, n_ph, lph, cin_pad)

    # Static tap tables (phase index, flat offset) for conv1 / shortcut.
    taps = tuple(((dh % st) * sp + (dw % st), (dh // st) * wrow + (dw // st))
                 for dh in range(3) for dw in range(3))
    d = (1 + st) // st
    sc_tap = (((1 + st) % st) * sp + ((1 + st) % st), d * (wrow + 1))

    bpe16, bpe32 = 2, 4

    # ---- pass 1: conv1 (+ fused 1x1 shortcut conv): raw outputs + BN sums ----
    out_shape1 = [jax.ShapeDtypeStruct((n, l1, cout_pad), jnp.bfloat16),
                  jax.ShapeDtypeStruct((n, 1, cout_pad), jnp.float32),
                  jax.ShapeDtypeStruct((n, 1, cout_pad), jnp.float32)]
    in_specs1 = [pl.BlockSpec((1, n_ph, lph, cin_pad), lambda i: (i, 0, 0, 0)),
                 pl.BlockSpec((9 * cin_pad, cout_pad), lambda i: (0, 0))]
    out_specs1 = [pl.BlockSpec((1, l1, cout_pad), lambda i: (i, 0, 0)),
                  pl.BlockSpec((1, 1, cout_pad), lambda i: (i, 0, 0)),
                  pl.BlockSpec((1, 1, cout_pad), lambda i: (i, 0, 0))]
    args1 = [xph, prep["w1"]]
    flops1 = 2 * n * l1 * (9 * cin_pad) * cout_pad
    bytes1 = (n * n_ph * lph * cin_pad + 9 * cin_pad * cout_pad
              + n * l1 * cout_pad) * bpe16 + 2 * n * cout_pad * bpe32
    blk1 = (n_ph * lph * cin_pad + 9 * cin_pad * cout_pad + l1 * cout_pad
            + l1 * 9 * cin_pad) * bpe16 + l1 * cout_pad * bpe32
    if has_proj:
        in_specs1.append(pl.BlockSpec((cin_pad, cout_pad), lambda i: (0, 0)))
        args1.append(prep["ws"])
        out_shape1 += [jax.ShapeDtypeStruct((n, qc, cout_pad), jnp.bfloat16),
                       jax.ShapeDtypeStruct((n, 1, cout_pad), jnp.float32),
                       jax.ShapeDtypeStruct((n, 1, cout_pad), jnp.float32)]
        out_specs1 += [pl.BlockSpec((1, qc, cout_pad), lambda i: (i, 0, 0)),
                       pl.BlockSpec((1, 1, cout_pad), lambda i: (i, 0, 0)),
                       pl.BlockSpec((1, 1, cout_pad), lambda i: (i, 0, 0))]
        flops1 += 2 * n * qc * cin_pad * cout_pad
        bytes1 += (cin_pad * cout_pad + n * qc * cout_pad) * bpe16
        blk1 += (cin_pad * cout_pad + qc * cout_pad) * bpe16 + qc * cout_pad * bpe32

    res1 = pl.pallas_call(
        functools.partial(_conv1_kernel, taps=taps, sc_tap=sc_tap, wrow=wrow,
                          ho=ho, wo=wo, has_sc=has_proj),
        out_shape=out_shape1,
        grid=(n,),
        in_specs=in_specs1,
        out_specs=out_specs1,
        compiler_params=pltpu.CompilerParams(
            dimension_semantics=("parallel",),
            vmem_limit_bytes=_vmem_limit(blk1)),
        cost_estimate=pl.CostEstimate(flops=flops1, transcendentals=0,
                                      bytes_accessed=bytes1),
    )(*args1)
    if has_proj:
        y1, p1s, p1q, ysc, pscs, pscq = res1
    else:
        y1, p1s, p1q = res1

    cnt = jnp.float32(n * ho * wo)
    s1, t1 = _fold_bn(p1s, p1q, prep["g1"], prep["b1"], cnt)

    # ---- pass 2: (BN1 + ReLU fused) -> conv3x3 stride 1 -----------------------
    flops2 = 2 * n * qc * (9 * cout_pad) * cout_pad
    bytes2 = (n * l1 * cout_pad + 9 * cout_pad * cout_pad
              + n * qc * cout_pad) * bpe16 + 4 * n * cout_pad * bpe32
    blk2 = (2 * l1 * cout_pad + 9 * cout_pad * cout_pad + qc * cout_pad
            + qc * 9 * cout_pad) * bpe16 + qc * cout_pad * bpe32
    y2, p2s, p2q = pl.pallas_call(
        functools.partial(_conv2_kernel, wrow=wrow, ho=ho, wo=wo),
        out_shape=[jax.ShapeDtypeStruct((n, qc, cout_pad), jnp.bfloat16),
                   jax.ShapeDtypeStruct((n, 1, cout_pad), jnp.float32),
                   jax.ShapeDtypeStruct((n, 1, cout_pad), jnp.float32)],
        grid=(n,),
        in_specs=[pl.BlockSpec((1, l1, cout_pad), lambda i: (i, 0, 0)),
                  pl.BlockSpec((1, cout_pad), lambda i: (0, 0)),
                  pl.BlockSpec((1, cout_pad), lambda i: (0, 0)),
                  pl.BlockSpec((9 * cout_pad, cout_pad), lambda i: (0, 0))],
        out_specs=[pl.BlockSpec((1, qc, cout_pad), lambda i: (i, 0, 0)),
                   pl.BlockSpec((1, 1, cout_pad), lambda i: (i, 0, 0)),
                   pl.BlockSpec((1, 1, cout_pad), lambda i: (i, 0, 0))],
        scratch_shapes=[pltpu.VMEM((l1, cout_pad), jnp.bfloat16)],
        compiler_params=pltpu.CompilerParams(
            dimension_semantics=("parallel",),
            vmem_limit_bytes=_vmem_limit(blk2)),
        cost_estimate=pl.CostEstimate(flops=flops2, transcendentals=0,
                                      bytes_accessed=bytes2),
    )(y1, s1, t1, prep["w2"])
    s2, t2 = _fold_bn(p2s, p2q, prep["g2"], prep["b2"], cnt)

    # ---- pass 3: BN2 + shortcut (folded BN_sc or identity) + final ReLU -------
    if has_proj:
        ssc, tsc = _fold_bn(pscs, pscq, prep["gs"], prep["bs"], cnt)
        in_specs3 = [pl.BlockSpec((1, qc, cout_pad), lambda i: (i, 0, 0)),
                     pl.BlockSpec((1, cout_pad), lambda i: (0, 0)),
                     pl.BlockSpec((1, cout_pad), lambda i: (0, 0)),
                     pl.BlockSpec((1, qc, cout_pad), lambda i: (i, 0, 0)),
                     pl.BlockSpec((1, cout_pad), lambda i: (0, 0)),
                     pl.BlockSpec((1, cout_pad), lambda i: (0, 0))]
        args3 = [y2, s2, t2, ysc, ssc, tsc]
        res_off = 0
        blk3 = 2 * qc * cout_pad * bpe16 + qc * cout_pad * bpe32
    else:
        # identity shortcut: read x straight from the already-resident conv1
        # input buffer at a constant offset (no extra layout copy, no extra pass)
        in_specs3 = [pl.BlockSpec((1, qc, cout_pad), lambda i: (i, 0, 0)),
                     pl.BlockSpec((1, cout_pad), lambda i: (0, 0)),
                     pl.BlockSpec((1, cout_pad), lambda i: (0, 0)),
                     pl.BlockSpec((1, n_ph, lph, cin_pad), lambda i: (i, 0, 0, 0))]
        args3 = [y2, s2, t2, xph]
        res_off = 2 * (wrow + 1)
        blk3 = (qc * cout_pad + n_ph * lph * cin_pad) * bpe16 + qc * cout_pad * bpe32
    bytes3 = n * blk3

    out_flat = pl.pallas_call(
        functools.partial(_final_kernel, has_proj=has_proj, res_off=res_off),
        out_shape=jax.ShapeDtypeStruct((n, qc, cout_pad), jnp.float32),
        grid=(n,),
        in_specs=in_specs3,
        out_specs=pl.BlockSpec((1, qc, cout_pad), lambda i: (i, 0, 0)),
        compiler_params=pltpu.CompilerParams(
            dimension_semantics=("parallel",),
            vmem_limit_bytes=_vmem_limit(blk3)),
        cost_estimate=pl.CostEstimate(flops=6 * n * qc * cout_pad,
                                      transcendentals=0, bytes_accessed=bytes3),
    )(*args3)

    out = out_flat.reshape(n, ho, wrow, cout_pad)[:, :, :wo, :out_channel]
    return jnp.transpose(out, (0, 3, 1, 2))                         # NHWC -> NCHW


# ---------------------------------------------------------------------------
# Pure-JAX reference (numerical sanity check)
# ---------------------------------------------------------------------------
def _ref_conv(x_nhwc, w_oihw, stride, padding):
    return jax.lax.conv_general_dilated(
        x_nhwc, jnp.transpose(w_oihw, (2, 3, 1, 0)),
        window_strides=(stride, stride),
        padding=((padding, padding), (padding, padding)),
        dimension_numbers=("NHWC", "HWIO", "NHWC"))


def _ref_bn(y, g, b):
    mean = jnp.mean(y, axis=(0, 1, 2))
    var = jnp.mean(jnp.square(y - mean), axis=(0, 1, 2))
    return (y - mean) * jax.lax.rsqrt(var + EPS) * g + b


def basic_block_reference(x_nchw, params, stride):
    x = jnp.transpose(x_nchw, (0, 2, 3, 1)).astype(jnp.float32)
    y = jnp.maximum(_ref_bn(_ref_conv(x, params["w1"], stride, 1),
                            params["g1"], params["b1"]), 0.0)
    y = _ref_bn(_ref_conv(y, params["w2"], 1, 1), params["g2"], params["b2"])
    if "ws" in params:
        sc = _ref_bn(_ref_conv(x, params["ws"], stride, 0),
                     params["gs"], params["bs"])
    else:
        sc = x
    return jnp.transpose(jnp.maximum(y + sc, 0.0), (0, 3, 1, 2))


if __name__ == "__main__":
    key = jax.random.PRNGKey(0)

    # Test 1: projection shortcut (stride 2, channel change), x NCHW (2,4,16,16).
    k1, k2, key = jax.random.split(key, 3)
    in_c, out_c, stride = 4, 8, 2
    x = jax.random.normal(k1, (2, in_c, 16, 16), jnp.float32)
    params = init_basic_block_params(k2, in_c, out_c, stride)
    prep = prepare_basic_block_params(params, in_c, out_c)
    out = jax.block_until_ready(
        basic_block_forward(x, prep, stride=stride, out_channel=out_c))
    assert out.shape == (2, out_c, 8, 8)
    assert bool(jnp.all(out >= 0.0))                                # final ReLU
    ref = basic_block_reference(x, params, stride)
    assert bool(jnp.allclose(out, ref, atol=1e-1, rtol=1e-1)), (
        float(jnp.max(jnp.abs(out - ref))))

    # Test 2: identity shortcut (stride 1, in == out channels), x (2,8,16,16).
    k1, k2, key = jax.random.split(key, 3)
    in_c = out_c = 8
    x = jax.random.normal(k1, (2, in_c, 16, 16), jnp.float32)
    params = init_basic_block_params(k2, in_c, out_c, 1)
    prep = prepare_basic_block_params(params, in_c, out_c)
    out = jax.block_until_ready(
        basic_block_forward(x, prep, stride=1, out_channel=out_c))
    assert out.shape == (2, out_c, 16, 16)
    assert bool(jnp.all(out >= 0.0))
    ref = basic_block_reference(x, params, 1)
    assert bool(jnp.allclose(out, ref, atol=1e-1, rtol=1e-1)), (
        float(jnp.max(jnp.abs(out - ref))))

    print("KERNEL_OK")
</pallas_src>

<mosaic_0001>
module attributes {stable_mosaic.version = 11 : i64} {
  func.func @_conv1_kernel(%arg0: i32, %arg1: memref<1x4x143x128xbf16, #tpu.memory_space<vmem>>, %arg2: memref<1152x128xbf16, #tpu.memory_space<vmem>>, %arg3: memref<128x128xbf16, #tpu.memory_space<vmem>>, %arg4: memref<1x121x128xbf16, #tpu.memory_space<vmem>>, %arg5: memref<1x1x128xf32, #tpu.memory_space<vmem>>, %arg6: memref<1x1x128xf32, #tpu.memory_space<vmem>>, %arg7: memref<1x88x128xbf16, #tpu.memory_space<vmem>>, %arg8: memref<1x1x128xf32, #tpu.memory_space<vmem>>, %arg9: memref<1x1x128xf32, #tpu.memory_space<vmem>>) attributes {dimension_semantics = [#tpu.dimension_semantics<parallel>], iteration_bounds = array<i64: 2>, scalar_prefetch = 0 : i64, scratch_operands = 0 : i64, tpu.core_type = #tpu.core_type<tc>, window_params = [{transform_indices = @transform_0, window_bounds = array<i64: 1, 4, 143, 128>}, {pipeline_mode = #tpu.pipeline_mode<synchronous>, transform_indices = @transform_1, window_bounds = array<i64: 1152, 128>}, {pipeline_mode = #tpu.pipeline_mode<synchronous>, transform_indices = @transform_2, window_bounds = array<i64: 128, 128>}, {transform_indices = @transform_3, window_bounds = array<i64: 1, 121, 128>}, {transform_indices = @transform_4, window_bounds = array<i64: 1, 1, 128>}, {transform_indices = @transform_5, window_bounds = array<i64: 1, 1, 128>}, {transform_indices = @transform_6, window_bounds = array<i64: 1, 88, 128>}, {transform_indices = @transform_7, window_bounds = array<i64: 1, 1, 128>}, {transform_indices = @transform_8, window_bounds = array<i64: 1, 1, 128>}]} {
    %c0 = arith.constant 0 : index
    %c0_0 = arith.constant 0 : index
    %c0_1 = arith.constant 0 : index
    %c0_2 = arith.constant 0 : index
    %0 = vector.load %arg1[%c0, %c0_0, %c0_1, %c0_2] : memref<1x4x143x128xbf16, #tpu.memory_space<vmem>>, vector<1x1x121x128xbf16>
    %1 = vector.shape_cast %0 : vector<1x1x121x128xbf16> to vector<121x128xbf16>
    %c0_3 = arith.constant 0 : index
    %c1 = arith.constant 1 : index
    %c0_4 = arith.constant 0 : index
    %c0_5 = arith.constant 0 : index
    %2 = vector.load %arg1[%c0_3, %c1, %c0_4, %c0_5] : memref<1x4x143x128xbf16, #tpu.memory_space<vmem>>, vector<1x1x121x128xbf16>
    %3 = vector.shape_cast %2 : vector<1x1x121x128xbf16> to vector<121x128xbf16>
    %c0_6 = arith.constant 0 : index
    %c0_7 = arith.constant 0 : index
    %c1_8 = arith.constant 1 : index
    %c0_9 = arith.constant 0 : index
    %4 = vector.load %arg1[%c0_6, %c0_7, %c1_8, %c0_9] : memref<1x4x143x128xbf16, #tpu.memory_space<vmem>>, vector<1x1x121x128xbf16>
    %5 = vector.shape_cast %4 : vector<1x1x121x128xbf16> to vector<121x128xbf16>
    %c0_10 = arith.constant 0 : index
    %c2 = arith.constant 2 : index
    %c0_11 = arith.constant 0 : index
    %c0_12 = arith.constant 0 : index
    %6 = vector.load %arg1[%c0_10, %c2, %c0_11, %c0_12] : memref<1x4x143x128xbf16, #tpu.memory_space<vmem>>, vector<1x1x121x128xbf16>
    %7 = vector.shape_cast %6 : vector<1x1x121x128xbf16> to vector<121x128xbf16>
    %c0_13 = arith.constant 0 : index
    %c3 = arith.constant 3 : index
    %c0_14 = arith.constant 0 : index
    %c0_15 = arith.constant 0 : index
    %8 = vector.load %arg1[%c0_13, %c3, %c0_14, %c0_15] : memref<1x4x143x128xbf16, #tpu.memory_space<vmem>>, vector<1x1x121x128xbf16>
    %9 = vector.shape_cast %8 : vector<1x1x121x128xbf16> to vector<121x128xbf16>
    %c0_16 = arith.constant 0 : index
    %c2_17 = arith.constant 2 : index
    %c1_18 = arith.constant 1 : index
    %c0_19 = arith.constant 0 : index
    %10 = vector.load %arg1[%c0_16, %c2_17, %c1_18, %c0_19] : memref<1x4x143x128xbf16, #tpu.memory_space<vmem>>, vector<1x1x121x128xbf16>
    %11 = vector.shape_cast %10 : vector<1x1x121x128xbf16> to vector<121x128xbf16>
    %c0_20 = arith.constant 0 : index
    %c0_21 = arith.constant 0 : index
    %c11 = arith.constant 11 : index
    %c0_22 = arith.constant 0 : index
    %12 = vector.load %arg1[%c0_20, %c0_21, %c11, %c0_22] : memref<1x4x143x128xbf16, #tpu.memory_space<vmem>>, vector<1x1x121x128xbf16>
    %13 = vector.shape_cast %12 : vector<1x1x121x128xbf16> to vector<121x128xbf16>
    %c0_23 = arith.constant 0 : index
    %c1_24 = arith.constant 1 : index
    %c11_25 = arith.constant 11 : index
    %c0_26 = arith.constant 0 : index
    %14 = vector.load %arg1[%c0_23, %c1_24, %c11_25, %c0_26] : memref<1x4x143x128xbf16, #tpu.memory_space<vmem>>, vector<1x1x121x128xbf16>
    %15 = vector.shape_cast %14 : vector<1x1x121x128xbf16> to vector<121x128xbf16>
    %c0_27 = arith.constant 0 : index
    %c0_28 = arith.constant 0 : index
    %c12 = arith.constant 12 : index
    %c0_29 = arith.constant 0 : index
    %16 = vector.load %arg1[%c0_27, %c0_28, %c12, %c0_29] : memref<1x4x143x128xbf16, #tpu.memory_space<vmem>>, vector<1x1x121x128xbf16>
    %17 = vector.shape_cast %16 : vector<1x1x121x128xbf16> to vector<121x128xbf16>
    %18 = tpu.concatenate %1, %3, %5, %7, %9, %11, %13, %15, %17 in 1 : vector<121x128xbf16>, vector<121x128xbf16>, vector<121x128xbf16>, vector<121x128xbf16>, vector<121x128xbf16>, vector<121x128xbf16>, vector<121x128xbf16>, vector<121x128xbf16>, vector<121x128xbf16> -> vector<121x1152xbf16>
    %c0_30 = arith.constant 0 : index
    %c0_31 = arith.constant 0 : index
    %19 = vector.load %arg2[%c0_30, %c0_31] : memref<1152x128xbf16, #tpu.memory_space<vmem>>, vector<1152x128xbf16>
    %cst = arith.constant dense<0.000000e+00> : vector<121x128xf32>
    %20 = tpu.matmul %18, %19, %cst {dimension_numbers = #tpu.dot_dimension_numbers<[1], [0], [0], [1], [0, 0, 1, 1], [], []>} : vector<121x1152xbf16>, vector<1152x128xbf16>, vector<121x128xf32> -> vector<121x128xf32>
    %21 = tpu.iota {dimensions = array<i32: 0>} : vector<121x1xi32>
    %c11_i32 = arith.constant 11 : i32
    %c0_i32 = arith.constant 0 : i32
    %22 = arith.cmpi eq, %c11_i32, %c0_i32 : i32
    %c1_i32 = arith.constant 1 : i32
    %23 = arith.select %22, %c1_i32, %c11_i32 : i32
    %24 = vector.broadcast %23 : i32 to vector<121x1xi32>
    %25 = arith.remsi %21, %24 : vector<121x1xi32>
    %c0_i32_32 = arith.constant 0 : i32
    %26 = vector.broadcast %c0_i32_32 : i32 to vector<121x1xi32>
    %27 = arith.cmpi ne, %25, %26 : vector<121x1xi32>
    %c0_i32_33 = arith.constant 0 : i32
    %28 = vector.broadcast %c0_i32_33 : i32 to vector<121x1xi32>
    %29 = arith.cmpi slt, %25, %28 : vector<121x1xi32>
    %c0_i32_34 = arith.constant 0 : i32
    %30 = arith.cmpi slt, %23, %c0_i32_34 : i32
    %31 = vector.broadcast %30 : i1 to vector<121x1xi1>
    %32 = vector.broadcast %31 : vector<121x1xi1> to vector<121x1xi1>
    %33 = arith.xori %29, %32 : vector<121x1xi1>
    %34 = arith.andi %33, %27 : vector<121x1xi1>
    %35 = vector.broadcast %23 : i32 to vector<121x1xi32>
    %36 = arith.addi %25, %35 : vector<121x1xi32>
    %37 = arith.select %34, %36, %25 : vector<121x1xi1>, vector<121x1xi32>
    %c1_i32_35 = arith.constant 1 : i32
    %38 = vector.broadcast %c1_i32_35 : i32 to vector<121x1xi32>
    %39 = arith.cmpi sge, %37, %38 : vector<121x1xi32>
    %c8_i32 = arith.constant 8 : i32
    %40 = vector.broadcast %c8_i32 : i32 to vector<121x1xi32>
    %41 = arith.cmpi sle, %37, %40 : vector<121x1xi32>
    %42 = arith.andi %39, %41 : vector<121x1xi1>
    %c11_i32_36 = arith.constant 11 : i32
    %43 = vector.broadcast %c11_i32_36 : i32 to vector<121x1xi32>
    %44 = arith.cmpi sge, %21, %43 : vector<121x1xi32>
    %45 = arith.andi %42, %44 : vector<121x1xi1>
    %c99_i32 = arith.constant 99 : i32
    %46 = vector.broadcast %c99_i32 : i32 to vector<121x1xi32>
    %47 = arith.cmpi slt, %21, %46 : vector<121x1xi32>
    %48 = arith.andi %45, %47 : vector<121x1xi1>
    %cst_37 = arith.constant 0.000000e+00 : f32
    %49 = vector.shape_cast %48 : vector<121x1xi1> to vector<121x1xi1>
    %50 = vector.broadcast %49 : vector<121x1xi1> to vector<121x128xi1>
    %51 = vector.broadcast %cst_37 : f32 to vector<121x128xf32>
    %52 = arith.select %50, %20, %51 : vector<121x128xi1>, vector<121x128xf32>
    %53 = arith.truncf %52 : vector<121x128xf32> to vector<121x128xbf16>
    %c0_38 = arith.constant 0 : index
    %c0_39 = arith.constant 0 : index
    %c0_40 = arith.constant 0 : index
    %54 = vector.load %arg4[%c0_38, %c0_39, %c0_40] : memref<1x121x128xbf16, #tpu.memory_space<vmem>>, vector<1x121x128xbf16>
    %55 = vector.shape_cast %54 : vector<1x121x128xbf16> to vector<121x128xbf16>
    %56 = vector.shape_cast %53 : vector<121x128xbf16> to vector<1x121x128xbf16>
    tpu.vector_store %arg4[%c0_38, %c0_39, %c0_40], %56 {strides = array<i32>} : memref<1x121x128xbf16, #tpu.memory_space<vmem>>, vector<1x121x128xbf16>,
    %cst_41 = arith.constant dense<0.000000e+00> : vector<128xf32>
    %57 = vector.multi_reduction <add>, %52, %cst_41 [0] : vector<121x128xf32> to vector<128xf32>
    %58 = vector.shape_cast %57 : vector<128xf32> to vector<1x128xf32>
    %c0_42 = arith.constant 0 : index
    %c0_43 = arith.constant 0 : index
    %c0_44 = arith.constant 0 : index
    %59 = vector.load %arg5[%c0_42, %c0_43, %c0_44] : memref<1x1x128xf32, #tpu.memory_space<vmem>>, vector<1x1x128xf32>
    %60 = vector.shape_cast %59 : vector<1x1x128xf32> to vector<1x128xf32>
    %61 = vector.shape_cast %58 : vector<1x128xf32> to vector<1x1x128xf32>
    tpu.vector_store %arg5[%c0_42, %c0_43, %c0_44], %61 {strides = array<i32>} : memref<1x1x128xf32, #tpu.memory_space<vmem>>, vector<1x1x128xf32>,
    %62 = arith.mulf %52, %52 : vector<121x128xf32>
    %cst_45 = arith.constant dense<0.000000e+00> : vector<128xf32>
    %63 = vector.multi_reduction <add>, %62, %cst_45 [0] : vector<121x128xf32> to vector<128xf32>
    %64 = vector.shape_cast %63 : vector<128xf32> to vector<1x128xf32>
    %c0_46 = arith.constant 0 : index
    %c0_47 = arith.constant 0 : index
    %c0_48 = arith.constant 0 : index
    %65 = vector.load %arg6[%c0_46, %c0_47, %c0_48] : memref<1x1x128xf32, #tpu.memory_space<vmem>>, vector<1x1x128xf32>
    %66 = vector.shape_cast %65 : vector<1x1x128xf32> to vector<1x128xf32>
    %67 = vector.shape_cast %64 : vector<1x128xf32> to vector<1x1x128xf32>
    tpu.vector_store %arg6[%c0_46, %c0_47, %c0_48], %67 {strides = array<i32>} : memref<1x1x128xf32, #tpu.memory_space<vmem>>, vector<1x1x128xf32>,
    %c0_49 = arith.constant 0 : index
    %c3_50 = arith.constant 3 : index
    %c12_51 = arith.constant 12 : index
    %c0_52 = arith.constant 0 : index
    %68 = vector.load %arg1[%c0_49, %c3_50, %c12_51, %c0_52] : memref<1x4x143x128xbf16, #tpu.memory_space<vmem>>, vector<1x1x88x128xbf16>
    %69 = vector.shape_cast %68 : vector<1x1x88x128xbf16> to vector<88x128xbf16>
    %c0_53 = arith.constant 0 : index
    %c0_54 = arith.constant 0 : index
    %70 = vector.load %arg3[%c0_53, %c0_54] : memref<128x128xbf16, #tpu.memory_space<vmem>>, vector<128x128xbf16>
    %cst_55 = arith.constant dense<0.000000e+00> : vector<88x128xf32>
    %71 = tpu.matmul %69, %70, %cst_55 {dimension_numbers = #tpu.dot_dimension_numbers<[1], [0], [0], [1], [0, 0, 1, 1], [], []>} : vector<88x128xbf16>, vector<128x128xbf16>, vector<88x128xf32> -> vector<88x128xf32>
    %72 = tpu.iota {dimensions = array<i32: 0>} : vector<88x1xi32>
    %c11_i32_56 = arith.constant 11 : i32
    %c0_i32_57 = arith.constant 0 : i32
    %73 = arith.cmpi eq, %c11_i32_56, %c0_i32_57 : i32
    %c1_i32_58 = arith.constant 1 : i32
    %74 = arith.select %73, %c1_i32_58, %c11_i32_56 : i32
    %75 = vector.broadcast %74 : i32 to vector<88x1xi32>
    %76 = arith.remsi %72, %75 : vector<88x1xi32>
    %c0_i32_59 = arith.constant 0 : i32
    %77 = vector.broadcast %c0_i32_59 : i32 to vector<88x1xi32>
    %78 = arith.cmpi ne, %76, %77 : vector<88x1xi32>
    %c0_i32_60 = arith.constant 0 : i32
    %79 = vector.broadcast %c0_i32_60 : i32 to vector<88x1xi32>
    %80 = arith.cmpi slt, %76, %79 : vector<88x1xi32>
    %c0_i32_61 = arith.constant 0 : i32
    %81 = arith.cmpi slt, %74, %c0_i32_61 : i32
    %82 = vector.broadcast %81 : i1 to vector<88x1xi1>
    %83 = vector.broadcast %82 : vector<88x1xi1> to vector<88x1xi1>
    %84 = arith.xori %80, %83 : vector<88x1xi1>
    %85 = arith.andi %84, %78 : vector<88x1xi1>
    %86 = vector.broadcast %74 : i32 to vector<88x1xi32>
    %87 = arith.addi %76, %86 : vector<88x1xi32>
    %88 = arith.select %85, %87, %76 : vector<88x1xi1>, vector<88x1xi32>
    %c8_i32_62 = arith.constant 8 : i32
    %89 = vector.broadcast %c8_i32_62 : i32 to vector<88x1xi32>
    %90 = arith.cmpi slt, %88, %89 : vector<88x1xi32>
    %cst_63 = arith.constant 0.000000e+00 : f32
    %91 = vector.shape_cast %90 : vector<88x1xi1> to vector<88x1xi1>
    %92 = vector.broadcast %91 : vector<88x1xi1> to vector<88x128xi1>
    %93 = vector.broadcast %cst_63 : f32 to vector<88x128xf32>
    %94 = arith.select %92, %71, %93 : vector<88x128xi1>, vector<88x128xf32>
    %95 = arith.truncf %94 : vector<88x128xf32> to vector<88x128xbf16>
    %c0_64 = arith.constant 0 : index
    %c0_65 = arith.constant 0 : index
    %c0_66 = arith.constant 0 : index
    %96 = vector.load %arg7[%c0_64, %c0_65, %c0_66] : memref<1x88x128xbf16, #tpu.memory_space<vmem>>, vector<1x88x128xbf16>
    %97 = vector.shape_cast %96 : vector<1x88x128xbf16> to vector<88x128xbf16>
    %98 = vector.shape_cast %95 : vector<88x128xbf16> to vector<1x88x128xbf16>
    tpu.vector_store %arg7[%c0_64, %c0_65, %c0_66], %98 {strides = array<i32>} : memref<1x88x128xbf16, #tpu.memory_space<vmem>>, vector<1x88x128xbf16>,
    %cst_67 = arith.constant dense<0.000000e+00> : vector<128xf32>
    %99 = vector.multi_reduction <add>, %94, %cst_67 [0] : vector<88x128xf32> to vector<128xf32>
    %100 = vector.shape_cast %99 : vector<128xf32> to vector<1x128xf32>
    %c0_68 = arith.constant 0 : index
    %c0_69 = arith.constant 0 : index
    %c0_70 = arith.constant 0 : index
    %101 = vector.load %arg8[%c0_68, %c0_69, %c0_70] : memref<1x1x128xf32, #tpu.memory_space<vmem>>, vector<1x1x128xf32>
    %102 = vector.shape_cast %101 : vector<1x1x128xf32> to vector<1x128xf32>
    %103 = vector.shape_cast %100 : vector<1x128xf32> to vector<1x1x128xf32>
    tpu.vector_store %arg8[%c0_68, %c0_69, %c0_70], %103 {strides = array<i32>} : memref<1x1x128xf32, #tpu.memory_space<vmem>>, vector<1x1x128xf32>,
    %104 = arith.mulf %94, %94 : vector<88x128xf32>
    %cst_71 = arith.constant dense<0.000000e+00> : vector<128xf32>
    %105 = vector.multi_reduction <add>, %104, %cst_71 [0] : vector<88x128xf32> to vector<128xf32>
    %106 = vector.shape_cast %105 : vector<128xf32> to vector<1x128xf32>
    %c0_72 = arith.constant 0 : index
    %c0_73 = arith.constant 0 : index
    %c0_74 = arith.constant 0 : index
    %107 = vector.load %arg9[%c0_72, %c0_73, %c0_74] : memref<1x1x128xf32, #tpu.memory_space<vmem>>, vector<1x1x128xf32>
    %108 = vector.shape_cast %107 : vector<1x1x128xf32> to vector<1x128xf32>
    %109 = vector.shape_cast %106 : vector<1x128xf32> to vector<1x1x128xf32>
    tpu.vector_store %arg9[%c0_72, %c0_73, %c0_74], %109 {strides = array<i32>} : memref<1x1x128xf32, #tpu.memory_space<vmem>>, vector<1x1x128xf32>,
    return
  }
  func.func @transform_0(%arg0: i32) -> (i32, i32, i32, i32) {
    %c0_i32 = arith.constant 0 : i32
    %c0_i32_0 = arith.constant 0 : i32
    %c0_i32_1 = arith.constant 0 : i32
    %c0_i32_2 = arith.constant 0 : i32
    return %arg0, %c0_i32, %c0_i32_0, %c0_i32_1 : i32, i32, i32, i32
  }
  func.func @transform_1(%arg0: i32) -> (i32, i32) {
    %c0_i32 = arith.constant 0 : i32
    %c0_i32_0 = arith.constant 0 : i32
    %c0_i32_1 = arith.constant 0 : i32
    return %c0_i32, %c0_i32_0 : i32, i32
  }
  func.func @transform_2(%arg0: i32) -> (i32, i32) {
    %c0_i32 = arith.constant 0 : i32
    %c0_i32_0 = arith.constant 0 : i32
    %c0_i32_1 = arith.constant 0 : i32
    return %c0_i32, %c0_i32_0 : i32, i32
  }
  func.func @transform_3(%arg0: i32) -> (i32, i32, i32) {
    %c0_i32 = arith.constant 0 : i32
    %c0_i32_0 = arith.constant 0 : i32
    %c0_i32_1 = arith.constant 0 : i32
    return %arg0, %c0_i32, %c0_i32_0 : i32, i32, i32
  }
  func.func @transform_4(%arg0: i32) -> (i32, i32, i32) {
    %c0_i32 = arith.constant 0 : i32
    %c0_i32_0 = arith.constant 0 : i32
    %c0_i32_1 = arith.constant 0 : i32
    return %arg0, %c0_i32, %c0_i32_0 : i32, i32, i32
  }
  func.func @transform_5(%arg0: i32) -> (i32, i32, i32) {
    %c0_i32 = arith.constant 0 : i32
    %c0_i32_0 = arith.constant 0 : i32
    %c0_i32_1 = arith.constant 0 : i32
    return %arg0, %c0_i32, %c0_i32_0 : i32, i32, i32
  }
  func.func @transform_6(%arg0: i32) -> (i32, i32, i32) {
    %c0_i32 = arith.constant 0 : i32
    %c0_i32_0 = arith.constant 0 : i32
    %c0_i32_1 = arith.constant 0 : i32
    return %arg0, %c0_i32, %c0_i32_0 : i32, i32, i32
  }
  func.func @transform_7(%arg0: i32) -> (i32, i32, i32) {
    %c0_i32 = arith.constant 0 : i32
    %c0_i32_0 = arith.constant 0 : i32
    %c0_i32_1 = arith.constant 0 : i32
    return %arg0, %c0_i32, %c0_i32_0 : i32, i32, i32
  }
  func.func @transform_8(%arg0: i32) -> (i32, i32, i32) {
    %c0_i32 = arith.constant 0 : i32
    %c0_i32_0 = arith.constant 0 : i32
    %c0_i32_1 = arith.constant 0 : i32
    return %arg0, %c0_i32, %c0_i32_0 : i32, i32, i32
  }
}

module attributes {stable_mosaic.version = 11 : i64} {
  func.func @_conv2_kernel(%arg0: i32, %arg1: memref<1x121x128xbf16, #tpu.memory_space<vmem>>, %arg2: memref<1x128xf32, #tpu.memory_space<vmem>>, %arg3: memref<1x128xf32, #tpu.memory_space<vmem>>, %arg4: memref<1152x128xbf16, #tpu.memory_space<vmem>>, %arg5: memref<1x88x128xbf16, #tpu.memory_space<vmem>>, %arg6: memref<1x1x128xf32, #tpu.memory_space<vmem>>, %arg7: memref<1x1x128xf32, #tpu.memory_space<vmem>>, %arg8: memref<121x128xbf16, #tpu.memory_space<vmem>>) attributes {dimension_semantics = [#tpu.dimension_semantics<parallel>], iteration_bounds = array<i64: 2>, scalar_prefetch = 0 : i64, scratch_operands = 1 : i64, tpu.core_type = #tpu.core_type<tc>, window_params = [{transform_indices = @transform_0, window_bounds = array<i64: 1, 121, 128>}, {pipeline_mode = #tpu.pipeline_mode<synchronous>, transform_indices = @transform_1, window_bounds = array<i64: 1, 128>}, {pipeline_mode = #tpu.pipeline_mode<synchronous>, transform_indices = @transform_2, window_bounds = array<i64: 1, 128>}, {pipeline_mode = #tpu.pipeline_mode<synchronous>, transform_indices = @transform_3, window_bounds = array<i64: 1152, 128>}, {transform_indices = @transform_4, window_bounds = array<i64: 1, 88, 128>}, {transform_indices = @transform_5, window_bounds = array<i64: 1, 1, 128>}, {transform_indices = @transform_6, window_bounds = array<i64: 1, 1, 128>}]} {
    %c0 = arith.constant 0 : index
    %c0_0 = arith.constant 0 : index
    %c0_1 = arith.constant 0 : index
    %0 = vector.load %arg1[%c0, %c0_0, %c0_1] : memref<1x121x128xbf16, #tpu.memory_space<vmem>>, vector<1x121x128xbf16>
    %1 = vector.shape_cast %0 : vector<1x121x128xbf16> to vector<121x128xbf16>
    %2 = arith.extf %1 : vector<121x128xbf16> to vector<121x128xf32>
    %c0_2 = arith.constant 0 : index
    %c0_3 = arith.constant 0 : index
    %3 = vector.load %arg2[%c0_2, %c0_3] : memref<1x128xf32, #tpu.memory_space<vmem>>, vector<1x128xf32>
    %4 = vector.broadcast %3 : vector<1x128xf32> to vector<121x128xf32>
    %5 = arith.mulf %2, %4 : vector<121x128xf32>
    %c0_4 = arith.constant 0 : index
    %c0_5 = arith.constant 0 : index
    %6 = vector.load %arg3[%c0_4, %c0_5] : memref<1x128xf32, #tpu.memory_space<vmem>>, vector<1x128xf32>
    %7 = vector.broadcast %6 : vector<1x128xf32> to vector<121x128xf32>
    %8 = arith.addf %5, %7 : vector<121x128xf32>
    %cst = arith.constant 0.000000e+00 : f32
    %9 = vector.broadcast %cst : f32 to vector<121x128xf32>
    %10 = arith.maximumf %8, %9 : vector<121x128xf32>
    %11 = tpu.iota {dimensions = array<i32: 0>} : vector<121x1xi32>
    %c11_i32 = arith.constant 11 : i32
    %c0_i32 = arith.constant 0 : i32
    %12 = arith.cmpi eq, %c11_i32, %c0_i32 : i32
    %c1_i32 = arith.constant 1 : i32
    %13 = arith.select %12, %c1_i32, %c11_i32 : i32
    %14 = vector.broadcast %13 : i32 to vector<121x1xi32>
    %15 = arith.remsi %11, %14 : vector<121x1xi32>
    %c0_i32_6 = arith.constant 0 : i32
    %16 = vector.broadcast %c0_i32_6 : i32 to vector<121x1xi32>
    %17 = arith.cmpi ne, %15, %16 : vector<121x1xi32>
    %c0_i32_7 = arith.constant 0 : i32
    %18 = vector.broadcast %c0_i32_7 : i32 to vector<121x1xi32>
    %19 = arith.cmpi slt, %15, %18 : vector<121x1xi32>
    %c0_i32_8 = arith.constant 0 : i32
    %20 = arith.cmpi slt, %13, %c0_i32_8 : i32
    %21 = vector.broadcast %20 : i1 to vector<121x1xi1>
    %22 = vector.broadcast %21 : vector<121x1xi1> to vector<121x1xi1>
    %23 = arith.xori %19, %22 : vector<121x1xi1>
    %24 = arith.andi %23, %17 : vector<121x1xi1>
    %25 = vector.broadcast %13 : i32 to vector<121x1xi32>
    %26 = arith.addi %15, %25 : vector<121x1xi32>
    %27 = arith.select %24, %26, %15 : vector<121x1xi1>, vector<121x1xi32>
    %c1_i32_9 = arith.constant 1 : i32
    %28 = vector.broadcast %c1_i32_9 : i32 to vector<121x1xi32>
    %29 = arith.cmpi sge, %27, %28 : vector<121x1xi32>
    %c8_i32 = arith.constant 8 : i32
    %30 = vector.broadcast %c8_i32 : i32 to vector<121x1xi32>
    %31 = arith.cmpi sle, %27, %30 : vector<121x1xi32>
    %32 = arith.andi %29, %31 : vector<121x1xi1>
    %c11_i32_10 = arith.constant 11 : i32
    %33 = vector.broadcast %c11_i32_10 : i32 to vector<121x1xi32>
    %34 = arith.cmpi sge, %11, %33 : vector<121x1xi32>
    %35 = arith.andi %32, %34 : vector<121x1xi1>
    %c99_i32 = arith.constant 99 : i32
    %36 = vector.broadcast %c99_i32 : i32 to vector<121x1xi32>
    %37 = arith.cmpi slt, %11, %36 : vector<121x1xi32>
    %38 = arith.andi %35, %37 : vector<121x1xi1>
    %cst_11 = arith.constant 0.000000e+00 : f32
    %39 = vector.shape_cast %38 : vector<121x1xi1> to vector<121x1xi1>
    %40 = vector.broadcast %39 : vector<121x1xi1> to vector<121x128xi1>
    %41 = vector.broadcast %cst_11 : f32 to vector<121x128xf32>
    %42 = arith.select %40, %10, %41 : vector<121x128xi1>, vector<121x128xf32>
    %43 = arith.truncf %42 : vector<121x128xf32> to vector<121x128xbf16>
    %c0_12 = arith.constant 0 : index
    %c0_13 = arith.constant 0 : index
    %44 = vector.load %arg8[%c0_12, %c0_13] : memref<121x128xbf16, #tpu.memory_space<vmem>>, vector<121x128xbf16>
    tpu.vector_store %arg8[%c0_12, %c0_13], %43 {strides = array<i32>} : memref<121x128xbf16, #tpu.memory_space<vmem>>, vector<121x128xbf16>,
    %c0_14 = arith.constant 0 : index
    %c0_15 = arith.constant 0 : index
    %45 = vector.load %arg8[%c0_14, %c0_15] : memref<121x128xbf16, #tpu.memory_space<vmem>>, vector<88x128xbf16>
    %c1 = arith.constant 1 : index
    %c0_16 = arith.constant 0 : index
    %46 = vector.load %arg8[%c1, %c0_16] : memref<121x128xbf16, #tpu.memory_space<vmem>>, vector<88x128xbf16>
    %c2 = arith.constant 2 : index
    %c0_17 = arith.constant 0 : index
    %47 = vector.load %arg8[%c2, %c0_17] : memref<121x128xbf16, #tpu.memory_space<vmem>>, vector<88x128xbf16>
    %c11 = arith.constant 11 : index
    %c0_18 = arith.constant 0 : index
    %48 = vector.load %arg8[%c11, %c0_18] : memref<121x128xbf16, #tpu.memory_space<vmem>>, vector<88x128xbf16>
    %c12 = arith.constant 12 : index
    %c0_19 = arith.constant 0 : index
    %49 = vector.load %arg8[%c12, %c0_19] : memref<121x128xbf16, #tpu.memory_space<vmem>>, vector<88x128xbf16>
    %c13 = arith.constant 13 : index
    %c0_20 = arith.constant 0 : index
    %50 = vector.load %arg8[%c13, %c0_20] : memref<121x128xbf16, #tpu.memory_space<vmem>>, vector<88x128xbf16>
    %c22 = arith.constant 22 : index
    %c0_21 = arith.constant 0 : index
    %51 = vector.load %arg8[%c22, %c0_21] : memref<121x128xbf16, #tpu.memory_space<vmem>>, vector<88x128xbf16>
    %c23 = arith.constant 23 : index
    %c0_22 = arith.constant 0 : index
    %52 = vector.load %arg8[%c23, %c0_22] : memref<121x128xbf16, #tpu.memory_space<vmem>>, vector<88x128xbf16>
    %c24 = arith.constant 24 : index
    %c0_23 = arith.constant 0 : index
    %53 = vector.load %arg8[%c24, %c0_23] : memref<121x128xbf16, #tpu.memory_space<vmem>>, vector<88x128xbf16>
    %54 = tpu.concatenate %45, %46, %47, %48, %49, %50, %51, %52, %53 in 1 : vector<88x128xbf16>, vector<88x128xbf16>, vector<88x128xbf16>, vector<88x128xbf16>, vector<88x128xbf16>, vector<88x128xbf16>, vector<88x128xbf16>, vector<88x128xbf16>, vector<88x128xbf16> -> vector<88x1152xbf16>
    %c0_24 = arith.constant 0 : index
    %c0_25 = arith.constant 0 : index
    %55 = vector.load %arg4[%c0_24, %c0_25] : memref<1152x128xbf16, #tpu.memory_space<vmem>>, vector<1152x128xbf16>
    %cst_26 = arith.constant dense<0.000000e+00> : vector<88x128xf32>
    %56 = tpu.matmul %54, %55, %cst_26 {dimension_numbers = #tpu.dot_dimension_numbers<[1], [0], [0], [1], [0, 0, 1, 1], [], []>} : vector<88x1152xbf16>, vector<1152x128xbf16>, vector<88x128xf32> -> vector<88x128xf32>
    %57 = tpu.iota {dimensions = array<i32: 0>} : vector<88x1xi32>
    %c11_i32_27 = arith.constant 11 : i32
    %c0_i32_28 = arith.constant 0 : i32
    %58 = arith.cmpi eq, %c11_i32_27, %c0_i32_28 : i32
    %c1_i32_29 = arith.constant 1 : i32
    %59 = arith.select %58, %c1_i32_29, %c11_i32_27 : i32
    %60 = vector.broadcast %59 : i32 to vector<88x1xi32>
    %61 = arith.remsi %57, %60 : vector<88x1xi32>
    %c0_i32_30 = arith.constant 0 : i32
    %62 = vector.broadcast %c0_i32_30 : i32 to vector<88x1xi32>
    %63 = arith.cmpi ne, %61, %62 : vector<88x1xi32>
    %c0_i32_31 = arith.constant 0 : i32
    %64 = vector.broadcast %c0_i32_31 : i32 to vector<88x1xi32>
    %65 = arith.cmpi slt, %61, %64 : vector<88x1xi32>
    %c0_i32_32 = arith.constant 0 : i32
    %66 = arith.cmpi slt, %59, %c0_i32_32 : i32
    %67 = vector.broadcast %66 : i1 to vector<88x1xi1>
    %68 = vector.broadcast %67 : vector<88x1xi1> to vector<88x1xi1>
    %69 = arith.xori %65, %68 : vector<88x1xi1>
    %70 = arith.andi %69, %63 : vector<88x1xi1>
    %71 = vector.broadcast %59 : i32 to vector<88x1xi32>
    %72 = arith.addi %61, %71 : vector<88x1xi32>
    %73 = arith.select %70, %72, %61 : vector<88x1xi1>, vector<88x1xi32>
    %c8_i32_33 = arith.constant 8 : i32
    %74 = vector.broadcast %c8_i32_33 : i32 to vector<88x1xi32>
    %75 = arith.cmpi slt, %73, %74 : vector<88x1xi32>
    %cst_34 = arith.constant 0.000000e+00 : f32
    %76 = vector.shape_cast %75 : vector<88x1xi1> to vector<88x1xi1>
    %77 = vector.broadcast %76 : vector<88x1xi1> to vector<88x128xi1>
    %78 = vector.broadcast %cst_34 : f32 to vector<88x128xf32>
    %79 = arith.select %77, %56, %78 : vector<88x128xi1>, vector<88x128xf32>
    %80 = arith.truncf %79 : vector<88x128xf32> to vector<88x128xbf16>
    %c0_35 = arith.constant 0 : index
    %c0_36 = arith.constant 0 : index
    %c0_37 = arith.constant 0 : index
    %81 = vector.load %arg5[%c0_35, %c0_36, %c0_37] : memref<1x88x128xbf16, #tpu.memory_space<vmem>>, vector<1x88x128xbf16>
    %82 = vector.shape_cast %81 : vector<1x88x128xbf16> to vector<88x128xbf16>
    %83 = vector.shape_cast %80 : vector<88x128xbf16> to vector<1x88x128xbf16>
    tpu.vector_store %arg5[%c0_35, %c0_36, %c0_37], %83 {strides = array<i32>} : memref<1x88x128xbf16, #tpu.memory_space<vmem>>, vector<1x88x128xbf16>,
    %cst_38 = arith.constant dense<0.000000e+00> : vector<128xf32>
    %84 = vector.multi_reduction <add>, %79, %cst_38 [0] : vector<88x128xf32> to vector<128xf32>
    %85 = vector.shape_cast %84 : vector<128xf32> to vector<1x128xf32>
    %c0_39 = arith.constant 0 : index
    %c0_40 = arith.constant 0 : index
    %c0_41 = arith.constant 0 : index
    %86 = vector.load %arg6[%c0_39, %c0_40, %c0_41] : memref<1x1x128xf32, #tpu.memory_space<vmem>>, vector<1x1x128xf32>
    %87 = vector.shape_cast %86 : vector<1x1x128xf32> to vector<1x128xf32>
    %88 = vector.shape_cast %85 : vector<1x128xf32> to vector<1x1x128xf32>
    tpu.vector_store %arg6[%c0_39, %c0_40, %c0_41], %88 {strides = array<i32>} : memref<1x1x128xf32, #tpu.memory_space<vmem>>, vector<1x1x128xf32>,
    %89 = arith.mulf %79, %79 : vector<88x128xf32>
    %cst_42 = arith.constant dense<0.000000e+00> : vector<128xf32>
    %90 = vector.multi_reduction <add>, %89, %cst_42 [0] : vector<88x128xf32> to vector<128xf32>
    %91 = vector.shape_cast %90 : vector<128xf32> to vector<1x128xf32>
    %c0_43 = arith.constant 0 : index
    %c0_44 = arith.constant 0 : index
    %c0_45 = arith.constant 0 : index
    %92 = vector.load %arg7[%c0_43, %c0_44, %c0_45] : memref<1x1x128xf32, #tpu.memory_space<vmem>>, vector<1x1x128xf32>
    %93 = vector.shape_cast %92 : vector<1x1x128xf32> to vector<1x128xf32>
    %94 = vector.shape_cast %91 : vector<1x128xf32> to vector<1x1x128xf32>
    tpu.vector_store %arg7[%c0_43, %c0_44, %c0_45], %94 {strides = array<i32>} : memref<1x1x128xf32, #tpu.memory_space<vmem>>, vector<1x1x128xf32>,
    return
  }
  func.func @transform_0(%arg0: i32) -> (i32, i32, i32) {
    %c0_i32 = arith.constant 0 : i32
    %c0_i32_0 = arith.constant 0 : i32
    %c0_i32_1 = arith.constant 0 : i32
    return %arg0, %c0_i32, %c0_i32_0 : i32, i32, i32
  }
  func.func @transform_1(%arg0: i32) -> (i32, i32) {
    %c0_i32 = arith.constant 0 : i32
    %c0_i32_0 = arith.constant 0 : i32
    %c0_i32_1 = arith.constant 0 : i32
    return %c0_i32, %c0_i32_0 : i32, i32
  }
  func.func @transform_2(%arg0: i32) -> (i32, i32) {
    %c0_i32 = arith.constant 0 : i32
    %c0_i32_0 = arith.constant 0 : i32
    %c0_i32_1 = arith.constant 0 : i32
    return %c0_i32, %c0_i32_0 : i32, i32
  }
  func.func @transform_3(%arg0: i32) -> (i32, i32) {
    %c0_i32 = arith.constant 0 : i32
    %c0_i32_0 = arith.constant 0 : i32
    %c0_i32_1 = arith.constant 0 : i32
    return %c0_i32, %c0_i32_0 : i32, i32
  }
  func.func @transform_4(%arg0: i32) -> (i32, i32, i32) {
    %c0_i32 = arith.constant 0 : i32
    %c0_i32_0 = arith.constant 0 : i32
    %c0_i32_1 = arith.constant 0 : i32
    return %arg0, %c0_i32, %c0_i32_0 : i32, i32, i32
  }
  func.func @transform_5(%arg0: i32) -> (i32, i32, i32) {
    %c0_i32 = arith.constant 0 : i32
    %c0_i32_0 = arith.constant 0 : i32
    %c0_i32_1 = arith.constant 0 : i32
    return %arg0, %c0_i32, %c0_i32_0 : i32, i32, i32
  }
  func.func @transform_6(%arg0: i32) -> (i32, i32, i32) {
    %c0_i32 = arith.constant 0 : i32
    %c0_i32_0 = arith.constant 0 : i32
    %c0_i32_1 = arith.constant 0 : i32
    return %arg0, %c0_i32, %c0_i32_0 : i32, i32, i32
  }
}

module attributes {stable_mosaic.version = 11 : i64} {
  func.func @_final_kernel(%arg0: i32, %arg1: memref<1x88x128xbf16, #tpu.memory_space<vmem>>, %arg2: memref<1x128xf32, #tpu.memory_space<vmem>>, %arg3: memref<1x128xf32, #tpu.memory_space<vmem>>, %arg4: memref<1x88x128xbf16, #tpu.memory_space<vmem>>, %arg5: memref<1x128xf32, #tpu.memory_space<vmem>>, %arg6: memref<1x128xf32, #tpu.memory_space<vmem>>, %arg7: memref<1x88x128xf32, #tpu.memory_space<vmem>>) attributes {dimension_semantics = [#tpu.dimension_semantics<parallel>], iteration_bounds = array<i64: 2>, scalar_prefetch = 0 : i64, scratch_operands = 0 : i64, tpu.core_type = #tpu.core_type<tc>, window_params = [{transform_indices = @transform_0, window_bounds = array<i64: 1, 88, 128>}, {pipeline_mode = #tpu.pipeline_mode<synchronous>, transform_indices = @transform_1, window_bounds = array<i64: 1, 128>}, {pipeline_mode = #tpu.pipeline_mode<synchronous>, transform_indices = @transform_2, window_bounds = array<i64: 1, 128>}, {transform_indices = @transform_3, window_bounds = array<i64: 1, 88, 128>}, {pipeline_mode = #tpu.pipeline_mode<synchronous>, transform_indices = @transform_4, window_bounds = array<i64: 1, 128>}, {pipeline_mode = #tpu.pipeline_mode<synchronous>, transform_indices = @transform_5, window_bounds = array<i64: 1, 128>}, {transform_indices = @transform_6, window_bounds = array<i64: 1, 88, 128>}]} {
    %c0 = arith.constant 0 : index
    %c0_0 = arith.constant 0 : index
    %c0_1 = arith.constant 0 : index
    %0 = vector.load %arg4[%c0, %c0_0, %c0_1] : memref<1x88x128xbf16, #tpu.memory_space<vmem>>, vector<1x88x128xbf16>
    %1 = vector.shape_cast %0 : vector<1x88x128xbf16> to vector<88x128xbf16>
    %2 = arith.extf %1 : vector<88x128xbf16> to vector<88x128xf32>
    %c0_2 = arith.constant 0 : index
    %c0_3 = arith.constant 0 : index
    %3 = vector.load %arg5[%c0_2, %c0_3] : memref<1x128xf32, #tpu.memory_space<vmem>>, vector<1x128xf32>
    %4 = vector.broadcast %3 : vector<1x128xf32> to vector<88x128xf32>
    %5 = arith.mulf %2, %4 : vector<88x128xf32>
    %c0_4 = arith.constant 0 : index
    %c0_5 = arith.constant 0 : index
    %6 = vector.load %arg6[%c0_4, %c0_5] : memref<1x128xf32, #tpu.memory_space<vmem>>, vector<1x128xf32>
    %7 = vector.broadcast %6 : vector<1x128xf32> to vector<88x128xf32>
    %8 = arith.addf %5, %7 : vector<88x128xf32>
    %c0_6 = arith.constant 0 : index
    %c0_7 = arith.constant 0 : index
    %c0_8 = arith.constant 0 : index
    %9 = vector.load %arg1[%c0_6, %c0_7, %c0_8] : memref<1x88x128xbf16, #tpu.memory_space<vmem>>, vector<1x88x128xbf16>
    %10 = vector.shape_cast %9 : vector<1x88x128xbf16> to vector<88x128xbf16>
    %11 = arith.extf %10 : vector<88x128xbf16> to vector<88x128xf32>
    %c0_9 = arith.constant 0 : index
    %c0_10 = arith.constant 0 : index
    %12 = vector.load %arg2[%c0_9, %c0_10] : memref<1x128xf32, #tpu.memory_space<vmem>>, vector<1x128xf32>
    %13 = vector.broadcast %12 : vector<1x128xf32> to vector<88x128xf32>
    %14 = arith.mulf %11, %13 : vector<88x128xf32>
    %c0_11 = arith.constant 0 : index
    %c0_12 = arith.constant 0 : index
    %15 = vector.load %arg3[%c0_11, %c0_12] : memref<1x128xf32, #tpu.memory_space<vmem>>, vector<1x128xf32>
    %16 = vector.broadcast %15 : vector<1x128xf32> to vector<88x128xf32>
    %17 = arith.addf %14, %16 : vector<88x128xf32>
    %18 = arith.addf %17, %8 : vector<88x128xf32>
    %cst = arith.constant 0.000000e+00 : f32
    %19 = vector.broadcast %cst : f32 to vector<88x128xf32>
    %20 = arith.maximumf %18, %19 : vector<88x128xf32>
    %c0_13 = arith.constant 0 : index
    %c0_14 = arith.constant 0 : index
    %c0_15 = arith.constant 0 : index
    %21 = vector.load %arg7[%c0_13, %c0_14, %c0_15] : memref<1x88x128xf32, #tpu.memory_space<vmem>>, vector<1x88x128xf32>
    %22 = vector.shape_cast %21 : vector<1x88x128xf32> to vector<88x128xf32>
    %23 = vector.shape_cast %20 : vector<88x128xf32> to vector<1x88x128xf32>
    tpu.vector_store %arg7[%c0_13, %c0_14, %c0_15], %23 {strides = array<i32>} : memref<1x88x128xf32, #tpu.memory_space<vmem>>, vector<1x88x128xf32>,
    return
  }
  func.func @transform_0(%arg0: i32) -> (i32, i32, i32) {
    %c0_i32 = arith.constant 0 : i32
    %c0_i32_0 = arith.constant 0 : i32
    %c0_i32_1 = arith.constant 0 : i32
    return %arg0, %c0_i32, %c0_i32_0 : i32, i32, i32
  }
  func.func @transform_1(%arg0: i32) -> (i32, i32) {
    %c0_i32 = arith.constant 0 : i32
    %c0_i32_0 = arith.constant 0 : i32
    %c0_i32_1 = arith.constant 0 : i32
    return %c0_i32, %c0_i32_0 : i32, i32
  }
  func.func @transform_2(%arg0: i32) -> (i32, i32) {
    %c0_i32 = arith.constant 0 : i32
    %c0_i32_0 = arith.constant 0 : i32
    %c0_i32_1 = arith.constant 0 : i32
    return %c0_i32, %c0_i32_0 : i32, i32
  }
  func.func @transform_3(%arg0: i32) -> (i32, i32, i32) {
    %c0_i32 = arith.constant 0 : i32
    %c0_i32_0 = arith.constant 0 : i32
    %c0_i32_1 = arith.constant 0 : i32
    return %arg0, %c0_i32, %c0_i32_0 : i32, i32, i32
  }
  func.func @transform_4(%arg0: i32) -> (i32, i32) {
    %c0_i32 = arith.constant 0 : i32
    %c0_i32_0 = arith.constant 0 : i32
    %c0_i32_1 = arith.constant 0 : i32
    return %c0_i32, %c0_i32_0 : i32, i32
  }
  func.func @transform_5(%arg0: i32) -> (i32, i32) {
    %c0_i32 = arith.constant 0 : i32
    %c0_i32_0 = arith.constant 0 : i32
    %c0_i32_1 = arith.constant 0 : i32
    return %c0_i32, %c0_i32_0 : i32, i32
  }
  func.func @transform_6(%arg0: i32) -> (i32, i32, i32) {
    %c0_i32 = arith.constant 0 : i32
    %c0_i32_0 = arith.constant 0 : i32
    %c0_i32_1 = arith.constant 0 : i32
    return %arg0, %c0_i32, %c0_i32_0 : i32, i32, i32
  }
}

</mosaic_0001>

<llo_original>
// kernel: basic_block_forward.5
$region0: #{basic_block_forward.5}
  #allocation0 [shape = 'u32[]', space=smem, size = 0x4, offset = 0x4, fixed_abs, tag = 'smem constant byte address 0x4 - core index']
  #allocation1 [shape = 'u32[144,128]{1,0:T(1,128)}', space=vmem, size = 0x12000, scoped, tag = 'internal scratch']
  %s0 = inlined_call_operand.vmem [shape: bf16[2,88,128], index: 0, kind: input, shape index: {}]
  %s1 = inlined_call_operand.vmem [shape: f32[1,128], index: 1, kind: input, shape index: {}]
  %s2 = inlined_call_operand.vmem [shape: f32[1,128], index: 2, kind: input, shape index: {}]
  %s3 = inlined_call_operand.vmem [shape: bf16[2,88,128], index: 3, kind: input, shape index: {}]
  %s4 = inlined_call_operand.vmem [shape: f32[1,128], index: 4, kind: input, shape index: {}]
  %s5 = inlined_call_operand.vmem [shape: f32[1,128], index: 5, kind: input, shape index: {}]
  %s6 = inlined_call_operand.vmem [shape: f32[2,88,128], index: 6, kind: output, shape index: {}]
  %s7 = sld [smem:[#allocation0]]
  $region57: #{basic_block_forward.5} parent=0
    _
  %s9 = ssub.s32 1, %s7
  %s10 = scalar_select 0, %s9, %s7
  loop: start=0, step=1, limit=4
  $region2: #{basic_block_forward.5} parent=0 // loop_pre_header
    _
  $region3: #{basic_block_forward.5} parent=0 // loop_header
    %s12 = sphi 0, %s16
    %p13 = scmp.ge.s32.totalorder %s12, 4
    %s22 = sphi 0, %s24
    %s25 = sphi 0, %s22
    %s26 = sphi 0, %s25
    %s42 = sphi 0, %s26
    %s46 = sphi 0, %s46
    %s48 = sphi 0, %s46
    %s49 = sphi 0, %s48
    %s63 = sphi 0, %s49
    %s67 = sphi 0, %s67
    %s69 = sphi 0, %s67
    %s70 = sphi 0, %s69
    %s84 = sphi 0, %s70
    %s90 = sphi 0, %s92
    %s93 = sphi 0, %s90
    %s94 = sphi 0, %s93
    %s110 = sphi 0, %s94
    %s114 = sphi 0, %s114
    %s116 = sphi 0, %s114
    %s117 = sphi 0, %s116
    %s131 = sphi 0, %s117
    %s135 = sphi 0, %s135
    %s137 = sphi 0, %s135
    %s138 = sphi 0, %s137
    %s152 = sphi 0, %s138
    %s158 = sphi 0, %s160
    %s161 = sphi 0, %s158
    %s162 = sphi 0, %s161
    %s178 = sphi 0, %s162
  $region4: #{basic_block_forward.5} parent=0 // loop_header_branch
    %15 = sbr.rel (%p13) target = $region8
  $region5: #{basic_block_forward.5} parent=0 // loop_body
    %s17 = ssub.s32 %s12, 1
    %s18 = ssub.s32 %s12, 2
    %s19 = sadd.s32 %s12, 1
    %s20 = ssub.s32 %s12, %s19
    %p21 = scmp.eq.s32.totalorder %s20, 0
    %s23 = sadd.s32 %s22, 1
    %s24 = scalar_select %p21, %s22, %s23
    %p27 = pneg %p21
    %p28 = scmp.eq.s32.totalorder %s12, 1
    %p29 = por %p27, %p28
    %p30 = scmp.ne.s32.totalorder %s22, %s25
    %p31 = scmp.eq.s32.totalorder %s12, 0
    %p32 = por %p30, %p31
    %p33 = scmp.ne.s32.totalorder %s22, %s25
    %p34 = scmp.eq.s32.totalorder %s17, 1
    %p35 = por %p33, %p34
    %p36 = scmp.ne.s32.totalorder %s25, %s26
    %p37 = scmp.eq.s32.totalorder %s17, 0
    %p38 = por %p36, %p37
    %p39 = scmp.ne.s32.totalorder %s25, %s26
    %p40 = scmp.eq.s32.totalorder %s18, 1
    %p41 = por %p39, %p40
    %p43 = scmp.ne.s32.totalorder %s26, %s42
    %p44 = scmp.eq.s32.totalorder %s18, 0
    %p45 = por %p43, %p44
    %s47 = sadd.s32 %s46, 1
    %p50 = scmp.eq.s32.totalorder %s12, 1
    %p51 = scmp.ne.s32.totalorder %s46, %s48
    %p52 = scmp.eq.s32.totalorder %s12, 0
    %p53 = por %p51, %p52
    %p54 = scmp.ne.s32.totalorder %s46, %s48
    %p55 = scmp.eq.s32.totalorder %s17, 1
    %p56 = por %p54, %p55
    %p57 = scmp.ne.s32.totalorder %s48, %s49
    %p58 = scmp.eq.s32.totalorder %s17, 0
    %p59 = por %p57, %p58
    %p60 = scmp.ne.s32.totalorder %s48, %s49
    %p61 = scmp.eq.s32.totalorder %s18, 1
    %p62 = por %p60, %p61
    %p64 = scmp.ne.s32.totalorder %s49, %s63
    %p65 = scmp.eq.s32.totalorder %s18, 0
    %p66 = por %p64, %p65
    %s68 = sadd.s32 %s67, 1
    %p71 = scmp.eq.s32.totalorder %s12, 1
    %p72 = scmp.ne.s32.totalorder %s67, %s69
    %p73 = scmp.eq.s32.totalorder %s12, 0
    %p74 = por %p72, %p73
    %p75 = scmp.ne.s32.totalorder %s67, %s69
    %p76 = scmp.eq.s32.totalorder %s17, 1
    %p77 = por %p75, %p76
    %p78 = scmp.ne.s32.totalorder %s69, %s70
    %p79 = scmp.eq.s32.totalorder %s17, 0
    %p80 = por %p78, %p79
    %p81 = scmp.ne.s32.totalorder %s69, %s70
    %p82 = scmp.eq.s32.totalorder %s18, 1
    %p83 = por %p81, %p82
    %p85 = scmp.ne.s32.totalorder %s70, %s84
    %p86 = scmp.eq.s32.totalorder %s18, 0
    %p87 = por %p85, %p86
    %s88 = ssub.s32 %s12, %s19
    %p89 = scmp.eq.s32.totalorder %s88, 0
    %s91 = sadd.s32 %s90, 1
    %s92 = scalar_select %p89, %s90, %s91
    %p95 = pneg %p89
    %p96 = scmp.eq.s32.totalorder %s12, 1
    %p97 = por %p95, %p96
    %p98 = scmp.ne.s32.totalorder %s90, %s93
    %p99 = scmp.eq.s32.totalorder %s12, 0
    %p100 = por %p98, %p99
    %p101 = scmp.ne.s32.totalorder %s90, %s93
    %p102 = scmp.eq.s32.totalorder %s17, 1
    %p103 = por %p101, %p102
    %p104 = scmp.ne.s32.totalorder %s93, %s94
    %p105 = scmp.eq.s32.totalorder %s17, 0
    %p106 = por %p104, %p105
    %p107 = scmp.ne.s32.totalorder %s93, %s94
    %p108 = scmp.eq.s32.totalorder %s18, 1
    %p109 = por %p107, %p108
    %p111 = scmp.ne.s32.totalorder %s94, %s110
    %p112 = scmp.eq.s32.totalorder %s18, 0
    %p113 = por %p111, %p112
    %s115 = sadd.s32 %s114, 1
    %p118 = scmp.eq.s32.totalorder %s12, 1
    %p119 = scmp.ne.s32.totalorder %s114, %s116
    %p120 = scmp.eq.s32.totalorder %s12, 0
    %p121 = por %p119, %p120
    %p122 = scmp.ne.s32.totalorder %s114, %s116
    %p123 = scmp.eq.s32.totalorder %s17, 1
    %p124 = por %p122, %p123
    %p125 = scmp.ne.s32.totalorder %s116, %s117
    %p126 = scmp.eq.s32.totalorder %s17, 0
    %p127 = por %p125, %p126
    %p128 = scmp.ne.s32.totalorder %s116, %s117
    %p129 = scmp.eq.s32.totalorder %s18, 1
    %p130 = por %p128, %p129
    %p132 = scmp.ne.s32.totalorder %s117, %s131
    %p133 = scmp.eq.s32.totalorder %s18, 0
    %p134 = por %p132, %p133
    %s136 = sadd.s32 %s135, 1
    %p139 = scmp.eq.s32.totalorder %s12, 1
    %p140 = scmp.ne.s32.totalorder %s135, %s137
    %p141 = scmp.eq.s32.totalorder %s12, 0
    %p142 = por %p140, %p141
    %p143 = scmp.ne.s32.totalorder %s135, %s137
    %p144 = scmp.eq.s32.totalorder %s17, 1
    %p145 = por %p143, %p144
    %p146 = scmp.ne.s32.totalorder %s137, %s138
    %p147 = scmp.eq.s32.totalorder %s17, 0
    %p148 = por %p146, %p147
    %p149 = scmp.ne.s32.totalorder %s137, %s138
    %p150 = scmp.eq.s32.totalorder %s18, 1
    %p151 = por %p149, %p150
    %p153 = scmp.ne.s32.totalorder %s138, %s152
    %p154 = scmp.eq.s32.totalorder %s18, 0
    %p155 = por %p153, %p154
    %s156 = ssub.s32 %s12, %s19
    %p157 = scmp.eq.s32.totalorder %s156, 0
    %s159 = sadd.s32 %s158, 1
    %s160 = scalar_select %p157, %s158, %s159
    %p163 = pneg %p157
    %p164 = scmp.eq.s32.totalorder %s12, 1
    %p165 = por %p163, %p164
    %p166 = scmp.ne.s32.totalorder %s158, %s161
    %p167 = scmp.eq.s32.totalorder %s12, 0
    %p168 = por %p166, %p167
    %p169 = scmp.ne.s32.totalorder %s158, %s161
    %p170 = scmp.eq.s32.totalorder %s17, 1
    %p171 = por %p169, %p170
    %p172 = scmp.ne.s32.totalorder %s161, %s162
    %p173 = scmp.eq.s32.totalorder %s17, 0
    %p174 = por %p172, %p173
    %p175 = scmp.ne.s32.totalorder %s161, %s162
    %p176 = scmp.eq.s32.totalorder %s18, 1
    %p177 = por %p175, %p176
    %p179 = scmp.ne.s32.totalorder %s162, %s178
    %p180 = scmp.eq.s32.totalorder %s18, 0
    %p181 = por %p179, %p180
    %p182 = scmp.le.s32.totalorder 1, %s12
    %p183 = scmp.lt.s32.totalorder %s12, 3
    %p184 = pnand %p182, %p183
    %p185 = pneg %p184
    // Predicated region
    $region9: #{basic_block_forward.5} parent=5 // pred_check
      _
    $region10: #{basic_block_forward.5} parent=5 // pred_check_branch
      %187 = sbr.rel (%p184) target = $region12
    $region11: #{basic_block_forward.5} parent=5 // pred_region
      %s188 = ssub.s32 %s12, 1
      // Predicated region
      $region13: #{basic_block_forward.5} parent=11 // pred_check
        %p189 = pneg %p59
      $region14: #{basic_block_forward.5} parent=11 // pred_check_branch
        %191 = sbr.rel (%p189) target = $region16
      $region15: #{basic_block_forward.5} parent=11 // pred_region
        _
      $region16: #{basic_block_forward.5} parent=11 // pred_fallthru
        _
      // Predicated region
      $region17: #{basic_block_forward.5} parent=11 // pred_check
        %p192 = pneg %p80
      $region18: #{basic_block_forward.5} parent=11 // pred_check_branch
        %194 = sbr.rel (%p192) target = $region20
      $region19: #{basic_block_forward.5} parent=11 // pred_region
        _
      $region20: #{basic_block_forward.5} parent=11 // pred_fallthru
        _
      // Predicated region
      $region21: #{basic_block_forward.5} parent=11 // pred_check
        %p195 = pneg %p127
      $region22: #{basic_block_forward.5} parent=11 // pred_check_branch
        %197 = sbr.rel (%p195) target = $region24
      $region23: #{basic_block_forward.5} parent=11 // pred_region
        _
      $region24: #{basic_block_forward.5} parent=11 // pred_fallthru
        _
      // Predicated region
      $region25: #{basic_block_forward.5} parent=11 // pred_check
        %p198 = pneg %p148
      $region26: #{basic_block_forward.5} parent=11 // pred_check_branch
        %200 = sbr.rel (%p198) target = $region28
      $region27: #{basic_block_forward.5} parent=11 // pred_region
        _
      $region28: #{basic_block_forward.5} parent=11 // pred_fallthru
        _
    $region12: #{basic_block_forward.5} parent=5 // pred_fallthru
      _
    %p201 = scmp.lt.s32.totalorder %s12, 2
    // Predicated region
    $region29: #{basic_block_forward.5} parent=5 // pred_check
      %p202 = pneg %p201
    $region30: #{basic_block_forward.5} parent=5 // pred_check_branch
      %204 = sbr.rel (%p202) target = $region32
    $region31: #{basic_block_forward.5} parent=5 // pred_region
      // Predicated region
      $region33: #{basic_block_forward.5} parent=31 // pred_check
        %p205 = pneg %p32
      $region34: #{basic_block_forward.5} parent=31 // pred_check_branch
        %207 = sbr.rel (%p205) target = $region36
      $region35: #{basic_block_forward.5} parent=31 // pred_region
        %p208 = scmp.lt.s32.totalorder %s12, 1
        %s209 = scalar_select %p208, %s12, 1
        %s210 = smul.addr %s209, 11
        %s211 = smul.addr %s210, 4
        %s212 = scalar_lea.vmem %s0, %s211
      $region36: #{basic_block_forward.5} parent=31 // pred_fallthru
        _
      // Predicated region
      $region37: #{basic_block_forward.5} parent=31 // pred_check
        %p213 = pneg %p100
      $region38: #{basic_block_forward.5} parent=31 // pred_check_branch
        %215 = sbr.rel (%p213) target = $region40
      $region39: #{basic_block_forward.5} parent=31 // pred_region
        %p216 = scmp.lt.s32.totalorder %s12, 1
        %s217 = scalar_select %p216, %s12, 1
        %s218 = smul.addr %s217, 11
        %s219 = smul.addr %s218, 4
        %s220 = scalar_lea.vmem %s3, %s219
      $region40: #{basic_block_forward.5} parent=31 // pred_fallthru
        _
    $region32: #{basic_block_forward.5} parent=5 // pred_fallthru
      _
    %p221 = scmp.le.s32.totalorder 1, %s12
    %p222 = scmp.lt.s32.totalorder %s12, 3
    %p223 = pnand %p221, %p222
    %p224 = pneg %p223
    // Predicated region
    $region41: #{basic_block_forward.5} parent=5 // pred_check
      _
    $region42: #{basic_block_forward.5} parent=5 // pred_check_branch
      %226 = sbr.rel (%p223) target = $region44
    $region43: #{basic_block_forward.5} parent=5 // pred_region
      %s227 = ssub.s32 %s12, 1
      %p228 = scmp.lt.s32.totalorder %s17, 1
      %s229 = scalar_select %p228, %s17, 1
      %s230 = smul.addr %s229, 11
      %s231 = smul.addr %s230, 4
      %s232 = scalar_lea.vmem %s0, %s231
      %p233 = pneg %p38
      %p234 = pneg %p35
      %p235 = pneg %p59
      %p236 = pneg %p56
      %p237 = pneg %p80
      %p238 = pneg %p77
      %p239 = scmp.lt.s32.totalorder %s17, 1
      %s240 = scalar_select %p239, %s17, 1
      %s241 = smul.addr %s240, 11
      %s242 = smul.addr %s241, 4
      %s243 = scalar_lea.vmem %s3, %s242
      %p244 = pneg %p106
      %p245 = pneg %p103
      %p246 = pneg %p127
      %p247 = pneg %p124
      %p248 = pneg %p148
      %p249 = pneg %p145
      %p250 = pneg %p174
      %p251 = pneg %p171
      %p252 = scmp.lt.s32.totalorder %s17, 1
      %s253 = scalar_select %p252, %s17, 1
      %s254 = smul.addr %s253, 11
      %s255 = smul.addr %s254, 8
      %s256 = scalar_lea.vmem %s6, %s255
      %p257 = scmp.lt.s32.totalorder %s17, 1
      %s258 = scalar_select %p257, %s17, 1
      %s259 = smul.addr %s258, 11
      %s260 = smul.addr %s259, 4
      %s261 = scalar_lea.vmem %s0, %s260
      %p262 = scmp.lt.s32.totalorder %s17, 1
      %s263 = scalar_select %p262, %s17, 1
      %s264 = smul.addr %s263, 11
      %s265 = smul.addr %s264, 4
      %s266 = scalar_lea.vmem %s3, %s265
      %p267 = scmp.lt.s32.totalorder %s17, 1
      %s268 = scalar_select %p267, %s17, 1
      %s269 = smul.addr %s268, 11
      %s270 = smul.addr %s269, 8
      %s271 = scalar_lea.vmem %s6, %s270
      %v272 = vld [vmem:[%s266] sm:$0xf]
      %v273 = vld [vmem:[%s266 + $0x4] sm:$0xf]
      %v274 = vld [vmem:[%s266 + $0x8] sm:$0xf]
      %v275 = vld [vmem:[%s266 + $0xc] sm:$0xf]
      %v276 = vld [vmem:[%s266 + $0x10] sm:$0xf]
      %v277 = vld [vmem:[%s266 + $0x14] sm:$0xf]
      %v278 = vld [vmem:[%s266 + $0x18] sm:$0xf]
      %v279 = vld [vmem:[%s266 + $0x1c] sm:$0xf]
      %v280 = vld [vmem:[%s266 + $0x20] sm:$0xf]
      %v281 = vld [vmem:[%s266 + $0x24] sm:$0xf]
      %v282 = vld [vmem:[%s266 + $0x28] sm:$0xf]
      %v283 = vunpack.c.l.bf16 %v272
      %v284 = vunpack.c.l.bf16 %v273
      %v285 = vunpack.c.l.bf16 %v274
      %v286 = vunpack.c.l.bf16 %v275
      %v287 = vunpack.c.l.bf16 %v276
      %v288 = vunpack.c.l.bf16 %v277
      %v289 = vunpack.c.l.bf16 %v278
      %v290 = vunpack.c.l.bf16 %v279
      %v291 = vunpack.c.l.bf16 %v280
      %v292 = vunpack.c.l.bf16 %v281
      %v293 = vunpack.c.l.bf16 %v282
      %v294 = vld [vmem:[%s4] sm:$0x1]
      %v296 = vlaneseq
      %v297 = vshrl.u32 %v296, 7
      %v298 = vsub.s32 0, %v297
      %v299 = vrot.slane %v294, %v298
      %v301 = vmul.f32 %v283, %v299
      %v302 = vmul.f32 %v284, %v299
      %v303 = vmul.f32 %v285, %v299
      %v304 = vmul.f32 %v286, %v299
      %v305 = vmul.f32 %v287, %v299
      %v306 = vmul.f32 %v288, %v299
      %v307 = vmul.f32 %v289, %v299
      %v308 = vmul.f32 %v290, %v299
      %v309 = vmul.f32 %v291, %v299
      %v310 = vmul.f32 %v292, %v299
      %v311 = vmul.f32 %v293, %v299
      %v312 = vld [vmem:[%s5] sm:$0x1]
      %v314 = vlaneseq
      %v315 = vshrl.u32 %v314, 7
      %v316 = vsub.s32 0, %v315
      %v317 = vrot.slane %v312, %v316
      %v319 = vadd.f32 %v301, %v317
      %v320 = vadd.f32 %v302, %v317
      %v321 = vadd.f32 %v303, %v317
      %v322 = vadd.f32 %v304, %v317
      %v323 = vadd.f32 %v305, %v317
      %v324 = vadd.f32 %v306, %v317
      %v325 = vadd.f32 %v307, %v317
      %v326 = vadd.f32 %v308, %v317
      %v327 = vadd.f32 %v309, %v317
      %v328 = vadd.f32 %v310, %v317
      %v329 = vadd.f32 %v311, %v317
      %v330 = vld [vmem:[%s261] sm:$0xf]
      %v331 = vld [vmem:[%s261 + $0x4] sm:$0xf]
      %v332 = vld [vmem:[%s261 + $0x8] sm:$0xf]
      %v333 = vld [vmem:[%s261 + $0xc] sm:$0xf]
      %v334 = vld [vmem:[%s261 + $0x10] sm:$0xf]
      %v335 = vld [vmem:[%s261 + $0x14] sm:$0xf]
      %v336 = vld [vmem:[%s261 + $0x18] sm:$0xf]
      %v337 = vld [vmem:[%s261 + $0x1c] sm:$0xf]
      %v338 = vld [vmem:[%s261 + $0x20] sm:$0xf]
      %v339 = vld [vmem:[%s261 + $0x24] sm:$0xf]
      %v340 = vld [vmem:[%s261 + $0x28] sm:$0xf]
      %v341 = vunpack.c.l.bf16 %v330
      %v342 = vunpack.c.l.bf16 %v331
      %v343 = vunpack.c.l.bf16 %v332
      %v344 = vunpack.c.l.bf16 %v333
      %v345 = vunpack.c.l.bf16 %v334
      %v346 = vunpack.c.l.bf16 %v335
      %v347 = vunpack.c.l.bf16 %v336
      %v348 = vunpack.c.l.bf16 %v337
      %v349 = vunpack.c.l.bf16 %v338
      %v350 = vunpack.c.l.bf16 %v339
      %v351 = vunpack.c.l.bf16 %v340
      %v352 = vld [vmem:[%s1] sm:$0x1]
      %v354 = vlaneseq
      %v355 = vshrl.u32 %v354, 7
      %v356 = vsub.s32 0, %v355
      %v357 = vrot.slane %v352, %v356
      %v359 = vmul.f32 %v341, %v357
      %v360 = vmul.f32 %v342, %v357
      %v361 = vmul.f32 %v343, %v357
      %v362 = vmul.f32 %v344, %v357
      %v363 = vmul.f32 %v345, %v357
      %v364 = vmul.f32 %v346, %v357
      %v365 = vmul.f32 %v347, %v357
      %v366 = vmul.f32 %v348, %v357
      %v367 = vmul.f32 %v349, %v357
      %v368 = vmul.f32 %v350, %v357
      %v369 = vmul.f32 %v351, %v357
      %v370 = vld [vmem:[%s2] sm:$0x1]
      %v372 = vlaneseq
      %v373 = vshrl.u32 %v372, 7
      %v374 = vsub.s32 0, %v373
      %v375 = vrot.slane %v370, %v374
      %v377 = vadd.f32 %v359, %v375
      %v378 = vadd.f32 %v360, %v375
      %v379 = vadd.f32 %v361, %v375
      %v380 = vadd.f32 %v362, %v375
      %v381 = vadd.f32 %v363, %v375
      %v382 = vadd.f32 %v364, %v375
      %v383 = vadd.f32 %v365, %v375
      %v384 = vadd.f32 %v366, %v375
      %v385 = vadd.f32 %v367, %v375
      %v386 = vadd.f32 %v368, %v375
      %v387 = vadd.f32 %v369, %v375
      %v388 = vadd.f32 %v377, %v319
      %v389 = vadd.f32 %v378, %v320
      %v390 = vadd.f32 %v379, %v321
      %v391 = vadd.f32 %v380, %v322
      %v392 = vadd.f32 %v381, %v323
      %v393 = vadd.f32 %v382, %v324
      %v394 = vadd.f32 %v383, %v325
      %v395 = vadd.f32 %v384, %v326
      %v396 = vadd.f32 %v385, %v327
      %v397 = vadd.f32 %v386, %v328
      %v398 = vadd.f32 %v387, %v329
      %v399 = vmax.f32 %v388, 0.0
      %v400 = vmax.f32 %v389, 0.0
      %v401 = vmax.f32 %v390, 0.0
      %v402 = vmax.f32 %v391, 0.0
      %v403 = vmax.f32 %v392, 0.0
      %v404 = vmax.f32 %v393, 0.0
      %v405 = vmax.f32 %v394, 0.0
      %v406 = vmax.f32 %v395, 0.0
      %v407 = vmax.f32 %v396, 0.0
      %v408 = vmax.f32 %v397, 0.0
      %v409 = vmax.f32 %v398, 0.0
      %410 = vst [vmem:[%s271] sm:$0xff] %v399
      %411 = vst [vmem:[%s271 + $0x8] sm:$0xff] %v400
      %412 = vst [vmem:[%s271 + $0x10] sm:$0xff] %v401
      %413 = vst [vmem:[%s271 + $0x18] sm:$0xff] %v402
      %414 = vst [vmem:[%s271 + $0x20] sm:$0xff] %v403
      %415 = vst [vmem:[%s271 + $0x28] sm:$0xff] %v404
      %416 = vst [vmem:[%s271 + $0x30] sm:$0xff] %v405
      %417 = vst [vmem:[%s271 + $0x38] sm:$0xff] %v406
      %418 = vst [vmem:[%s271 + $0x40] sm:$0xff] %v407
      %419 = vst [vmem:[%s271 + $0x48] sm:$0xff] %v408
      %420 = vst [vmem:[%s271 + $0x50] sm:$0xff] %v409
      %p421 = scmp.lt.s32.totalorder %s17, 1
      %s422 = scalar_select %p421, %s17, 1
      %s423 = smul.addr %s422, 11
      %s424 = smul.addr %s423, 8
      %s425 = scalar_lea.vmem %s6, %s424
      // Predicated region
      $region45: #{basic_block_forward.5} parent=43 // pred_check
        %p426 = pneg %p171
      $region46: #{basic_block_forward.5} parent=43 // pred_check_branch
        %428 = sbr.rel (%p426) target = $region48
      $region47: #{basic_block_forward.5} parent=43 // pred_region
        _
      $region48: #{basic_block_forward.5} parent=43 // pred_fallthru
        _
    $region44: #{basic_block_forward.5} parent=5 // pred_fallthru
      _
    %p429 = scmp.le.s32.totalorder 2, %s12
    // Predicated region
    $region49: #{basic_block_forward.5} parent=5 // pred_check
      %p430 = pneg %p429
    $region50: #{basic_block_forward.5} parent=5 // pred_check_branch
      %432 = sbr.rel (%p430) target = $region52
    $region51: #{basic_block_forward.5} parent=5 // pred_region
      %s433 = ssub.s32 %s12, 2
      // Predicated region
      $region53: #{basic_block_forward.5} parent=51 // pred_check
        %p434 = pneg %p177
      $region54: #{basic_block_forward.5} parent=51 // pred_check_branch
        %436 = sbr.rel (%p434) target = $region56
      $region55: #{basic_block_forward.5} parent=51 // pred_region
        %p437 = scmp.lt.s32.totalorder %s18, 1
        %s438 = scalar_select %p437, %s18, 1
        %s439 = smul.addr %s438, 11
        %s440 = smul.addr %s439, 8
        %s441 = scalar_lea.vmem %s6, %s440
      $region56: #{basic_block_forward.5} parent=51 // pred_fallthru
        _
    $region52: #{basic_block_forward.5} parent=5 // pred_fallthru
      _
  $region6: #{basic_block_forward.5} parent=0 // loop_footer
    %s16 = sadd.s32 1, %s12
  $region7: #{basic_block_forward.5} parent=0 // loop_footer_branch
    %11 = sbr.rel target = $region3
  $region8: #{basic_block_forward.5} parent=0 // loop_exit
    _

// kernel: basic_block_forward.4
$region0: #{basic_block_forward.4}
  #allocation0 [shape = 'u32[]', space=smem, size = 0x4, offset = 0x4, fixed_abs, tag = 'smem constant byte address 0x4 - core index']
  #allocation1 [shape = 'u32[144,128]{1,0:T(1,128)}', space=vmem, size = 0x12000, scoped, tag = 'internal scratch']
  #allocation2 [shape = 'bf16[121,128]{1,0:T(8,128)(2,1)}', space=vmem, size = 0x8000, scoped, tag = 'scratch operand']
  %s0 = inlined_call_operand.vmem [shape: bf16[2,121,128], index: 0, kind: input, shape index: {}]
  %s1 = inlined_call_operand.vmem [shape: f32[1,128], index: 1, kind: input, shape index: {}]
  %s2 = inlined_call_operand.vmem [shape: f32[1,128], index: 2, kind: input, shape index: {}]
  %s3 = inlined_call_operand.vmem [shape: bf16[1152,128], index: 3, kind: input, shape index: {}]
  %s4 = inlined_call_operand.vmem [shape: bf16[2,88,128], index: 4, kind: output, shape index: {0}]
  %s5 = inlined_call_operand.vmem [shape: f32[2,1,128], index: 5, kind: output, shape index: {1}]
  %s6 = inlined_call_operand.vmem [shape: f32[2,1,128], index: 6, kind: output, shape index: {2}]
  %7 = xla_tuple %s4, %s5, %s6
  %s8 = sld [smem:[#allocation0]]
  $region65: #{basic_block_forward.4} parent=0
    _
  %s10 = ssub.s32 1, %s8
  %s11 = scalar_select 0, %s10, %s8
  loop: start=0, step=1, limit=4
  $region2: #{basic_block_forward.4} parent=0 // loop_pre_header
    _
  $region3: #{basic_block_forward.4} parent=0 // loop_header
    %s13 = sphi 0, %s17
    %p14 = scmp.ge.s32.totalorder %s13, 4
    %s23 = sphi 0, %s25
    %s26 = sphi 0, %s23
    %s27 = sphi 0, %s26
    %s43 = sphi 0, %s27
    %s47 = sphi 0, %s47
    %s49 = sphi 0, %s47
    %s50 = sphi 0, %s49
    %s64 = sphi 0, %s50
    %s68 = sphi 0, %s68
    %s70 = sphi 0, %s68
    %s71 = sphi 0, %s70
    %s85 = sphi 0, %s71
    %s89 = sphi 0, %s89
    %s91 = sphi 0, %s89
    %s92 = sphi 0, %s91
    %s106 = sphi 0, %s92
    %s112 = sphi 0, %s114
    %s115 = sphi 0, %s112
    %s116 = sphi 0, %s115
    %s132 = sphi 0, %s116
    %s138 = sphi 0, %s140
    %s141 = sphi 0, %s138
    %s142 = sphi 0, %s141
    %s158 = sphi 0, %s142
    %s164 = sphi 0, %s166
    %s167 = sphi 0, %s164
    %s168 = sphi 0, %s167
    %s184 = sphi 0, %s168
  $region4: #{basic_block_forward.4} parent=0 // loop_header_branch
    %16 = sbr.rel (%p14) target = $region8
  $region5: #{basic_block_forward.4} parent=0 // loop_body
    %s18 = ssub.s32 %s13, 1
    %s19 = ssub.s32 %s13, 2
    %s20 = sadd.s32 %s13, 1
    %s21 = ssub.s32 %s13, %s20
    %p22 = scmp.eq.s32.totalorder %s21, 0
    %s24 = sadd.s32 %s23, 1
    %s25 = scalar_select %p22, %s23, %s24
    %p28 = pneg %p22
    %p29 = scmp.eq.s32.totalorder %s13, 1
    %p30 = por %p28, %p29
    %p31 = scmp.ne.s32.totalorder %s23, %s26
    %p32 = scmp.eq.s32.totalorder %s13, 0
    %p33 = por %p31, %p32
    %p34 = scmp.ne.s32.totalorder %s23, %s26
    %p35 = scmp.eq.s32.totalorder %s18, 1
    %p36 = por %p34, %p35
    %p37 = scmp.ne.s32.totalorder %s26, %s27
    %p38 = scmp.eq.s32.totalorder %s18, 0
    %p39 = por %p37, %p38
    %p40 = scmp.ne.s32.totalorder %s26, %s27
    %p41 = scmp.eq.s32.totalorder %s19, 1
    %p42 = por %p40, %p41
    %p44 = scmp.ne.s32.totalorder %s27, %s43
    %p45 = scmp.eq.s32.totalorder %s19, 0
    %p46 = por %p44, %p45
    %s48 = sadd.s32 %s47, 1
    %p51 = scmp.eq.s32.totalorder %s13, 1
    %p52 = scmp.ne.s32.totalorder %s47, %s49
    %p53 = scmp.eq.s32.totalorder %s13, 0
    %p54 = por %p52, %p53
    %p55 = scmp.ne.s32.totalorder %s47, %s49
    %p56 = scmp.eq.s32.totalorder %s18, 1
    %p57 = por %p55, %p56
    %p58 = scmp.ne.s32.totalorder %s49, %s50
    %p59 = scmp.eq.s32.totalorder %s18, 0
    %p60 = por %p58, %p59
    %p61 = scmp.ne.s32.totalorder %s49, %s50
    %p62 = scmp.eq.s32.totalorder %s19, 1
    %p63 = por %p61, %p62
    %p65 = scmp.ne.s32.totalorder %s50, %s64
    %p66 = scmp.eq.s32.totalorder %s19, 0
    %p67 = por %p65, %p66
    %s69 = sadd.s32 %s68, 1
    %p72 = scmp.eq.s32.totalorder %s13, 1
    %p73 = scmp.ne.s32.totalorder %s68, %s70
    %p74 = scmp.eq.s32.totalorder %s13, 0
    %p75 = por %p73, %p74
    %p76 = scmp.ne.s32.totalorder %s68, %s70
    %p77 = scmp.eq.s32.totalorder %s18, 1
    %p78 = por %p76, %p77
    %p79 = scmp.ne.s32.totalorder %s70, %s71
    %p80 = scmp.eq.s32.totalorder %s18, 0
    %p81 = por %p79, %p80
    %p82 = scmp.ne.s32.totalorder %s70, %s71
    %p83 = scmp.eq.s32.totalorder %s19, 1
    %p84 = por %p82, %p83
    %p86 = scmp.ne.s32.totalorder %s71, %s85
    %p87 = scmp.eq.s32.totalorder %s19, 0
    %p88 = por %p86, %p87
    %s90 = sadd.s32 %s89, 1
    %p93 = scmp.eq.s32.totalorder %s13, 1
    %p94 = scmp.ne.s32.totalorder %s89, %s91
    %p95 = scmp.eq.s32.totalorder %s13, 0
    %p96 = por %p94, %p95
    %p97 = scmp.ne.s32.totalorder %s89, %s91
    %p98 = scmp.eq.s32.totalorder %s18, 1
    %p99 = por %p97, %p98
    %p100 = scmp.ne.s32.totalorder %s91, %s92
    %p101 = scmp.eq.s32.totalorder %s18, 0
    %p102 = por %p100, %p101
    %p103 = scmp.ne.s32.totalorder %s91, %s92
    %p104 = scmp.eq.s32.totalorder %s19, 1
    %p105 = por %p103, %p104
    %p107 = scmp.ne.s32.totalorder %s92, %s106
    %p108 = scmp.eq.s32.totalorder %s19, 0
    %p109 = por %p107, %p108
    %s110 = ssub.s32 %s13, %s20
    %p111 = scmp.eq.s32.totalorder %s110, 0
    %s113 = sadd.s32 %s112, 1
    %s114 = scalar_select %p111, %s112, %s113
    %p117 = pneg %p111
    %p118 = scmp.eq.s32.totalorder %s13, 1
    %p119 = por %p117, %p118
    %p120 = scmp.ne.s32.totalorder %s112, %s115
    %p121 = scmp.eq.s32.totalorder %s13, 0
    %p122 = por %p120, %p121
    %p123 = scmp.ne.s32.totalorder %s112, %s115
    %p124 = scmp.eq.s32.totalorder %s18, 1
    %p125 = por %p123, %p124
    %p126 = scmp.ne.s32.totalorder %s115, %s116
    %p127 = scmp.eq.s32.totalorder %s18, 0
    %p128 = por %p126, %p127
    %p129 = scmp.ne.s32.totalorder %s115, %s116
    %p130 = scmp.eq.s32.totalorder %s19, 1
    %p131 = por %p129, %p130
    %p133 = scmp.ne.s32.totalorder %s116, %s132
    %p134 = scmp.eq.s32.totalorder %s19, 0
    %p135 = por %p133, %p134
    %s136 = ssub.s32 %s13, %s20
    %p137 = scmp.eq.s32.totalorder %s136, 0
    %s139 = sadd.s32 %s138, 1
    %s140 = scalar_select %p137, %s138, %s139
    %p143 = pneg %p137
    %p144 = scmp.eq.s32.totalorder %s13, 1
    %p145 = por %p143, %p144
    %p146 = scmp.ne.s32.totalorder %s138, %s141
    %p147 = scmp.eq.s32.totalorder %s13, 0
    %p148 = por %p146, %p147
    %p149 = scmp.ne.s32.totalorder %s138, %s141
    %p150 = scmp.eq.s32.totalorder %s18, 1
    %p151 = por %p149, %p150
    %p152 = scmp.ne.s32.totalorder %s141, %s142
    %p153 = scmp.eq.s32.totalorder %s18, 0
    %p154 = por %p152, %p153
    %p155 = scmp.ne.s32.totalorder %s141, %s142
    %p156 = scmp.eq.s32.totalorder %s19, 1
    %p157 = por %p155, %p156
    %p159 = scmp.ne.s32.totalorder %s142, %s158
    %p160 = scmp.eq.s32.totalorder %s19, 0
    %p161 = por %p159, %p160
    %s162 = ssub.s32 %s13, %s20
    %p163 = scmp.eq.s32.totalorder %s162, 0
    %s165 = sadd.s32 %s164, 1
    %s166 = scalar_select %p163, %s164, %s165
    %p169 = pneg %p163
    %p170 = scmp.eq.s32.totalorder %s13, 1
    %p171 = por %p169, %p170
    %p172 = scmp.ne.s32.totalorder %s164, %s167
    %p173 = scmp.eq.s32.totalorder %s13, 0
    %p174 = por %p172, %p173
    %p175 = scmp.ne.s32.totalorder %s164, %s167
    %p176 = scmp.eq.s32.totalorder %s18, 1
    %p177 = por %p175, %p176
    %p178 = scmp.ne.s32.totalorder %s167, %s168
    %p179 = scmp.eq.s32.totalorder %s18, 0
    %p180 = por %p178, %p179
    %p181 = scmp.ne.s32.totalorder %s167, %s168
    %p182 = scmp.eq.s32.totalorder %s19, 1
    %p183 = por %p181, %p182
    %p185 = scmp.ne.s32.totalorder %s168, %s184
    %p186 = scmp.eq.s32.totalorder %s19, 0
    %p187 = por %p185, %p186
    %p188 = scmp.le.s32.totalorder 1, %s13
    %p189 = scmp.lt.s32.totalorder %s13, 3
    %p190 = pnand %p188, %p189
    %p191 = pneg %p190
    // Predicated region
    $region9: #{basic_block_forward.4} parent=5 // pred_check
      _
    $region10: #{basic_block_forward.4} parent=5 // pred_check_branch
      %193 = sbr.rel (%p190) target = $region12
    $region11: #{basic_block_forward.4} parent=5 // pred_region
      %s194 = ssub.s32 %s13, 1
      // Predicated region
      $region13: #{basic_block_forward.4} parent=11 // pred_check
        %p195 = pneg %p60
      $region14: #{basic_block_forward.4} parent=11 // pred_check_branch
        %197 = sbr.rel (%p195) target = $region16
      $region15: #{basic_block_forward.4} parent=11 // pred_region
        _
      $region16: #{basic_block_forward.4} parent=11 // pred_fallthru
        _
      // Predicated region
      $region17: #{basic_block_forward.4} parent=11 // pred_check
        %p198 = pneg %p81
      $region18: #{basic_block_forward.4} parent=11 // pred_check_branch
        %200 = sbr.rel (%p198) target = $region20
      $region19: #{basic_block_forward.4} parent=11 // pred_region
        _
      $region20: #{basic_block_forward.4} parent=11 // pred_fallthru
        _
      // Predicated region
      $region21: #{basic_block_forward.4} parent=11 // pred_check
        %p201 = pneg %p102
      $region22: #{basic_block_forward.4} parent=11 // pred_check_branch
        %203 = sbr.rel (%p201) target = $region24
      $region23: #{basic_block_forward.4} parent=11 // pred_region
        _
      $region24: #{basic_block_forward.4} parent=11 // pred_fallthru
        _
    $region12: #{basic_block_forward.4} parent=5 // pred_fallthru
      _
    %p204 = scmp.lt.s32.totalorder %s13, 2
    // Predicated region
    $region25: #{basic_block_forward.4} parent=5 // pred_check
      %p205 = pneg %p204
    $region26: #{basic_block_forward.4} parent=5 // pred_check_branch
      %207 = sbr.rel (%p205) target = $region28
    $region27: #{basic_block_forward.4} parent=5 // pred_region
      // Predicated region
      $region29: #{basic_block_forward.4} parent=27 // pred_check
        %p208 = pneg %p33
      $region30: #{basic_block_forward.4} parent=27 // pred_check_branch
        %210 = sbr.rel (%p208) target = $region32
      $region31: #{basic_block_forward.4} parent=27 // pred_region
        %p211 = scmp.lt.s32.totalorder %s13, 1
        %s212 = scalar_select %p211, %s13, 1
        %s213 = smul.addr %s212, 16
        %s214 = smul.addr %s213, 4
        %s215 = scalar_lea.vmem %s0, %s214
      $region32: #{basic_block_forward.4} parent=27 // pred_fallthru
        _
    $region28: #{basic_block_forward.4} parent=5 // pred_fallthru
      _
    %p216 = scmp.le.s32.totalorder 1, %s13
    %p217 = scmp.lt.s32.totalorder %s13, 3
    %p218 = pnand %p216, %p217
    %p219 = pneg %p218
    // Predicated region
    $region33: #{basic_block_forward.4} parent=5 // pred_check
      _
    $region34: #{basic_block_forward.4} parent=5 // pred_check_branch
      %221 = sbr.rel (%p218) target = $region36
    $region35: #{basic_block_forward.4} parent=5 // pred_region
      %s222 = ssub.s32 %s13, 1
      %p223 = scmp.lt.s32.totalorder %s18, 1
      %s224 = scalar_select %p223, %s18, 1
      %s225 = smul.addr %s224, 16
      %s226 = smul.addr %s225, 4
      %s227 = scalar_lea.vmem %s0, %s226
      %p228 = pneg %p39
      %p229 = pneg %p36
      %p230 = pneg %p60
      %p231 = pneg %p57
      %p232 = pneg %p81
      %p233 = pneg %p78
      %p234 = pneg %p102
      %p235 = pneg %p99
      %p236 = pneg %p128
      %p237 = pneg %p125
      %p238 = scmp.lt.s32.totalorder %s18, 1
      %s239 = scalar_select %p238, %s18, 1
      %s240 = smul.addr %s239, 11
      %s241 = smul.addr %s240, 4
      %s242 = scalar_lea.vmem %s4, %s241
      %p243 = pneg %p154
      %p244 = pneg %p151
      %p245 = scmp.lt.s32.totalorder %s18, 1
      %s246 = scalar_select %p245, %s18, 1
      %s247 = scalar_lea.vmem %s5, %s246
      %p248 = pneg %p180
      %p249 = pneg %p177
      %p250 = scmp.lt.s32.totalorder %s18, 1
      %s251 = scalar_select %p250, %s18, 1
      %s252 = scalar_lea.vmem %s6, %s251
      %p253 = scmp.lt.s32.totalorder %s18, 1
      %s254 = scalar_select %p253, %s18, 1
      %s255 = smul.addr %s254, 16
      %s256 = smul.addr %s255, 4
      %s257 = scalar_lea.vmem %s0, %s256
      %p258 = scmp.lt.s32.totalorder %s18, 1
      %s259 = scalar_select %p258, %s18, 1
      %s260 = smul.addr %s259, 11
      %s261 = smul.addr %s260, 4
      %s262 = scalar_lea.vmem %s4, %s261
      %p263 = scmp.lt.s32.totalorder %s18, 1
      %s264 = scalar_select %p263, %s18, 1
      %s265 = scalar_lea.vmem %s5, %s264
      %p266 = scmp.lt.s32.totalorder %s18, 1
      %s267 = scalar_select %p266, %s18, 1
      %s268 = scalar_lea.vmem %s6, %s267
      %v270 = vld [vmem:[%s257] sm:$0xf]
      %v271 = vld [vmem:[%s257 + $0x4] sm:$0xf]
      %v272 = vld [vmem:[%s257 + $0x8] sm:$0xf]
      %v273 = vld [vmem:[%s257 + $0xc] sm:$0xf]
      %v274 = vld [vmem:[%s257 + $0x10] sm:$0xf]
      %v275 = vld [vmem:[%s257 + $0x14] sm:$0xf]
      %v276 = vld [vmem:[%s257 + $0x18] sm:$0xf]
      %v277 = vld [vmem:[%s257 + $0x1c] sm:$0xf]
      %v278 = vld [vmem:[%s257 + $0x20] sm:$0xf]
      %v279 = vld [vmem:[%s257 + $0x24] sm:$0xf]
      %v280 = vld [vmem:[%s257 + $0x28] sm:$0xf]
      %v281 = vld [vmem:[%s257 + $0x2c] sm:$0xf]
      %v282 = vld [vmem:[%s257 + $0x30] sm:$0xf]
      %v283 = vld [vmem:[%s257 + $0x34] sm:$0xf]
      %v284 = vld [vmem:[%s257 + $0x38] sm:$0xf]
      %v285 = vld [vmem:[%s257 + $0x3c] sm:$0x1]
      %v286 = vunpack.c.l.bf16 %v270
      %v287 = vunpack.c.l.bf16 %v271
      %v288 = vunpack.c.l.bf16 %v272
      %v289 = vunpack.c.l.bf16 %v273
      %v290 = vunpack.c.l.bf16 %v274
      %v291 = vunpack.c.l.bf16 %v275
      %v292 = vunpack.c.l.bf16 %v276
      %v293 = vunpack.c.l.bf16 %v277
      %v294 = vunpack.c.l.bf16 %v278
      %v295 = vunpack.c.l.bf16 %v279
      %v296 = vunpack.c.l.bf16 %v280
      %v297 = vunpack.c.l.bf16 %v281
      %v298 = vunpack.c.l.bf16 %v282
      %v299 = vunpack.c.l.bf16 %v283
      %v300 = vunpack.c.l.bf16 %v284
      %v301 = vunpack.c.l.bf16 %v285
      %v302 = vld [vmem:[%s1] sm:$0x1]
      %v304 = vlaneseq
      %v305 = vshrl.u32 %v304, 7
      %v306 = vsub.s32 0, %v305
      %v307 = vrot.slane %v302, %v306
      %v309 = vmul.f32 %v286, %v307
      %v310 = vmul.f32 %v287, %v307
      %v311 = vmul.f32 %v288, %v307
      %v312 = vmul.f32 %v289, %v307
      %v313 = vmul.f32 %v290, %v307
      %v314 = vmul.f32 %v291, %v307
      %v315 = vmul.f32 %v292, %v307
      %v316 = vmul.f32 %v293, %v307
      %v317 = vmul.f32 %v294, %v307
      %v318 = vmul.f32 %v295, %v307
      %v319 = vmul.f32 %v296, %v307
      %v320 = vmul.f32 %v297, %v307
      %v321 = vmul.f32 %v298, %v307
      %v322 = vmul.f32 %v299, %v307
      %v323 = vmul.f32 %v300, %v307
      %v324 = vmul.f32 %v301, %v307
      %v325 = vld [vmem:[%s2] sm:$0x1]
      %v327 = vlaneseq
      %v328 = vshrl.u32 %v327, 7
      %v329 = vsub.s32 0, %v328
      %v330 = vrot.slane %v325, %v329
      %v332 = vadd.f32 %v309, %v330
      %v333 = vadd.f32 %v310, %v330
      %v334 = vadd.f32 %v311, %v330
      %v335 = vadd.f32 %v312, %v330
      %v336 = vadd.f32 %v313, %v330
      %v337 = vadd.f32 %v314, %v330
      %v338 = vadd.f32 %v315, %v330
      %v339 = vadd.f32 %v316, %v330
      %v340 = vadd.f32 %v317, %v330
      %v341 = vadd.f32 %v318, %v330
      %v342 = vadd.f32 %v319, %v330
      %v343 = vadd.f32 %v320, %v330
      %v344 = vadd.f32 %v321, %v330
      %v345 = vadd.f32 %v322, %v330
      %v346 = vadd.f32 %v323, %v330
      %v347 = vadd.f32 %v324, %v330
      %v348 = vmax.f32 %v332, 0.0
      %v349 = vmax.f32 %v333, 0.0
      %v350 = vmax.f32 %v334, 0.0
      %v351 = vmax.f32 %v335, 0.0
      %v352 = vmax.f32 %v336, 0.0
      %v353 = vmax.f32 %v337, 0.0
      %v354 = vmax.f32 %v338, 0.0
      %v355 = vmax.f32 %v339, 0.0
      %v356 = vmax.f32 %v340, 0.0
      %v357 = vmax.f32 %v341, 0.0
      %v358 = vmax.f32 %v342, 0.0
      %v359 = vmax.f32 %v343, 0.0
      %v360 = vmax.f32 %v344, 0.0
      %v361 = vmax.f32 %v345, 0.0
      %v362 = vmax.f32 %v346, 0.0
      %v363 = vmax.f32 %v347, 0.0
      %v364 = vlaneseq
      %v365 = vshrl.u32 %v364, 7
      %v366 = vadd.s32 %v365, 8
      %v367 = vadd.s32 %v365, 16
      %v368 = vadd.s32 %v365, 24
      %v369 = vadd.s32 %v365, 32
      %v370 = vadd.s32 %v365, 40
      %v371 = vadd.s32 %v365, 48
      %v372 = vadd.s32 %v365, 56
      %v373 = vadd.s32 %v365, 64
      %v374 = vadd.s32 %v365, 72
      %v375 = vadd.s32 %v365, 80
      %v376 = vadd.s32 %v365, 88
      %v377 = vadd.s32 %v365, 96
      %v378 = vadd.s32 %v365, 104
      %v379 = vadd.s32 %v365, 112
      %v380 = vadd.s32 %v365, 120
      %vm381 = vcmp.lt.s32.totalorder %v365, 0
      %v382 = vsub.s32 0, %v365
      %v383 = vsel %vm381, %v382, %v365
      %v384 = vmul.u32.u64.compose %v383, 3123612579
      %v385 = vextract.low.u32 %v384
      %v386 = vextract.high.u32 %v384
      %v387 = vshrl.u32 %v386, 3
      %v388 = vmul.u32 %v387, 11
      %v389 = vsub.s32 %v383, %v388
      %v390 = vsub.s32 0, %v389
      %v391 = vsel %vm381, %v390, %v389
      %vm392 = vcmp.lt.s32.totalorder %v366, 0
      %v393 = vsub.s32 0, %v366
      %v394 = vsel %vm392, %v393, %v366
      %v395 = vmul.u32.u64.compose %v394, 3123612579
      %v396 = vextract.low.u32 %v395
      %v397 = vextract.high.u32 %v395
      %v398 = vshrl.u32 %v397, 3
      %v399 = vmul.u32 %v398, 11
      %v400 = vsub.s32 %v394, %v399
      %v401 = vsub.s32 0, %v400
      %v402 = vsel %vm392, %v401, %v400
      %vm403 = vcmp.lt.s32.totalorder %v367, 0
      %v404 = vsub.s32 0, %v367
      %v405 = vsel %vm403, %v404, %v367
      %v406 = vmul.u32.u64.compose %v405, 3123612579
      %v407 = vextract.low.u32 %v406
      %v408 = vextract.high.u32 %v406
      %v409 = vshrl.u32 %v408, 3
      %v410 = vmul.u32 %v409, 11
      %v411 = vsub.s32 %v405, %v410
      %v412 = vsub.s32 0, %v411
      %v413 = vsel %vm403, %v412, %v411
      %vm414 = vcmp.lt.s32.totalorder %v368, 0
      %v415 = vsub.s32 0, %v368
      %v416 = vsel %vm414, %v415, %v368
      %v417 = vmul.u32.u64.compose %v416, 3123612579
      %v418 = vextract.low.u32 %v417
      %v419 = vextract.high.u32 %v417
      %v420 = vshrl.u32 %v419, 3
      %v421 = vmul.u32 %v420, 11
      %v422 = vsub.s32 %v416, %v421
      %v423 = vsub.s32 0, %v422
      %v424 = vsel %vm414, %v423, %v422
      %vm425 = vcmp.lt.s32.totalorder %v369, 0
      %v426 = vsub.s32 0, %v369
      %v427 = vsel %vm425, %v426, %v369
      %v428 = vmul.u32.u64.compose %v427, 3123612579
      %v429 = vextract.low.u32 %v428
      %v430 = vextract.high.u32 %v428
      %v431 = vshrl.u32 %v430, 3
      %v432 = vmul.u32 %v431, 11
      %v433 = vsub.s32 %v427, %v432
      %v434 = vsub.s32 0, %v433
      %v435 = vsel %vm425, %v434, %v433
      %vm436 = vcmp.lt.s32.totalorder %v370, 0
      %v437 = vsub.s32 0, %v370
      %v438 = vsel %vm436, %v437, %v370
      %v439 = vmul.u32.u64.compose %v438, 3123612579
      %v440 = vextract.low.u32 %v439
      %v441 = vextract.high.u32 %v439
      %v442 = vshrl.u32 %v441, 3
      %v443 = vmul.u32 %v442, 11
      %v444 = vsub.s32 %v438, %v443
      %v445 = vsub.s32 0, %v444
      %v446 = vsel %vm436, %v445, %v444
      %vm447 = vcmp.lt.s32.totalorder %v371, 0
      %v448 = vsub.s32 0, %v371
      %v449 = vsel %vm447, %v448, %v371
      %v450 = vmul.u32.u64.compose %v449, 3123612579
      %v451 = vextract.low.u32 %v450
      %v452 = vextract.high.u32 %v450
      %v453 = vshrl.u32 %v452, 3
      %v454 = vmul.u32 %v453, 11
      %v455 = vsub.s32 %v449, %v454
      %v456 = vsub.s32 0, %v455
      %v457 = vsel %vm447, %v456, %v455
      %vm458 = vcmp.lt.s32.totalorder %v372, 0
      %v459 = vsub.s32 0, %v372
      %v460 = vsel %vm458, %v459, %v372
      %v461 = vmul.u32.u64.compose %v460, 3123612579
      %v462 = vextract.low.u32 %v461
      %v463 = vextract.high.u32 %v461
      %v464 = vshrl.u32 %v463, 3
      %v465 = vmul.u32 %v464, 11
      %v466 = vsub.s32 %v460, %v465
      %v467 = vsub.s32 0, %v466
      %v468 = vsel %vm458, %v467, %v466
      %vm469 = vcmp.lt.s32.totalorder %v373, 0
      %v470 = vsub.s32 0, %v373
      %v471 = vsel %vm469, %v470, %v373
      %v472 = vmul.u32.u64.compose %v471, 3123612579
      %v473 = vextract.low.u32 %v472
      %v474 = vextract.high.u32 %v472
      %v475 = vshrl.u32 %v474, 3
      %v476 = vmul.u32 %v475, 11
      %v477 = vsub.s32 %v471, %v476
      %v478 = vsub.s32 0, %v477
      %v479 = vsel %vm469, %v478, %v477
      %vm480 = vcmp.lt.s32.totalorder %v374, 0
      %v481 = vsub.s32 0, %v374
      %v482 = vsel %vm480, %v481, %v374
      %v483 = vmul.u32.u64.compose %v482, 3123612579
      %v484 = vextract.low.u32 %v483
      %v485 = vextract.high.u32 %v483
      %v486 = vshrl.u32 %v485, 3
      %v487 = vmul.u32 %v486, 11
      %v488 = vsub.s32 %v482, %v487
      %v489 = vsub.s32 0, %v488
      %v490 = vsel %vm480, %v489, %v488
      %vm491 = vcmp.lt.s32.totalorder %v375, 0
      %v492 = vsub.s32 0, %v375
      %v493 = vsel %vm491, %v492, %v375
      %v494 = vmul.u32.u64.compose %v493, 3123612579
      %v495 = vextract.low.u32 %v494
      %v496 = vextract.high.u32 %v494
      %v497 = vshrl.u32 %v496, 3
      %v498 = vmul.u32 %v497, 11
      %v499 = vsub.s32 %v493, %v498
      %v500 = vsub.s32 0, %v499
      %v501 = vsel %vm491, %v500, %v499
      %vm502 = vcmp.lt.s32.totalorder %v376, 0
      %v503 = vsub.s32 0, %v376
      %v504 = vsel %vm502, %v503, %v376
      %v505 = vmul.u32.u64.compose %v504, 3123612579
      %v506 = vextract.low.u32 %v505
      %v507 = vextract.high.u32 %v505
      %v508 = vshrl.u32 %v507, 3
      %v509 = vmul.u32 %v508, 11
      %v510 = vsub.s32 %v504, %v509
      %v511 = vsub.s32 0, %v510
      %v512 = vsel %vm502, %v511, %v510
      %vm513 = vcmp.lt.s32.totalorder %v377, 0
      %v514 = vsub.s32 0, %v377
      %v515 = vsel %vm513, %v514, %v377
      %v516 = vmul.u32.u64.compose %v515, 3123612579
      %v517 = vextract.low.u32 %v516
      %v518 = vextract.high.u32 %v516
      %v519 = vshrl.u32 %v518, 3
      %v520 = vmul.u32 %v519, 11
      %v521 = vsub.s32 %v515, %v520
      %v522 = vsub.s32 0, %v521
      %v523 = vsel %vm513, %v522, %v521
      %vm524 = vcmp.lt.s32.totalorder %v378, 0
      %v525 = vsub.s32 0, %v378
      %v526 = vsel %vm524, %v525, %v378
      %v527 = vmul.u32.u64.compose %v526, 3123612579
      %v528 = vextract.low.u32 %v527
      %v529 = vextract.high.u32 %v527
      %v530 = vshrl.u32 %v529, 3
      %v531 = vmul.u32 %v530, 11
      %v532 = vsub.s32 %v526, %v531
      %v533 = vsub.s32 0, %v532
      %v534 = vsel %vm524, %v533, %v532
      %vm535 = vcmp.lt.s32.totalorder %v379, 0
      %v536 = vsub.s32 0, %v379
      %v537 = vsel %vm535, %v536, %v379
      %v538 = vmul.u32.u64.compose %v537, 3123612579
      %v539 = vextract.low.u32 %v538
      %v540 = vextract.high.u32 %v538
      %v541 = vshrl.u32 %v540, 3
      %v542 = vmul.u32 %v541, 11
      %v543 = vsub.s32 %v537, %v542
      %v544 = vsub.s32 0, %v543
      %v545 = vsel %vm535, %v544, %v543
      %vm546 = vcmp.lt.s32.totalorder %v380, 0
      %v547 = vsub.s32 0, %v380
      %v548 = vsel %vm546, %v547, %v380
      %v549 = vmul.u32.u64.compose %v548, 3123612579
      %v550 = vextract.low.u32 %v549
      %v551 = vextract.high.u32 %v549
      %v552 = vshrl.u32 %v551, 3
      %v553 = vmul.u32 %v552, 11
      %v554 = vsub.s32 %v548, %v553
      %v555 = vsub.s32 0, %v554
      %v556 = vsel %vm546, %v555, %v554
      %vm557 = vcmp.ne.s32.totalorder %v391, 0
      %vm558 = vcmp.ne.s32.totalorder %v402, 0
      %vm559 = vcmp.ne.s32.totalorder %v413, 0
      %vm560 = vcmp.ne.s32.totalorder %v424, 0
      %vm561 = vcmp.ne.s32.totalorder %v435, 0
      %vm562 = vcmp.ne.s32.totalorder %v446, 0
      %vm563 = vcmp.ne.s32.totalorder %v457, 0
      %vm564 = vcmp.ne.s32.totalorder %v468, 0
      %vm565 = vcmp.ne.s32.totalorder %v479, 0
      %vm566 = vcmp.ne.s32.totalorder %v490, 0
      %vm567 = vcmp.ne.s32.totalorder %v501, 0
      %vm568 = vcmp.ne.s32.totalorder %v512, 0
      %vm569 = vcmp.ne.s32.totalorder %v523, 0
      %vm570 = vcmp.ne.s32.totalorder %v534, 0
      %vm571 = vcmp.ne.s32.totalorder %v545, 0
      %vm572 = vcmp.ne.s32.totalorder %v556, 0
      %vm573 = vcmp.lt.s32.totalorder %v391, 0
      %vm574 = vcmp.lt.s32.totalorder %v402, 0
      %vm575 = vcmp.lt.s32.totalorder %v413, 0
      %vm576 = vcmp.lt.s32.totalorder %v424, 0
      %vm577 = vcmp.lt.s32.totalorder %v435, 0
      %vm578 = vcmp.lt.s32.totalorder %v446, 0
      %vm579 = vcmp.lt.s32.totalorder %v457, 0
      %vm580 = vcmp.lt.s32.totalorder %v468, 0
      %vm581 = vcmp.lt.s32.totalorder %v479, 0
      %vm582 = vcmp.lt.s32.totalorder %v490, 0
      %vm583 = vcmp.lt.s32.totalorder %v501, 0
      %vm584 = vcmp.lt.s32.totalorder %v512, 0
      %vm585 = vcmp.lt.s32.totalorder %v523, 0
      %vm586 = vcmp.lt.s32.totalorder %v534, 0
      %vm587 = vcmp.lt.s32.totalorder %v545, 0
      %vm588 = vcmp.lt.s32.totalorder %v556, 0
      %vm589 = vmand %vm573, %vm557
      %vm590 = vmand %vm574, %vm558
      %vm591 = vmand %vm575, %vm559
      %vm592 = vmand %vm576, %vm560
      %vm593 = vmand %vm577, %vm561
      %vm594 = vmand %vm578, %vm562
      %vm595 = vmand %vm579, %vm563
      %vm596 = vmand %vm580, %vm564
      %vm597 = vmand %vm581, %vm565
      %vm598 = vmand %vm582, %vm566
      %vm599 = vmand %vm583, %vm567
      %vm600 = vmand %vm584, %vm568
      %vm601 = vmand %vm585, %vm569
      %vm602 = vmand %vm586, %vm570
      %vm603 = vmand %vm587, %vm571
      %vm604 = vmand %vm588, %vm572
      %v605 = vadd.s32 %v391, 11
      %v606 = vadd.s32 %v402, 11
      %v607 = vadd.s32 %v413, 11
      %v608 = vadd.s32 %v424, 11
      %v609 = vadd.s32 %v435, 11
      %v610 = vadd.s32 %v446, 11
      %v611 = vadd.s32 %v457, 11
      %v612 = vadd.s32 %v468, 11
      %v613 = vadd.s32 %v479, 11
      %v614 = vadd.s32 %v490, 11
      %v615 = vadd.s32 %v501, 11
      %v616 = vadd.s32 %v512, 11
      %v617 = vadd.s32 %v523, 11
      %v618 = vadd.s32 %v534, 11
      %v619 = vadd.s32 %v545, 11
      %v620 = vadd.s32 %v556, 11
      %v621 = vsel %vm589, %v605, %v391
      %v622 = vsel %vm590, %v606, %v402
      %v623 = vsel %vm591, %v607, %v413
      %v624 = vsel %vm592, %v608, %v424
      %v625 = vsel %vm593, %v609, %v435
      %v626 = vsel %vm594, %v610, %v446
      %v627 = vsel %vm595, %v611, %v457
      %v628 = vsel %vm596, %v612, %v468
      %v629 = vsel %vm597, %v613, %v479
      %v630 = vsel %vm598, %v614, %v490
      %v631 = vsel %vm599, %v615, %v501
      %v632 = vsel %vm600, %v616, %v512
      %v633 = vsel %vm601, %v617, %v523
      %v634 = vsel %vm602, %v618, %v534
      %v635 = vsel %vm603, %v619, %v545
      %v636 = vsel %vm604, %v620, %v556
      %vm637 = vcmp.ge.s32.totalorder %v621, 1
      %vm638 = vcmp.ge.s32.totalorder %v622, 1
      %vm639 = vcmp.ge.s32.totalorder %v623, 1
      %vm640 = vcmp.ge.s32.totalorder %v624, 1
      %vm641 = vcmp.ge.s32.totalorder %v625, 1
      %vm642 = vcmp.ge.s32.totalorder %v626, 1
      %vm643 = vcmp.ge.s32.totalorder %v627, 1
      %vm644 = vcmp.ge.s32.totalorder %v628, 1
      %vm645 = vcmp.ge.s32.totalorder %v629, 1
      %vm646 = vcmp.ge.s32.totalorder %v630, 1
      %vm647 = vcmp.ge.s32.totalorder %v631, 1
      %vm648 = vcmp.ge.s32.totalorder %v632, 1
      %vm649 = vcmp.ge.s32.totalorder %v633, 1
      %vm650 = vcmp.ge.s32.totalorder %v634, 1
      %vm651 = vcmp.ge.s32.totalorder %v635, 1
      %vm652 = vcmp.ge.s32.totalorder %v636, 1
      %vm653 = vcmp.le.s32.totalorder %v621, 8
      %vm654 = vcmp.le.s32.totalorder %v622, 8
      %vm655 = vcmp.le.s32.totalorder %v623, 8
      %vm656 = vcmp.le.s32.totalorder %v624, 8
      %vm657 = vcmp.le.s32.totalorder %v625, 8
      %vm658 = vcmp.le.s32.totalorder %v626, 8
      %vm659 = vcmp.le.s32.totalorder %v627, 8
      %vm660 = vcmp.le.s32.totalorder %v628, 8
      %vm661 = vcmp.le.s32.totalorder %v629, 8
      %vm662 = vcmp.le.s32.totalorder %v630, 8
      %vm663 = vcmp.le.s32.totalorder %v631, 8
      %vm664 = vcmp.le.s32.totalorder %v632, 8
      %vm665 = vcmp.le.s32.totalorder %v633, 8
      %vm666 = vcmp.le.s32.totalorder %v634, 8
      %vm667 = vcmp.le.s32.totalorder %v635, 8
      %vm668 = vcmp.le.s32.totalorder %v636, 8
      %vm669 = vmand %vm637, %vm653
      %vm670 = vmand %vm638, %vm654
      %vm671 = vmand %vm639, %vm655
      %vm672 = vmand %vm640, %vm656
      %vm673 = vmand %vm641, %vm657
      %vm674 = vmand %vm642, %vm658
      %vm675 = vmand %vm643, %vm659
      %vm676 = vmand %vm644, %vm660
      %vm677 = vmand %vm645, %vm661
      %vm678 = vmand %vm646, %vm662
      %vm679 = vmand %vm647, %vm663
      %vm680 = vmand %vm648, %vm664
      %vm681 = vmand %vm649, %vm665
      %vm682 = vmand %vm650, %vm666
      %vm683 = vmand %vm651, %vm667
      %vm684 = vmand %vm652, %vm668
      %vm685 = vcmp.ge.s32.totalorder %v365, 11
      %vm686 = vcmp.ge.s32.totalorder %v366, 11
      %vm687 = vcmp.ge.s32.totalorder %v367, 11
      %vm688 = vcmp.ge.s32.totalorder %v368, 11
      %vm689 = vcmp.ge.s32.totalorder %v369, 11
      %vm690 = vcmp.ge.s32.totalorder %v370, 11
      %vm691 = vcmp.ge.s32.totalorder %v371, 11
      %vm692 = vcmp.ge.s32.totalorder %v372, 11
      %vm693 = vcmp.ge.s32.totalorder %v373, 11
      %vm694 = vcmp.ge.s32.totalorder %v374, 11
      %vm695 = vcmp.ge.s32.totalorder %v375, 11
      %vm696 = vcmp.ge.s32.totalorder %v376, 11
      %vm697 = vcmp.ge.s32.totalorder %v377, 11
      %vm698 = vcmp.ge.s32.totalorder %v378, 11
      %vm699 = vcmp.ge.s32.totalorder %v379, 11
      %vm700 = vcmp.ge.s32.totalorder %v380, 11
      %vm701 = vmand %vm669, %vm685
      %vm702 = vmand %vm670, %vm686
      %vm703 = vmand %vm671, %vm687
      %vm704 = vmand %vm672, %vm688
      %vm705 = vmand %vm673, %vm689
      %vm706 = vmand %vm674, %vm690
      %vm707 = vmand %vm675, %vm691
      %vm708 = vmand %vm676, %vm692
      %vm709 = vmand %vm677, %vm693
      %vm710 = vmand %vm678, %vm694
      %vm711 = vmand %vm679, %vm695
      %vm712 = vmand %vm680, %vm696
      %vm713 = vmand %vm681, %vm697
      %vm714 = vmand %vm682, %vm698
      %vm715 = vmand %vm683, %vm699
      %vm716 = vmand %vm684, %vm700
      %vm717 = vcmp.lt.s32.totalorder %v365, 99
      %vm718 = vcmp.lt.s32.totalorder %v366, 99
      %vm719 = vcmp.lt.s32.totalorder %v367, 99
      %vm720 = vcmp.lt.s32.totalorder %v368, 99
      %vm721 = vcmp.lt.s32.totalorder %v369, 99
      %vm722 = vcmp.lt.s32.totalorder %v370, 99
      %vm723 = vcmp.lt.s32.totalorder %v371, 99
      %vm724 = vcmp.lt.s32.totalorder %v372, 99
      %vm725 = vcmp.lt.s32.totalorder %v373, 99
      %vm726 = vcmp.lt.s32.totalorder %v374, 99
      %vm727 = vcmp.lt.s32.totalorder %v375, 99
      %vm728 = vcmp.lt.s32.totalorder %v376, 99
      %vm729 = vcmp.lt.s32.totalorder %v377, 99
      %vm730 = vcmp.lt.s32.totalorder %v378, 99
      %vm731 = vcmp.lt.s32.totalorder %v379, 99
      %vm732 = vcmp.lt.s32.totalorder %v380, 99
      %vm733 = vmand %vm701, %vm717
      %vm734 = vmand %vm702, %vm718
      %vm735 = vmand %vm703, %vm719
      %vm736 = vmand %vm704, %vm720
      %vm737 = vmand %vm705, %vm721
      %vm738 = vmand %vm706, %vm722
      %vm739 = vmand %vm707, %vm723
      %vm740 = vmand %vm708, %vm724
      %vm741 = vmand %vm709, %vm725
      %vm742 = vmand %vm710, %vm726
      %vm743 = vmand %vm711, %vm727
      %vm744 = vmand %vm712, %vm728
      %vm745 = vmand %vm713, %vm729
      %vm746 = vmand %vm714, %vm730
      %vm747 = vmand %vm715, %vm731
      %vm748 = vmand %vm716, %vm732
      %v749 = vsel %vm733, 1, 0
      %v750 = vsel %vm734, 1, 0
      %v751 = vsel %vm735, 1, 0
      %v752 = vsel %vm736, 1, 0
      %v753 = vsel %vm737, 1, 0
      %v754 = vsel %vm738, 1, 0
      %v755 = vsel %vm739, 1, 0
      %v756 = vsel %vm740, 1, 0
      %v757 = vsel %vm741, 1, 0
      %v758 = vsel %vm742, 1, 0
      %v759 = vsel %vm743, 1, 0
      %v760 = vsel %vm744, 1, 0
      %v761 = vsel %vm745, 1, 0
      %v762 = vsel %vm746, 1, 0
      %v763 = vsel %vm747, 1, 0
      %v764 = vsel %vm748, 1, 0
      %vm765 = vcmp.eq.s32.totalorder %v749, 1
      %vm766 = vcmp.eq.s32.totalorder %v750, 1
      %vm767 = vcmp.eq.s32.totalorder %v751, 1
      %vm768 = vcmp.eq.s32.totalorder %v752, 1
      %vm769 = vcmp.eq.s32.totalorder %v753, 1
      %vm770 = vcmp.eq.s32.totalorder %v754, 1
      %vm771 = vcmp.eq.s32.totalorder %v755, 1
      %vm772 = vcmp.eq.s32.totalorder %v756, 1
      %vm773 = vcmp.eq.s32.totalorder %v757, 1
      %vm774 = vcmp.eq.s32.totalorder %v758, 1
      %vm775 = vcmp.eq.s32.totalorder %v759, 1
      %vm776 = vcmp.eq.s32.totalorder %v760, 1
      %vm777 = vcmp.eq.s32.totalorder %v761, 1
      %vm778 = vcmp.eq.s32.totalorder %v762, 1
      %vm779 = vcmp.eq.s32.totalorder %v763, 1
      %vm780 = vcmp.eq.s32.totalorder %v764, 1
      %v781 = vsel %vm765, %v348, 0.0
      %v782 = vsel %vm766, %v349, 0.0
      %v783 = vsel %vm767, %v350, 0.0
      %v784 = vsel %vm768, %v351, 0.0
      %v785 = vsel %vm769, %v352, 0.0
      %v786 = vsel %vm770, %v353, 0.0
      %v787 = vsel %vm771, %v354, 0.0
      %v788 = vsel %vm772, %v355, 0.0
      %v789 = vsel %vm773, %v356, 0.0
      %v790 = vsel %vm774, %v357, 0.0
      %v791 = vsel %vm775, %v358, 0.0
      %v792 = vsel %vm776, %v359, 0.0
      %v793 = vsel %vm777, %v360, 0.0
      %v794 = vsel %vm778, %v361, 0.0
      %v795 = vsel %vm779, %v362, 0.0
      %v796 = vsel %vm780, %v363, 0.0
      %v797 = vpack.c.bf16 %v782, %v781
      %v798 = vpack.c.bf16 %v784, %v783
      %v799 = vpack.c.bf16 %v786, %v785
      %v800 = vpack.c.bf16 %v788, %v787
      %v801 = vpack.c.bf16 %v790, %v789
      %v802 = vpack.c.bf16 %v792, %v791
      %v803 = vpack.c.bf16 %v794, %v793
      %v804 = vpack.c.bf16 %v796, %v795
      %v813 = vunpack.c.l.b16 %v797
      %v814 = vunpack.c.h.b16 %v797
      %v815 = vunpack.c.l.b16 %v798
      %v816 = vunpack.c.h.b16 %v798
      %v817 = vunpack.c.l.b16 %v799
      %v818 = vunpack.c.h.b16 %v799
      %v819 = vunpack.c.l.b16 %v800
      %v820 = vunpack.c.h.b16 %v800
      %v821 = vunpack.c.l.b16 %v801
      %v822 = vunpack.c.h.b16 %v801
      %v823 = vunpack.c.l.b16 %v802
      %v824 = vunpack.c.h.b16 %v802
      %v825 = vunpack.c.l.b16 %v803
      %v826 = vunpack.c.h.b16 %v803
      %v827 = vunpack.c.l.b16 %v804
      %v828 = vunpack.c.h.b16 %v804
      %v829 = vpack.c.b16 %v813, %v813
      %v830 = vpack.c.b16 %v814, %v814
      %v831 = vpack.c.b16 %v815, %v815
      %v832 = vpack.c.b16 %v816, %v816
      %v833 = vpack.c.b16 %v817, %v817
      %v834 = vpack.c.b16 %v818, %v818
      %v835 = vpack.c.b16 %v819, %v819
      %v836 = vpack.c.b16 %v820, %v820
      %v837 = vpack.c.b16 %v821, %v821
      %v838 = vpack.c.b16 %v822, %v822
      %v839 = vpack.c.b16 %v823, %v823
      %v840 = vpack.c.b16 %v824, %v824
      %v841 = vpack.c.b16 %v825, %v825
      %v842 = vpack.c.b16 %v826, %v826
      %v843 = vpack.c.b16 %v827, %v827
      %v844 = vpack.c.b16 %v828, %v828
      %861 = vst [vmem:[#allocation2] sm:$0xf] %v829
      %862 = vst [vmem:[#allocation2 + $0x4] sm:$0xf] %v830
      %863 = vst [vmem:[#allocation2 + $0x8] sm:$0xf] %v831
      %864 = vst [vmem:[#allocation2 + $0xc] sm:$0xf] %v832
      %865 = vst [vmem:[#allocation2 + $0x10] sm:$0xf] %v833
      %866 = vst [vmem:[#allocation2 + $0x14] sm:$0xf] %v834
      %867 = vst [vmem:[#allocation2 + $0x18] sm:$0xf] %v835
      %868 = vst [vmem:[#allocation2 + $0x1c] sm:$0xf] %v836
      %869 = vst [vmem:[#allocation2 + $0x20] sm:$0xf] %v837
      %870 = vst [vmem:[#allocation2 + $0x24] sm:$0xf] %v838
      %871 = vst [vmem:[#allocation2 + $0x28] sm:$0xf] %v839
      %872 = vst [vmem:[#allocation2 + $0x2c] sm:$0xf] %v840
      %873 = vst [vmem:[#allocation2 + $0x30] sm:$0xf] %v841
      %874 = vst [vmem:[#allocation2 + $0x34] sm:$0xf] %v842
      %875 = vst [vmem:[#allocation2 + $0x38] sm:$0xf] %v843
      %vm876 = vcmask 1040384
      %vm877 = vsmask.f32 256
      %vm878 = vmand %vm876, %vm877
      %v879 = vld [vmem:[#allocation2 + $0x3c] sm:$0x1]
      %v880 = vsel %vm878, %v844, %v879
      %881 = vst [vmem:[#allocation2 + $0x3c] sm:$0x1] %v880
      %v882 = vld [vmem:[#allocation2] sm:$0xf]
      %v883 = vld [vmem:[#allocation2 + $0x4] sm:$0xf]
      %v884 = vld [vmem:[#allocation2 + $0x8] sm:$0xf]
      %v885 = vld [vmem:[#allocation2 + $0xc] sm:$0xf]
      %v886 = vld [vmem:[#allocation2 + $0x10] sm:$0xf]
      %v887 = vld [vmem:[#allocation2 + $0x14] sm:$0xf]
      %v888 = vld [vmem:[#allocation2 + $0x18] sm:$0xf]
      %v889 = vld [vmem:[#allocation2 + $0x1c] sm:$0xf]
      %v890 = vld [vmem:[#allocation2 + $0x20] sm:$0xf]
      %v891 = vld [vmem:[#allocation2 + $0x24] sm:$0xf]
      %v892 = vld [vmem:[#allocation2 + $0x28] sm:$0xf]
      %v893 = vld [vmem:[#allocation2 + $0x2c] sm:$0x1]
      %v894 = vld [vmem:[#allocation2] sm:$0xe]
      %v895 = vld [vmem:[#allocation2 + $0x4] sm:$0xe]
      %v896 = vld [vmem:[#allocation2 + $0x2c] sm:$0xf]
      %v897 = vld [vmem:[#allocation2 + $0x30] sm:$0x3]
      %v898 = vld [vmem:[#allocation2 + $0x4] sm:$0xc]
      %v899 = vld [vmem:[#allocation2 + $0x30] sm:$0x7]
      %v900 = vld [vmem:[#allocation2 + $0x8] sm:$0x8]
      %v901 = vld [vmem:[#allocation2 + $0x30] sm:$0xf]
      %v902 = vld [vmem:[#allocation2 + $0x34] sm:$0x7]
      %v903 = vld [vmem:[#allocation2 + $0x34] sm:$0xf]
      %v915 = vunpack.c.l.b16 %v882
      %v916 = vunpack.c.l.b16 %v883
      %v917 = vunpack.c.l.b16 %v884
      %v918 = vunpack.c.l.b16 %v885
      %v919 = vunpack.c.l.b16 %v886
      %v920 = vunpack.c.l.b16 %v887
      %v921 = vunpack.c.l.b16 %v888
      %v922 = vunpack.c.l.b16 %v889
      %v923 = vunpack.c.l.b16 %v890
      %v924 = vunpack.c.l.b16 %v891
      %v925 = vunpack.c.l.b16 %v892
      %v926 = vpack.c.b16 %v916, %v915
      %v927 = vpack.c.b16 %v918, %v917
      %v928 = vpack.c.b16 %v920, %v919
      %v929 = vpack.c.b16 %v922, %v921
      %v930 = vpack.c.b16 %v924, %v923
      %v931 = vpack.c.b16 %v925, %v925
      %v939 = vunpack.c.l.b16 %v893
      %v940 = vpack.c.b16 %v939, %v925
      %vm941 = vsmask.f32 7424
      %v943 = vshrl.u32 %v926, 16
      %v945 = vshll.u32 %v926, 16
      %v947 = vrot.slane %v945, 1
      %v948 = vor.u32 %v943, %v947
      %v950 = vshll.u32 %v927, 16
      %v952 = vrot.slane %v950, 1
      %v953 = vsel %vm941, %v948, %v952
      %v954 = vshrl.u32 %v927, 16
      %v956 = vor.u32 %v954, %v952
      %v958 = vshll.u32 %v928, 16
      %v960 = vrot.slane %v958, 1
      %v961 = vsel %vm941, %v956, %v960
      %v962 = vshrl.u32 %v928, 16
      %v964 = vor.u32 %v962, %v960
      %v966 = vshll.u32 %v929, 16
      %v968 = vrot.slane %v966, 1
      %v969 = vsel %vm941, %v964, %v968
      %v970 = vshrl.u32 %v929, 16
      %v972 = vor.u32 %v970, %v968
      %v974 = vshll.u32 %v930, 16
      %v976 = vrot.slane %v974, 1
      %v977 = vsel %vm941, %v972, %v976
      %v978 = vshrl.u32 %v930, 16
      %v980 = vor.u32 %v978, %v976
      %v982 = vshll.u32 %v940, 16
      %v984 = vrot.slane %v982, 1
      %v985 = vsel %vm941, %v980, %v984
      %v986 = vshrl.u32 %v940, 16
      %v988 = vor.u32 %v986, %v984
      %v996 = vunpack.c.l.b16 %v894
      %v997 = vpack.c.b16 %v916, %v996
      %vm998 = vcmask 1046528
      %v999 = vrot.slane %v997, 1
      %v1000 = vrot.slane %v927, 1
      %v1001 = vsel %vm998, %v999, %v1000
      %v1002 = vrot.slane %v928, 1
      %v1003 = vsel %vm998, %v1000, %v1002
      %v1004 = vrot.slane %v929, 1
      %v1005 = vsel %vm998, %v1002, %v1004
      %v1006 = vrot.slane %v930, 1
      %v1007 = vsel %vm998, %v1004, %v1006
      %v1008 = vrot.slane %v940, 1
      %v1009 = vsel %vm998, %v1006, %v1008
      %v1019 = vunpack.c.l.b16 %v895
      %v1020 = vunpack.c.l.b16 %v896
      %v1021 = vunpack.c.l.b16 %v897
      %v1022 = vpack.c.b16 %v917, %v1019
      %v1023 = vpack.c.b16 %v919, %v918
      %v1024 = vpack.c.b16 %v921, %v920
      %v1025 = vpack.c.b16 %v923, %v922
      %v1026 = vpack.c.b16 %v925, %v924
      %v1027 = vpack.c.b16 %v1021, %v1020
      %vm1028 = vsmask.f32 6400
      %v1030 = vshrl.u32 %v1022, 16
      %v1032 = vrot.slane %v1030, 1
      %v1033 = vshll.u32 %v1022, 16
      %v1035 = vrot.slane %v1033, 2
      %v1036 = vor.u32 %v1032, %v1035
      %v1038 = vshrl.u32 %v1023, 16
      %v1040 = vrot.slane %v1038, 1
      %v1041 = vshll.u32 %v1023, 16
      %v1043 = vrot.slane %v1041, 2
      %v1044 = vor.u32 %v1040, %v1043
      %v1045 = vsel %vm1028, %v1036, %v1044
      %v1047 = vshrl.u32 %v1024, 16
      %v1049 = vrot.slane %v1047, 1
      %v1050 = vshll.u32 %v1024, 16
      %v1052 = vrot.slane %v1050, 2
      %v1053 = vor.u32 %v1049, %v1052
      %v1054 = vsel %vm1028, %v1044, %v1053
      %v1056 = vshrl.u32 %v1025, 16
      %v1058 = vrot.slane %v1056, 1
      %v1059 = vshll.u32 %v1025, 16
      %v1061 = vrot.slane %v1059, 2
      %v1062 = vor.u32 %v1058, %v1061
      %v1063 = vsel %vm1028, %v1053, %v1062
      %v1065 = vshrl.u32 %v1026, 16
      %v1067 = vrot.slane %v1065, 1
      %v1068 = vshll.u32 %v1026, 16
      %v1070 = vrot.slane %v1068, 2
      %v1071 = vor.u32 %v1067, %v1070
      %v1072 = vsel %vm1028, %v1062, %v1071
      %v1074 = vshrl.u32 %v1027, 16
      %v1076 = vrot.slane %v1074, 1
      %v1077 = vshll.u32 %v1027, 16
      %v1079 = vrot.slane %v1077, 2
      %v1080 = vor.u32 %v1076, %v1079
      %v1081 = vsel %vm1028, %v1071, %v1080
      %v1089 = vunpack.c.l.b16 %v898
      %v1090 = vpack.c.b16 %v917, %v1089
      %vm1091 = vcmask 1045504
      %v1092 = vrot.slane %v1090, 2
      %v1093 = vrot.slane %v1023, 2
      %v1094 = vsel %vm1091, %v1092, %v1093
      %v1095 = vrot.slane %v1024, 2
      %v1096 = vsel %vm1091, %v1093, %v1095
      %v1097 = vrot.slane %v1025, 2
      %v1098 = vsel %vm1091, %v1095, %v1097
      %v1099 = vrot.slane %v1026, 2
      %v1100 = vsel %vm1091, %v1097, %v1099
      %v1101 = vrot.slane %v1027, 2
      %v1102 = vsel %vm1091, %v1099, %v1101
      %v1110 = vunpack.c.l.b16 %v899
      %v1111 = vpack.c.b16 %v1110, %v1020
      %vm1112 = vsmask.f32 5376
      %v1114 = vshrl.u32 %v1090, 16
      %v1116 = vrot.slane %v1114, 2
      %v1117 = vshll.u32 %v1090, 16
      %v1119 = vrot.slane %v1117, 3
      %v1120 = vor.u32 %v1116, %v1119
      %v1121 = vrot.slane %v1038, 2
      %v1122 = vrot.slane %v1041, 3
      %v1123 = vor.u32 %v1121, %v1122
      %v1124 = vsel %vm1112, %v1120, %v1123
      %v1125 = vrot.slane %v1047, 2
      %v1126 = vrot.slane %v1050, 3
      %v1127 = vor.u32 %v1125, %v1126
      %v1128 = vsel %vm1112, %v1123, %v1127
      %v1129 = vrot.slane %v1056, 2
      %v1130 = vrot.slane %v1059, 3
      %v1131 = vor.u32 %v1129, %v1130
      %v1132 = vsel %vm1112, %v1127, %v1131
      %v1133 = vrot.slane %v1065, 2
      %v1134 = vrot.slane %v1068, 3
      %v1135 = vor.u32 %v1133, %v1134
      %v1136 = vsel %vm1112, %v1131, %v1135
      %v1138 = vshrl.u32 %v1111, 16
      %v1140 = vrot.slane %v1138, 2
      %v1141 = vshll.u32 %v1111, 16
      %v1143 = vrot.slane %v1141, 3
      %v1144 = vor.u32 %v1140, %v1143
      %v1145 = vsel %vm1112, %v1135, %v1144
      %v1155 = vunpack.c.l.b16 %v900
      %v1156 = vunpack.c.l.b16 %v901
      %v1157 = vunpack.c.l.b16 %v902
      %v1158 = vpack.c.b16 %v918, %v1155
      %v1159 = vpack.c.b16 %v1020, %v925
      %v1160 = vpack.c.b16 %v1157, %v1156
      %vm1161 = vcmask 1044480
      %v1162 = vrot.slane %v1158, 3
      %v1163 = vrot.slane %v928, 3
      %v1164 = vsel %vm1161, %v1162, %v1163
      %v1165 = vrot.slane %v929, 3
      %v1166 = vsel %vm1161, %v1163, %v1165
      %v1167 = vrot.slane %v930, 3
      %v1168 = vsel %vm1161, %v1165, %v1167
      %v1169 = vrot.slane %v1159, 3
      %v1170 = vsel %vm1161, %v1167, %v1169
      %v1171 = vrot.slane %v1160, 3
      %v1172 = vsel %vm1161, %v1169, %v1171
      %v1180 = vunpack.c.l.b16 %v903
      %v1181 = vpack.c.b16 %v1180, %v1156
      %vm1182 = vsmask.f32 4352
      %v1184 = vshrl.u32 %v1158, 16
      %v1186 = vrot.slane %v1184, 3
      %v1187 = vshll.u32 %v1158, 16
      %v1189 = vrot.slane %v1187, 4
      %v1190 = vor.u32 %v1186, %v1189
      %v1191 = vrot.slane %v962, 3
      %v1192 = vrot.slane %v958, 4
      %v1193 = vor.u32 %v1191, %v1192
      %v1194 = vsel %vm1182, %v1190, %v1193
      %v1195 = vrot.slane %v970, 3
      %v1196 = vrot.slane %v966, 4
      %v1197 = vor.u32 %v1195, %v1196
      %v1198 = vsel %vm1182, %v1193, %v1197
      %v1199 = vrot.slane %v978, 3
      %v1200 = vrot.slane %v974, 4
      %v1201 = vor.u32 %v1199, %v1200
      %v1202 = vsel %vm1182, %v1197, %v1201
      %v1204 = vshrl.u32 %v1159, 16
      %v1206 = vrot.slane %v1204, 3
      %v1207 = vshll.u32 %v1159, 16
      %v1209 = vrot.slane %v1207, 4
      %v1210 = vor.u32 %v1206, %v1209
      %v1211 = vsel %vm1182, %v1201, %v1210
      %v1213 = vshrl.u32 %v1181, 16
      %v1215 = vrot.slane %v1213, 3
      %v1216 = vshll.u32 %v1181, 16
      %v1218 = vrot.slane %v1216, 4
      %v1219 = vor.u32 %v1215, %v1218
      %v1220 = vsel %vm1182, %v1210, %v1219
      %v1227 = vpack.c.b16 %v1156, %v1020
      %v1228 = vpack.c.b16 %v1180, %v1180
      %v1235 = vld [vmem:[%s3] sm:$0xf]
      %v1236 = vld [vmem:[%s3 + $0x4] sm:$0xf]
      %v1237 = vld [vmem:[%s3 + $0x8] sm:$0xf]
      %v1238 = vld [vmem:[%s3 + $0xc] sm:$0xf]
      %v1239 = vld [vmem:[%s3 + $0x10] sm:$0xf]
      %v1240 = vld [vmem:[%s3 + $0x14] sm:$0xf]
      %v1241 = vld [vmem:[%s3 + $0x18] sm:$0xf]
      %v1242 = vld [vmem:[%s3 + $0x1c] sm:$0xf]
      %v1243 = vld [vmem:[%s3 + $0x20] sm:$0xf]
      %v1244 = vld [vmem:[%s3 + $0x24] sm:$0xf]
      %v1245 = vld [vmem:[%s3 + $0x28] sm:$0xf]
      %v1246 = vld [vmem:[%s3 + $0x2c] sm:$0xf]
      %v1247 = vld [vmem:[%s3 + $0x30] sm:$0xf]
      %v1248 = vld [vmem:[%s3 + $0x34] sm:$0xf]
      %v1249 = vld [vmem:[%s3 + $0x38] sm:$0xf]
      %v1250 = vld [vmem:[%s3 + $0x3c] sm:$0xf]
      %v1251 = vld [vmem:[%s3 + $0x40] sm:$0xf]
      %v1252 = vld [vmem:[%s3 + $0x44] sm:$0xf]
      %v1253 = vld [vmem:[%s3 + $0x48] sm:$0xf]
      %v1254 = vld [vmem:[%s3 + $0x4c] sm:$0xf]
      %v1255 = vld [vmem:[%s3 + $0x50] sm:$0xf]
      %v1256 = vld [vmem:[%s3 + $0x54] sm:$0xf]
      %v1257 = vld [vmem:[%s3 + $0x58] sm:$0xf]
      %v1258 = vld [vmem:[%s3 + $0x5c] sm:$0xf]
      %v1259 = vld [vmem:[%s3 + $0x60] sm:$0xf]
      %v1260 = vld [vmem:[%s3 + $0x64] sm:$0xf]
      %v1261 = vld [vmem:[%s3 + $0x68] sm:$0xf]
      %v1262 = vld [vmem:[%s3 + $0x6c] sm:$0xf]
      %v1263 = vld [vmem:[%s3 + $0x70] sm:$0xf]
      %v1264 = vld [vmem:[%s3 + $0x74] sm:$0xf]
      %v1265 = vld [vmem:[%s3 + $0x78] sm:$0xf]
      %v1266 = vld [vmem:[%s3 + $0x7c] sm:$0xf]
      %v1267 = vld [vmem:[%s3 + $0x80] sm:$0xf]
      %v1268 = vld [vmem:[%s3 + $0x84] sm:$0xf]
      %v1269 = vld [vmem:[%s3 + $0x88] sm:$0xf]
      %v1270 = vld [vmem:[%s3 + $0x8c] sm:$0xf]
      %v1271 = vld [vmem:[%s3 + $0x90] sm:$0xf]
      %v1272 = vld [vmem:[%s3 + $0x94] sm:$0xf]
      %v1273 = vld [vmem:[%s3 + $0x98] sm:$0xf]
      %v1274 = vld [vmem:[%s3 + $0x9c] sm:$0xf]
      %v1275 = vld [vmem:[%s3 + $0xa0] sm:$0xf]
      %v1276 = vld [vmem:[%s3 + $0xa4] sm:$0xf]
      %v1277 = vld [vmem:[%s3 + $0xa8] sm:$0xf]
      %v1278 = vld [vmem:[%s3 + $0xac] sm:$0xf]
      %v1279 = vld [vmem:[%s3 + $0xb0] sm:$0xf]
      %v1280 = vld [vmem:[%s3 + $0xb4] sm:$0xf]
      %v1281 = vld [vmem:[%s3 + $0xb8] sm:$0xf]
      %v1282 = vld [vmem:[%s3 + $0xbc] sm:$0xf]
      %v1283 = vld [vmem:[%s3 + $0xc0] sm:$0xf]
      %v1284 = vld [vmem:[%s3 + $0xc4] sm:$0xf]
      %v1285 = vld [vmem:[%s3 + $0xc8] sm:$0xf]
      %v1286 = vld [vmem:[%s3 + $0xcc] sm:$0xf]
      %v1287 = vld [vmem:[%s3 + $0xd0] sm:$0xf]
      %v1288 = vld [vmem:[%s3 + $0xd4] sm:$0xf]
      %v1289 = vld [vmem:[%s3 + $0xd8] sm:$0xf]
      %v1290 = vld [vmem:[%s3 + $0xdc] sm:$0xf]
      %v1291 = vld [vmem:[%s3 + $0xe0] sm:$0xf]
      %v1292 = vld [vmem:[%s3 + $0xe4] sm:$0xf]
      %v1293 = vld [vmem:[%s3 + $0xe8] sm:$0xf]
      %v1294 = vld [vmem:[%s3 + $0xec] sm:$0xf]
      %v1295 = vld [vmem:[%s3 + $0xf0] sm:$0xf]
      %v1296 = vld [vmem:[%s3 + $0xf4] sm:$0xf]
      %v1297 = vld [vmem:[%s3 + $0xf8] sm:$0xf]
      %v1298 = vld [vmem:[%s3 + $0xfc] sm:$0xf]
      %v1299 = vld [vmem:[%s3 + $0x100] sm:$0xf]
      %v1300 = vld [vmem:[%s3 + $0x104] sm:$0xf]
      %v1301 = vld [vmem:[%s3 + $0x108] sm:$0xf]
      %v1302 = vld [vmem:[%s3 + $0x10c] sm:$0xf]
      %v1303 = vld [vmem:[%s3 + $0x110] sm:$0xf]
      %v1304 = vld [vmem:[%s3 + $0x114] sm:$0xf]
      %v1305 = vld [vmem:[%s3 + $0x118] sm:$0xf]
      %v1306 = vld [vmem:[%s3 + $0x11c] sm:$0xf]
      %v1307 = vld [vmem:[%s3 + $0x120] sm:$0xf]
      %v1308 = vld [vmem:[%s3 + $0x124] sm:$0xf]
      %v1309 = vld [vmem:[%s3 + $0x128] sm:$0xf]
      %v1310 = vld [vmem:[%s3 + $0x12c] sm:$0xf]
      %v1311 = vld [vmem:[%s3 + $0x130] sm:$0xf]
      %v1312 = vld [vmem:[%s3 + $0x134] sm:$0xf]
      %v1313 = vld [vmem:[%s3 + $0x138] sm:$0xf]
      %v1314 = vld [vmem:[%s3 + $0x13c] sm:$0xf]
      %v1315 = vld [vmem:[%s3 + $0x140] sm:$0xf]
      %v1316 = vld [vmem:[%s3 + $0x144] sm:$0xf]
      %v1317 = vld [vmem:[%s3 + $0x148] sm:$0xf]
      %v1318 = vld [vmem:[%s3 + $0x14c] sm:$0xf]
      %v1319 = vld [vmem:[%s3 + $0x150] sm:$0xf]
      %v1320 = vld [vmem:[%s3 + $0x154] sm:$0xf]
      %v1321 = vld [vmem:[%s3 + $0x158] sm:$0xf]
      %v1322 = vld [vmem:[%s3 + $0x15c] sm:$0xf]
      %v1323 = vld [vmem:[%s3 + $0x160] sm:$0xf]
      %v1324 = vld [vmem:[%s3 + $0x164] sm:$0xf]
      %v1325 = vld [vmem:[%s3 + $0x168] sm:$0xf]
      %v1326 = vld [vmem:[%s3 + $0x16c] sm:$0xf]
      %v1327 = vld [vmem:[%s3 + $0x170] sm:$0xf]
      %v1328 = vld [vmem:[%s3 + $0x174] sm:$0xf]
      %v1329 = vld [vmem:[%s3 + $0x178] sm:$0xf]
      %v1330 = vld [vmem:[%s3 + $0x17c] sm:$0xf]
      %v1331 = vld [vmem:[%s3 + $0x180] sm:$0xf]
      %v1332 = vld [vmem:[%s3 + $0x184] sm:$0xf]
      %v1333 = vld [vmem:[%s3 + $0x188] sm:$0xf]
      %v1334 = vld [vmem:[%s3 + $0x18c] sm:$0xf]
      %v1335 = vld [vmem:[%s3 + $0x190] sm:$0xf]
      %v1336 = vld [vmem:[%s3 + $0x194] sm:$0xf]
      %v1337 = vld [vmem:[%s3 + $0x198] sm:$0xf]
      %v1338 = vld [vmem:[%s3 + $0x19c] sm:$0xf]
      %v1339 = vld [vmem:[%s3 + $0x1a0] sm:$0xf]
      %v1340 = vld [vmem:[%s3 + $0x1a4] sm:$0xf]
      %v1341 = vld [vmem:[%s3 + $0x1a8] sm:$0xf]
      %v1342 = vld [vmem:[%s3 + $0x1ac] sm:$0xf]
      %v1343 = vld [vmem:[%s3 + $0x1b0] sm:$0xf]
      %v1344 = vld [vmem:[%s3 + $0x1b4] sm:$0xf]
      %v1345 = vld [vmem:[%s3 + $0x1b8] sm:$0xf]
      %v1346 = vld [vmem:[%s3 + $0x1bc] sm:$0xf]
      %v1347 = vld [vmem:[%s3 + $0x1c0] sm:$0xf]
      %v1348 = vld [vmem:[%s3 + $0x1c4] sm:$0xf]
      %v1349 = vld [vmem:[%s3 + $0x1c8] sm:$0xf]
      %v1350 = vld [vmem:[%s3 + $0x1cc] sm:$0xf]
      %v1351 = vld [vmem:[%s3 + $0x1d0] sm:$0xf]
      %v1352 = vld [vmem:[%s3 + $0x1d4] sm:$0xf]
      %v1353 = vld [vmem:[%s3 + $0x1d8] sm:$0xf]
      %v1354 = vld [vmem:[%s3 + $0x1dc] sm:$0xf]
      %v1355 = vld [vmem:[%s3 + $0x1e0] sm:$0xf]
      %v1356 = vld [vmem:[%s3 + $0x1e4] sm:$0xf]
      %v1357 = vld [vmem:[%s3 + $0x1e8] sm:$0xf]
      %v1358 = vld [vmem:[%s3 + $0x1ec] sm:$0xf]
      %v1359 = vld [vmem:[%s3 + $0x1f0] sm:$0xf]
      %v1360 = vld [vmem:[%s3 + $0x1f4] sm:$0xf]
      %v1361 = vld [vmem:[%s3 + $0x1f8] sm:$0xf]
      %v1362 = vld [vmem:[%s3 + $0x1fc] sm:$0xf]
      %v1363 = vld [vmem:[%s3 + $0x200] sm:$0xf]
      %v1364 = vld [vmem:[%s3 + $0x204] sm:$0xf]
      %v1365 = vld [vmem:[%s3 + $0x208] sm:$0xf]
      %v1366 = vld [vmem:[%s3 + $0x20c] sm:$0xf]
      %v1367 = vld [vmem:[%s3 + $0x210] sm:$0xf]
      %v1368 = vld [vmem:[%s3 + $0x214] sm:$0xf]
      %v1369 = vld [vmem:[%s3 + $0x218] sm:$0xf]
      %v1370 = vld [vmem:[%s3 + $0x21c] sm:$0xf]
      %v1371 = vld [vmem:[%s3 + $0x220] sm:$0xf]
      %v1372 = vld [vmem:[%s3 + $0x224] sm:$0xf]
      %v1373 = vld [vmem:[%s3 + $0x228] sm:$0xf]
      %v1374 = vld [vmem:[%s3 + $0x22c] sm:$0xf]
      %v1375 = vld [vmem:[%s3 + $0x230] sm:$0xf]
      %v1376 = vld [vmem:[%s3 + $0x234] sm:$0xf]
      %v1377 = vld [vmem:[%s3 + $0x238] sm:$0xf]
      %v1378 = vld [vmem:[%s3 + $0x23c] sm:$0xf]
      %v1523 = vunpack.c.l.b16 %v1235
      %v1524 = vunpack.c.l.b16 %v1236
      %v1525 = vunpack.c.l.b16 %v1237
      %v1526 = vunpack.c.l.b16 %v1238
      %v1527 = vunpack.c.l.b16 %v1239
      %v1528 = vunpack.c.l.b16 %v1240
      %v1529 = vunpack.c.l.b16 %v1241
      %v1530 = vunpack.c.l.b16 %v1242
      %v1531 = vunpack.c.l.b16 %v1243
      %v1532 = vunpack.c.l.b16 %v1244
      %v1533 = vunpack.c.l.b16 %v1245
      %v1534 = vunpack.c.l.b16 %v1246
      %v1535 = vunpack.c.l.b16 %v1247
      %v1536 = vunpack.c.l.b16 %v1248
      %v1537 = vunpack.c.l.b16 %v1249
      %v1538 = vunpack.c.l.b16 %v1250
      %v1539 = vunpack.c.l.b16 %v1251
      %v1540 = vunpack.c.l.b16 %v1252
      %v1541 = vunpack.c.l.b16 %v1253
      %v1542 = vunpack.c.l.b16 %v1254
      %v1543 = vunpack.c.l.b16 %v1255
      %v1544 = vunpack.c.l.b16 %v1256
      %v1545 = vunpack.c.l.b16 %v1257
      %v1546 = vunpack.c.l.b16 %v1258
      %v1547 = vunpack.c.l.b16 %v1259
      %v1548 = vunpack.c.l.b16 %v1260
      %v1549 = vunpack.c.l.b16 %v1261
      %v1550 = vunpack.c.l.b16 %v1262
      %v1551 = vunpack.c.l.b16 %v1263
      %v1552 = vunpack.c.l.b16 %v1264
      %v1553 = vunpack.c.l.b16 %v1265
      %v1554 = vunpack.c.l.b16 %v1266
      %v1555 = vunpack.c.l.b16 %v1267
      %v1556 = vunpack.c.l.b16 %v1268
      %v1557 = vunpack.c.l.b16 %v1269
      %v1558 = vunpack.c.l.b16 %v1270
      %v1559 = vunpack.c.l.b16 %v1271
      %v1560 = vunpack.c.l.b16 %v1272
      %v1561 = vunpack.c.l.b16 %v1273
      %v1562 = vunpack.c.l.b16 %v1274
      %v1563 = vunpack.c.l.b16 %v1275
      %v1564 = vunpack.c.l.b16 %v1276
      %v1565 = vunpack.c.l.b16 %v1277
      %v1566 = vunpack.c.l.b16 %v1278
      %v1567 = vunpack.c.l.b16 %v1279
      %v1568 = vunpack.c.l.b16 %v1280
      %v1569 = vunpack.c.l.b16 %v1281
      %v1570 = vunpack.c.l.b16 %v1282
      %v1571 = vunpack.c.l.b16 %v1283
      %v1572 = vunpack.c.l.b16 %v1284
      %v1573 = vunpack.c.l.b16 %v1285
      %v1574 = vunpack.c.l.b16 %v1286
      %v1575 = vunpack.c.l.b16 %v1287
      %v1576 = vunpack.c.l.b16 %v1288
      %v1577 = vunpack.c.l.b16 %v1289
      %v1578 = vunpack.c.l.b16 %v1290
      %v1579 = vunpack.c.l.b16 %v1291
      %v1580 = vunpack.c.l.b16 %v1292
      %v1581 = vunpack.c.l.b16 %v1293
      %v1582 = vunpack.c.l.b16 %v1294
      %v1583 = vunpack.c.l.b16 %v1295
      %v1584 = vunpack.c.l.b16 %v1296
      %v1585 = vunpack.c.l.b16 %v1297
      %v1586 = vunpack.c.l.b16 %v1298
      %v1587 = vunpack.c.l.b16 %v1299
      %v1588 = vunpack.c.l.b16 %v1300
      %v1589 = vunpack.c.l.b16 %v1301
      %v1590 = vunpack.c.l.b16 %v1302
      %v1591 = vunpack.c.l.b16 %v1303
      %v1592 = vunpack.c.l.b16 %v1304
      %v1593 = vunpack.c.l.b16 %v1305
      %v1594 = vunpack.c.l.b16 %v1306
      %v1595 = vunpack.c.l.b16 %v1307
      %v1596 = vunpack.c.l.b16 %v1308
      %v1597 = vunpack.c.l.b16 %v1309
      %v1598 = vunpack.c.l.b16 %v1310
      %v1599 = vunpack.c.l.b16 %v1311
      %v1600 = vunpack.c.l.b16 %v1312
      %v1601 = vunpack.c.l.b16 %v1313
      %v1602 = vunpack.c.l.b16 %v1314
      %v1603 = vunpack.c.l.b16 %v1315
      %v1604 = vunpack.c.l.b16 %v1316
      %v1605 = vunpack.c.l.b16 %v1317
      %v1606 = vunpack.c.l.b16 %v1318
      %v1607 = vunpack.c.l.b16 %v1319
      %v1608 = vunpack.c.l.b16 %v1320
      %v1609 = vunpack.c.l.b16 %v1321
      %v1610 = vunpack.c.l.b16 %v1322
      %v1611 = vunpack.c.l.b16 %v1323
      %v1612 = vunpack.c.l.b16 %v1324
      %v1613 = vunpack.c.l.b16 %v1325
      %v1614 = vunpack.c.l.b16 %v1326
      %v1615 = vunpack.c.l.b16 %v1327
      %v1616 = vunpack.c.l.b16 %v1328
      %v1617 = vunpack.c.l.b16 %v1329
      %v1618 = vunpack.c.l.b16 %v1330
      %v1619 = vunpack.c.l.b16 %v1331
      %v1620 = vunpack.c.l.b16 %v1332
      %v1621 = vunpack.c.l.b16 %v1333
      %v1622 = vunpack.c.l.b16 %v1334
      %v1623 = vunpack.c.l.b16 %v1335
      %v1624 = vunpack.c.l.b16 %v1336
      %v1625 = vunpack.c.l.b16 %v1337
      %v1626 = vunpack.c.l.b16 %v1338
      %v1627 = vunpack.c.l.b16 %v1339
      %v1628 = vunpack.c.l.b16 %v1340
      %v1629 = vunpack.c.l.b16 %v1341
      %v1630 = vunpack.c.l.b16 %v1342
      %v1631 = vunpack.c.l.b16 %v1343
      %v1632 = vunpack.c.l.b16 %v1344
      %v1633 = vunpack.c.l.b16 %v1345
      %v1634 = vunpack.c.l.b16 %v1346
      %v1635 = vunpack.c.l.b16 %v1347
      %v1636 = vunpack.c.l.b16 %v1348
      %v1637 = vunpack.c.l.b16 %v1349
      %v1638 = vunpack.c.l.b16 %v1350
      %v1639 = vunpack.c.l.b16 %v1351
      %v1640 = vunpack.c.l.b16 %v1352
      %v1641 = vunpack.c.l.b16 %v1353
      %v1642 = vunpack.c.l.b16 %v1354
      %v1643 = vunpack.c.l.b16 %v1355
      %v1644 = vunpack.c.l.b16 %v1356
      %v1645 = vunpack.c.l.b16 %v1357
      %v1646 = vunpack.c.l.b16 %v1358
      %v1647 = vunpack.c.l.b16 %v1359
      %v1648 = vunpack.c.l.b16 %v1360
      %v1649 = vunpack.c.l.b16 %v1361
      %v1650 = vunpack.c.l.b16 %v1362
      %v1651 = vunpack.c.l.b16 %v1363
      %v1652 = vunpack.c.l.b16 %v1364
      %v1653 = vunpack.c.l.b16 %v1365
      %v1654 = vunpack.c.l.b16 %v1366
      %v1655 = vunpack.c.l.b16 %v1367
      %v1656 = vunpack.c.l.b16 %v1368
      %v1657 = vunpack.c.l.b16 %v1369
      %v1658 = vunpack.c.l.b16 %v1370
      %v1659 = vunpack.c.l.b16 %v1371
      %v1660 = vunpack.c.l.b16 %v1372
      %v1661 = vunpack.c.l.b16 %v1373
      %v1662 = vunpack.c.l.b16 %v1374
      %v1663 = vunpack.c.l.b16 %v1375
      %v1664 = vunpack.c.l.b16 %v1376
      %v1665 = vunpack.c.l.b16 %v1377
      %v1666 = vunpack.c.l.b16 %v1378
      %v1667 = vpack.c.b16 %v1524, %v1523
      %v1668 = vpack.c.b16 %v1526, %v1525
      %v1669 = vpack.c.b16 %v1528, %v1527
      %v1670 = vpack.c.b16 %v1530, %v1529
      %v1671 = vpack.c.b16 %v1532, %v1531
      %v1672 = vpack.c.b16 %v1534, %v1533
      %v1673 = vpack.c.b16 %v1536, %v1535
      %v1674 = vpack.c.b16 %v1538, %v1537
      %v1675 = vpack.c.b16 %v1540, %v1539
      %v1676 = vpack.c.b16 %v1542, %v1541
      %v1677 = vpack.c.b16 %v1544, %v1543
      %v1678 = vpack.c.b16 %v1546, %v1545
      %v1679 = vpack.c.b16 %v1548, %v1547
      %v1680 = vpack.c.b16 %v1550, %v1549
      %v1681 = vpack.c.b16 %v1552, %v1551
      %v1682 = vpack.c.b16 %v1554, %v1553
      %v1683 = vpack.c.b16 %v1556, %v1555
      %v1684 = vpack.c.b16 %v1558, %v1557
      %v1685 = vpack.c.b16 %v1560, %v1559
      %v1686 = vpack.c.b16 %v1562, %v1561
      %v1687 = vpack.c.b16 %v1564, %v1563
      %v1688 = vpack.c.b16 %v1566, %v1565
      %v1689 = vpack.c.b16 %v1568, %v1567
      %v1690 = vpack.c.b16 %v1570, %v1569
      %v1691 = vpack.c.b16 %v1572, %v1571
      %v1692 = vpack.c.b16 %v1574, %v1573
      %v1693 = vpack.c.b16 %v1576, %v1575
      %v1694 = vpack.c.b16 %v1578, %v1577
      %v1695 = vpack.c.b16 %v1580, %v1579
      %v1696 = vpack.c.b16 %v1582, %v1581
      %v1697 = vpack.c.b16 %v1584, %v1583
      %v1698 = vpack.c.b16 %v1586, %v1585
      %v1699 = vpack.c.b16 %v1588, %v1587
      %v1700 = vpack.c.b16 %v1590, %v1589
      %v1701 = vpack.c.b16 %v1592, %v1591
      %v1702 = vpack.c.b16 %v1594, %v1593
      %v1703 = vpack.c.b16 %v1596, %v1595
      %v1704 = vpack.c.b16 %v1598, %v1597
      %v1705 = vpack.c.b16 %v1600, %v1599
      %v1706 = vpack.c.b16 %v1602, %v1601
      %v1707 = vpack.c.b16 %v1604, %v1603
      %v1708 = vpack.c.b16 %v1606, %v1605
      %v1709 = vpack.c.b16 %v1608, %v1607
      %v1710 = vpack.c.b16 %v1610, %v1609
      %v1711 = vpack.c.b16 %v1612, %v1611
      %v1712 = vpack.c.b16 %v1614, %v1613
      %v1713 = vpack.c.b16 %v1616, %v1615
      %v1714 = vpack.c.b16 %v1618, %v1617
      %v1715 = vpack.c.b16 %v1620, %v1619
      %v1716 = vpack.c.b16 %v1622, %v1621
      %v1717 = vpack.c.b16 %v1624, %v1623
      %v1718 = vpack.c.b16 %v1626, %v1625
      %v1719 = vpack.c.b16 %v1628, %v1627
      %v1720 = vpack.c.b16 %v1630, %v1629
      %v1721 = vpack.c.b16 %v1632, %v1631
      %v1722 = vpack.c.b16 %v1634, %v1633
      %v1723 = vpack.c.b16 %v1636, %v1635
      %v1724 = vpack.c.b16 %v1638, %v1637
      %v1725 = vpack.c.b16 %v1640, %v1639
      %v1726 = vpack.c.b16 %v1642, %v1641
      %v1727 = vpack.c.b16 %v1644, %v1643
      %v1728 = vpack.c.b16 %v1646, %v1645
      %v1729 = vpack.c.b16 %v1648, %v1647
      %v1730 = vpack.c.b16 %v1650, %v1649
      %v1731 = vpack.c.b16 %v1652, %v1651
      %v1732 = vpack.c.b16 %v1654, %v1653
      %v1733 = vpack.c.b16 %v1656, %v1655
      %v1734 = vpack.c.b16 %v1658, %v1657
      %v1735 = vpack.c.b16 %v1660, %v1659
      %v1736 = vpack.c.b16 %v1662, %v1661
      %v1737 = vpack.c.b16 %v1664, %v1663
      %v1738 = vpack.c.b16 %v1666, %v1665
      %1811 = vmatprep.subr.bf16.mxu0 0
      %1812 = vmatpush1.bf16.msra.mxu0 %v1667
      %1813 = vmatprep.subr.bf16.mxu0 0
      %1814 = vmatpush1.bf16.msra.mxu0 %v1668
      %1815 = vmatprep.subr.bf16.mxu0 0
      %1816 = vmatpush1.bf16.msra.mxu0 %v1669
      %1817 = vmatprep.subr.bf16.mxu0 0
      %1818 = vmatpush1.bf16.msra.mxu0 %v1670
      %1819 = vmatprep.subr.bf16.mxu0 0
      %1820 = vmatpush1.bf16.msra.mxu0 %v1671
      %1821 = vmatprep.subr.bf16.mxu0 0
      %1822 = vmatpush1.bf16.msra.mxu0 %v1672
      %1823 = vmatprep.subr.bf16.mxu0 0
      %1824 = vmatpush1.bf16.msra.mxu0 %v1673
      %1825 = vmatprep.subr.bf16.mxu0 0
      %1826 = vmatpush1.bf16.msra.mxu0 %v1674
      %1827 = vmatprep.subr.bf16.mxu0 0
      %1828 = vmatpush1.bf16.msra.mxu0 %v1675
      %1829 = vmatprep.subr.bf16.mxu0 0
      %1830 = vmatpush1.bf16.msra.mxu0 %v1676
      %1831 = vmatprep.subr.bf16.mxu0 0
      %1832 = vmatpush1.bf16.msra.mxu0 %v1677
      %1833 = vmatprep.subr.bf16.mxu0 0
      %1834 = vmatpush1.bf16.msra.mxu0 %v1678
      %1835 = vmatprep.subr.bf16.mxu0 0
      %1836 = vmatpush1.bf16.msra.mxu0 %v1679
      %1837 = vmatprep.subr.bf16.mxu0 0
      %1838 = vmatpush1.bf16.msra.mxu0 %v1680
      %1839 = vmatprep.subr.bf16.mxu0 0
      %1840 = vmatpush1.bf16.msra.mxu0 %v1681
      %1841 = vmatprep.subr.bf16.mxu0 0
      %1842 = vmatpush1.bf16.msra.mxu0 %v1682
      %1843 = vmatprep.mubr.bf16.mxu0 %v953
      %1844 = vmatmul.mubr.bf16.gmra.mrb[0].mxu0 %v926
      %v1845 = vpop.f32.mrb[0].mxu0
      %v1846 = vadd.f32 0.0, %v1845
      %v1847 = vpop.f32.mrb[0].mxu0
      %v1848 = vpop.f32.mrb[0].mxu0
      %v1849 = vadd.f32 0.0, %v1848
      %v1850 = vpop.f32.mrb[0].mxu0
      %1851 = vmatprep.mubr.bf16.mxu0 %v961
      %1852 = vmatmul.mubr.bf16.gmra.mrb[0].mxu0 %v927
      %v1853 = vpop.f32.mrb[0].mxu0
      %v1854 = vadd.f32 0.0, %v1853
      %v1855 = vpop.f32.mrb[0].mxu0
      %v1856 = vpop.f32.mrb[0].mxu0
      %v1857 = vadd.f32 0.0, %v1856
      %v1858 = vpop.f32.mrb[0].mxu0
      %1859 = vmatprep.mubr.bf16.mxu0 %v969
      %1860 = vmatmul.mubr.bf16.gmra.mrb[0].mxu0 %v928
      %v1861 = vpop.f32.mrb[0].mxu0
      %v1862 = vadd.f32 0.0, %v1861
      %v1863 = vpop.f32.mrb[0].mxu0
      %v1864 = vpop.f32.mrb[0].mxu0
      %v1865 = vadd.f32 0.0, %v1864
      %v1866 = vpop.f32.mrb[0].mxu0
      %1867 = vmatprep.mubr.bf16.mxu0 %v977
      %1868 = vmatmul.mubr.bf16.gmra.mrb[0].mxu0 %v929
      %v1869 = vpop.f32.mrb[0].mxu0
      %v1870 = vadd.f32 0.0, %v1869
      %v1871 = vpop.f32.mrb[0].mxu0
      %v1872 = vpop.f32.mrb[0].mxu0
      %v1873 = vadd.f32 0.0, %v1872
      %v1874 = vpop.f32.mrb[0].mxu0
      %1875 = vmatprep.mubr.bf16.mxu0 %v985
      %1876 = vmatmul.mubr.bf16.gmra.mrb[0].mxu0 %v930
      %v1877 = vpop.f32.mrb[0].mxu0
      %v1878 = vadd.f32 0.0, %v1877
      %v1879 = vpop.f32.mrb[0].mxu0
      %v1880 = vpop.f32.mrb[0].mxu0
      %v1881 = vadd.f32 0.0, %v1880
      %v1882 = vpop.f32.mrb[0].mxu0
      %1883 = vmatprep.mubr.bf16.mxu0 %v988
      %1884 = vmatmul.mubr.bf16.gmra.mrb[0].mxu0 %v931
      %v1885 = vpop.f32.mrb[0].mxu0
      %v1886 = vadd.f32 0.0, %v1885
      %v1887 = vpop.f32.mrb[0].mxu0
      %v1888 = vpop.f32.mrb[0].mxu0
      %v1889 = vpop.f32.mrb[0].mxu0
      %1890 = vdwg.mxu0
      %1891 = vmatprep.subr.bf16.mxu0 0
      %1892 = vmatpush1.bf16.msra.mxu0 %v1683
      %1893 = vmatprep.subr.bf16.mxu0 0
      %1894 = vmatpush1.bf16.msra.mxu0 %v1684
      %1895 = vmatprep.subr.bf16.mxu0 0
      %1896 = vmatpush1.bf16.msra.mxu0 %v1685
      %1897 = vmatprep.subr.bf16.mxu0 0
      %1898 = vmatpush1.bf16.msra.mxu0 %v1686
      %1899 = vmatprep.subr.bf16.mxu0 0
      %1900 = vmatpush1.bf16.msra.mxu0 %v1687
      %1901 = vmatprep.subr.bf16.mxu0 0
      %1902 = vmatpush1.bf16.msra.mxu0 %v1688
      %1903 = vmatprep.subr.bf16.mxu0 0
      %1904 = vmatpush1.bf16.msra.mxu0 %v1689
      %1905 = vmatprep.subr.bf16.mxu0 0
      %1906 = vmatpush1.bf16.msra.mxu0 %v1690
      %1907 = vmatprep.subr.bf16.mxu0 0
      %1908 = vmatpush1.bf16.msra.mxu0 %v1691
      %1909 = vmatprep.subr.bf16.mxu0 0
      %1910 = vmatpush1.bf16.msra.mxu0 %v1692
      %1911 = vmatprep.subr.bf16.mxu0 0
      %1912 = vmatpush1.bf16.msra.mxu0 %v1693
      %1913 = vmatprep.subr.bf16.mxu0 0
      %1914 = vmatpush1.bf16.msra.mxu0 %v1694
      %1915 = vmatprep.subr.bf16.mxu0 0
      %1916 = vmatpush1.bf16.msra.mxu0 %v1695
      %1917 = vmatprep.subr.bf16.mxu0 0
      %1918 = vmatpush1.bf16.msra.mxu0 %v1696
      %1919 = vmatprep.subr.bf16.mxu0 0
      %1920 = vmatpush1.bf16.msra.mxu0 %v1697
      %1921 = vmatprep.subr.bf16.mxu0 0
      %1922 = vmatpush1.bf16.msra.mxu0 %v1698
      %1923 = vmatprep.mubr.bf16.mxu0 %v1045
      %1924 = vmatmul.mubr.bf16.gmra.mrb[0].mxu0 %v1001
      %v1925 = vpop.f32.mrb[0].mxu0
      %v1926 = vadd.f32 %v1846, %v1925
      %v1927 = vpop.f32.mrb[0].mxu0
      %v1928 = vpop.f32.mrb[0].mxu0
      %v1929 = vadd.f32 %v1849, %v1928
      %v1930 = vpop.f32.mrb[0].mxu0
      %1931 = vmatprep.mubr.bf16.mxu0 %v1054
      %1932 = vmatmul.mubr.bf16.gmra.mrb[0].mxu0 %v1003
      %v1933 = vpop.f32.mrb[0].mxu0
      %v1934 = vadd.f32 %v1854, %v1933
      %v1935 = vpop.f32.mrb[0].mxu0
      %v1936 = vpop.f32.mrb[0].mxu0
      %v1937 = vadd.f32 %v1857, %v1936
      %v1938 = vpop.f32.mrb[0].mxu0
      %1939 = vmatprep.mubr.bf16.mxu0 %v1063
      %1940 = vmatmul.mubr.bf16.gmra.mrb[0].mxu0 %v1005
      %v1941 = vpop.f32.mrb[0].mxu0
      %v1942 = vadd.f32 %v1862, %v1941
      %v1943 = vpop.f32.mrb[0].mxu0
      %v1944 = vpop.f32.mrb[0].mxu0
      %v1945 = vadd.f32 %v1865, %v1944
      %v1946 = vpop.f32.mrb[0].mxu0
      %1947 = vmatprep.mubr.bf16.mxu0 %v1072
      %1948 = vmatmul.mubr.bf16.gmra.mrb[0].mxu0 %v1007
      %v1949 = vpop.f32.mrb[0].mxu0
      %v1950 = vadd.f32 %v1870, %v1949
      %v1951 = vpop.f32.mrb[0].mxu0
      %v1952 = vpop.f32.mrb[0].mxu0
      %v1953 = vadd.f32 %v1873, %v1952
      %v1954 = vpop.f32.mrb[0].mxu0
      %1955 = vmatprep.mubr.bf16.mxu0 %v1081
      %1956 = vmatmul.mubr.bf16.gmra.mrb[0].mxu0 %v1009
      %v1957 = vpop.f32.mrb[0].mxu0
      %v1958 = vadd.f32 %v1878, %v1957
      %v1959 = vpop.f32.mrb[0].mxu0
      %v1960 = vpop.f32.mrb[0].mxu0
      %v1961 = vadd.f32 %v1881, %v1960
      %v1962 = vpop.f32.mrb[0].mxu0
      %1963 = vmatprep.mubr.bf16.mxu0 %v1080
      %1964 = vmatmul.mubr.bf16.gmra.mrb[0].mxu0 %v1008
      %v1965 = vpop.f32.mrb[0].mxu0
      %v1966 = vadd.f32 %v1886, %v1965
      %v1967 = vpop.f32.mrb[0].mxu0
      %v1968 = vpop.f32.mrb[0].mxu0
      %v1969 = vpop.f32.mrb[0].mxu0
      %1970 = vdwg.mxu0
      %1971 = vmatprep.subr.bf16.mxu0 0
      %1972 = vmatpush1.bf16.msra.mxu0 %v1699
      %1973 = vmatprep.subr.bf16.mxu0 0
      %1974 = vmatpush1.bf16.msra.mxu0 %v1700
      %1975 = vmatprep.subr.bf16.mxu0 0
      %1976 = vmatpush1.bf16.msra.mxu0 %v1701
      %1977 = vmatprep.subr.bf16.mxu0 0
      %1978 = vmatpush1.bf16.msra.mxu0 %v1702
      %1979 = vmatprep.subr.bf16.mxu0 0
      %1980 = vmatpush1.bf16.msra.mxu0 %v1703
      %1981 = vmatprep.subr.bf16.mxu0 0
      %1982 = vmatpush1.bf16.msra.mxu0 %v1704
      %1983 = vmatprep.subr.bf16.mxu0 0
      %1984 = vmatpush1.bf16.msra.mxu0 %v1705
      %1985 = vmatprep.subr.bf16.mxu0 0
      %1986 = vmatpush1.bf16.msra.mxu0 %v1706
      %1987 = vmatprep.subr.bf16.mxu0 0
      %1988 = vmatpush1.bf16.msra.mxu0 %v1707
      %1989 = vmatprep.subr.bf16.mxu0 0
      %1990 = vmatpush1.bf16.msra.mxu0 %v1708
      %1991 = vmatprep.subr.bf16.mxu0 0
      %1992 = vmatpush1.bf16.msra.mxu0 %v1709
      %1993 = vmatprep.subr.bf16.mxu0 0
      %1994 = vmatpush1.bf16.msra.mxu0 %v1710
      %1995 = vmatprep.subr.bf16.mxu0 0
      %1996 = vmatpush1.bf16.msra.mxu0 %v1711
      %1997 = vmatprep.subr.bf16.mxu0 0
      %1998 = vmatpush1.bf16.msra.mxu0 %v1712
      %1999 = vmatprep.subr.bf16.mxu0 0
      %2000 = vmatpush1.bf16.msra.mxu0 %v1713
      %2001 = vmatprep.subr.bf16.mxu0 0
      %2002 = vmatpush1.bf16.msra.mxu0 %v1714
      %2003 = vmatprep.mubr.bf16.mxu0 %v1124
      %2004 = vmatmul.mubr.bf16.gmra.mrb[0].mxu0 %v1094
      %v2005 = vpop.f32.mrb[0].mxu0
      %v2006 = vadd.f32 %v1926, %v2005
      %v2007 = vpop.f32.mrb[0].mxu0
      %v2008 = vpop.f32.mrb[0].mxu0
      %v2009 = vadd.f32 %v1929, %v2008
      %v2010 = vpop.f32.mrb[0].mxu0
      %2011 = vmatprep.mubr.bf16.mxu0 %v1128
      %2012 = vmatmul.mubr.bf16.gmra.mrb[0].mxu0 %v1096
      %v2013 = vpop.f32.mrb[0].mxu0
      %v2014 = vadd.f32 %v1934, %v2013
      %v2015 = vpop.f32.mrb[0].mxu0
      %v2016 = vpop.f32.mrb[0].mxu0
      %v2017 = vadd.f32 %v1937, %v2016
      %v2018 = vpop.f32.mrb[0].mxu0
      %2019 = vmatprep.mubr.bf16.mxu0 %v1132
      %2020 = vmatmul.mubr.bf16.gmra.mrb[0].mxu0 %v1098
      %v2021 = vpop.f32.mrb[0].mxu0
      %v2022 = vadd.f32 %v1942, %v2021
      %v2023 = vpop.f32.mrb[0].mxu0
      %v2024 = vpop.f32.mrb[0].mxu0
      %v2025 = vadd.f32 %v1945, %v2024
      %v2026 = vpop.f32.mrb[0].mxu0
      %2027 = vmatprep.mubr.bf16.mxu0 %v1136
      %2028 = vmatmul.mubr.bf16.gmra.mrb[0].mxu0 %v1100
      %v2029 = vpop.f32.mrb[0].mxu0
      %v2030 = vadd.f32 %v1950, %v2029
      %v2031 = vpop.f32.mrb[0].mxu0
      %v2032 = vpop.f32.mrb[0].mxu0
      %v2033 = vadd.f32 %v1953, %v2032
      %v2034 = vpop.f32.mrb[0].mxu0
      %2035 = vmatprep.mubr.bf16.mxu0 %v1145
      %2036 = vmatmul.mubr.bf16.gmra.mrb[0].mxu0 %v1102
      %v2037 = vpop.f32.mrb[0].mxu0
      %v2038 = vadd.f32 %v1958, %v2037
      %v2039 = vpop.f32.mrb[0].mxu0
      %v2040 = vpop.f32.mrb[0].mxu0
      %v2041 = vadd.f32 %v1961, %v2040
      %v2042 = vpop.f32.mrb[0].mxu0
      %2043 = vmatprep.mubr.bf16.mxu0 %v1144
      %2044 = vmatmul.mubr.bf16.gmra.mrb[0].mxu0 %v1101
      %v2045 = vpop.f32.mrb[0].mxu0
      %v2046 = vadd.f32 %v1966, %v2045
      %v2047 = vpop.f32.mrb[0].mxu0
      %v2048 = vpop.f32.mrb[0].mxu0
      %v2049 = vpop.f32.mrb[0].mxu0
      %2050 = vdwg.mxu0
      %2051 = vmatprep.subr.bf16.mxu0 0
      %2052 = vmatpush1.bf16.msra.mxu0 %v1715
      %2053 = vmatprep.subr.bf16.mxu0 0
      %2054 = vmatpush1.bf16.msra.mxu0 %v1716
      %2055 = vmatprep.subr.bf16.mxu0 0
      %2056 = vmatpush1.bf16.msra.mxu0 %v1717
      %2057 = vmatprep.subr.bf16.mxu0 0
      %2058 = vmatpush1.bf16.msra.mxu0 %v1718
      %2059 = vmatprep.subr.bf16.mxu0 0
      %2060 = vmatpush1.bf16.msra.mxu0 %v1719
      %2061 = vmatprep.subr.bf16.mxu0 0
      %2062 = vmatpush1.bf16.msra.mxu0 %v1720
      %2063 = vmatprep.subr.bf16.mxu0 0
      %2064 = vmatpush1.bf16.msra.mxu0 %v1721
      %2065 = vmatprep.subr.bf16.mxu0 0
      %2066 = vmatpush1.bf16.msra.mxu0 %v1722
      %2067 = vmatprep.subr.bf16.mxu0 0
      %2068 = vmatpush1.bf16.msra.mxu0 %v1723
      %2069 = vmatprep.subr.bf16.mxu0 0
      %2070 = vmatpush1.bf16.msra.mxu0 %v1724
      %2071 = vmatprep.subr.bf16.mxu0 0
      %2072 = vmatpush1.bf16.msra.mxu0 %v1725
      %2073 = vmatprep.subr.bf16.mxu0 0
      %2074 = vmatpush1.bf16.msra.mxu0 %v1726
      %2075 = vmatprep.subr.bf16.mxu0 0
      %2076 = vmatpush1.bf16.msra.mxu0 %v1727
      %2077 = vmatprep.subr.bf16.mxu0 0
      %2078 = vmatpush1.bf16.msra.mxu0 %v1728
      %2079 = vmatprep.subr.bf16.mxu0 0
      %2080 = vmatpush1.bf16.msra.mxu0 %v1729
      %2081 = vmatprep.subr.bf16.mxu0 0
      %2082 = vmatpush1.bf16.msra.mxu0 %v1730
      %2083 = vmatprep.mubr.bf16.mxu0 %v1194
      %2084 = vmatmul.mubr.bf16.gmra.mrb[0].mxu0 %v1164
      %v2085 = vpop.f32.mrb[0].mxu0
      %v2086 = vadd.f32 %v2006, %v2085
      %v2087 = vpop.f32.mrb[0].mxu0
      %v2088 = vpop.f32.mrb[0].mxu0
      %v2089 = vadd.f32 %v2009, %v2088
      %v2090 = vpop.f32.mrb[0].mxu0
      %2091 = vmatprep.mubr.bf16.mxu0 %v1198
      %2092 = vmatmul.mubr.bf16.gmra.mrb[0].mxu0 %v1166
      %v2093 = vpop.f32.mrb[0].mxu0
      %v2094 = vadd.f32 %v2014, %v2093
      %v2095 = vpop.f32.mrb[0].mxu0
      %v2096 = vpop.f32.mrb[0].mxu0
      %v2097 = vadd.f32 %v2017, %v2096
      %v2098 = vpop.f32.mrb[0].mxu0
      %2099 = vmatprep.mubr.bf16.mxu0 %v1202
      %2100 = vmatmul.mubr.bf16.gmra.mrb[0].mxu0 %v1168
      %v2101 = vpop.f32.mrb[0].mxu0
      %v2102 = vadd.f32 %v2022, %v2101
      %v2103 = vpop.f32.mrb[0].mxu0
      %v2104 = vpop.f32.mrb[0].mxu0
      %v2105 = vadd.f32 %v2025, %v2104
      %v2106 = vpop.f32.mrb[0].mxu0
      %2107 = vmatprep.mubr.bf16.mxu0 %v1211
      %2108 = vmatmul.mubr.bf16.gmra.mrb[0].mxu0 %v1170
      %v2109 = vpop.f32.mrb[0].mxu0
      %v2110 = vadd.f32 %v2030, %v2109
      %v2111 = vpop.f32.mrb[0].mxu0
      %v2112 = vpop.f32.mrb[0].mxu0
      %v2113 = vadd.f32 %v2033, %v2112
      %v2114 = vpop.f32.mrb[0].mxu0
      %2115 = vmatprep.mubr.bf16.mxu0 %v1220
      %2116 = vmatmul.mubr.bf16.gmra.mrb[0].mxu0 %v1172
      %v2117 = vpop.f32.mrb[0].mxu0
      %v2118 = vadd.f32 %v2038, %v2117
      %v2119 = vpop.f32.mrb[0].mxu0
      %v2120 = vpop.f32.mrb[0].mxu0
      %v2121 = vadd.f32 %v2041, %v2120
      %v2122 = vpop.f32.mrb[0].mxu0
      %2123 = vmatprep.mubr.bf16.mxu0 %v1219
      %2124 = vmatmul.mubr.bf16.gmra.mrb[0].mxu0 %v1171
      %v2125 = vpop.f32.mrb[0].mxu0
      %v2126 = vadd.f32 %v2046, %v2125
      %v2127 = vpop.f32.mrb[0].mxu0
      %v2128 = vpop.f32.mrb[0].mxu0
      %v2129 = vpop.f32.mrb[0].mxu0
      %2130 = vdwg.mxu0
      %2131 = vmatprep.subr.bf16.mxu0 0
      %2132 = vmatpush1.bf16.msra.mxu0 %v1731
      %2133 = vmatprep.subr.bf16.mxu0 0
      %2134 = vmatpush1.bf16.msra.mxu0 %v1732
      %2135 = vmatprep.subr.bf16.mxu0 0
      %2136 = vmatpush1.bf16.msra.mxu0 %v1733
      %2137 = vmatprep.subr.bf16.mxu0 0
      %2138 = vmatpush1.bf16.msra.mxu0 %v1734
      %2139 = vmatprep.subr.bf16.mxu0 0
      %2140 = vmatpush1.bf16.msra.mxu0 %v1735
      %2141 = vmatprep.subr.bf16.mxu0 0
      %2142 = vmatpush1.bf16.msra.mxu0 %v1736
      %2143 = vmatprep.subr.bf16.mxu0 0
      %2144 = vmatpush1.bf16.msra.mxu0 %v1737
      %2145 = vmatprep.subr.bf16.mxu0 0
      %2146 = vmatpush1.bf16.msra.mxu0 %v1738
      %2147 = vmatprep.subr.bf16.mxu0 0
      %2148 = vmatpush1.bf16.msra.mxu0 0
      %2149 = vmatprep.subr.bf16.mxu0 0
      %2150 = vmatpush1.bf16.msra.mxu0 0
      %2151 = vmatprep.subr.bf16.mxu0 0
      %2152 = vmatpush1.bf16.msra.mxu0 0
      %2153 = vmatprep.subr.bf16.mxu0 0
      %2154 = vmatpush1.bf16.msra.mxu0 0
      %2155 = vmatprep.subr.bf16.mxu0 0
      %2156 = vmatpush1.bf16.msra.mxu0 0
      %2157 = vmatprep.subr.bf16.mxu0 0
      %2158 = vmatpush1.bf16.msra.mxu0 0
      %2159 = vmatprep.subr.bf16.mxu0 0
      %2160 = vmatpush1.bf16.msra.mxu0 0
      %2161 = vmatprep.subr.bf16.mxu0 0
      %2162 = vmatpush1.bf16.msra.mxu0 0
      %2163 = vmatprep.mubr.bf16.mxu0 0
      %2164 = vmatmul.mubr.bf16.gmra.mrb[0].mxu0 %v1023
      %v2165 = vpop.f32.mrb[0].mxu0
      %v2166 = vadd.f32 %v2086, %v2165
      %v2167 = vpop.f32.mrb[0].mxu0
      %v2168 = vpop.f32.mrb[0].mxu0
      %v2169 = vadd.f32 %v2089, %v2168
      %v2170 = vpop.f32.mrb[0].mxu0
      %2171 = vmatprep.mubr.bf16.mxu0 0
      %2172 = vmatmul.mubr.bf16.gmra.mrb[0].mxu0 %v1024
      %v2173 = vpop.f32.mrb[0].mxu0
      %v2174 = vadd.f32 %v2094, %v2173
      %v2175 = vpop.f32.mrb[0].mxu0
      %v2176 = vpop.f32.mrb[0].mxu0
      %v2177 = vadd.f32 %v2097, %v2176
      %v2178 = vpop.f32.mrb[0].mxu0
      %2179 = vmatprep.mubr.bf16.mxu0 0
      %2180 = vmatmul.mubr.bf16.gmra.mrb[0].mxu0 %v1025
      %v2181 = vpop.f32.mrb[0].mxu0
      %v2182 = vadd.f32 %v2102, %v2181
      %v2183 = vpop.f32.mrb[0].mxu0
      %v2184 = vpop.f32.mrb[0].mxu0
      %v2185 = vadd.f32 %v2105, %v2184
      %v2186 = vpop.f32.mrb[0].mxu0
      %2187 = vmatprep.mubr.bf16.mxu0 0
      %2188 = vmatmul.mubr.bf16.gmra.mrb[0].mxu0 %v1026
      %v2189 = vpop.f32.mrb[0].mxu0
      %v2190 = vadd.f32 %v2110, %v2189
      %v2191 = vpop.f32.mrb[0].mxu0
      %v2192 = vpop.f32.mrb[0].mxu0
      %v2193 = vadd.f32 %v2113, %v2192
      %v2194 = vpop.f32.mrb[0].mxu0
      %2195 = vmatprep.mubr.bf16.mxu0 0
      %2196 = vmatmul.mubr.bf16.gmra.mrb[0].mxu0 %v1227
      %v2197 = vpop.f32.mrb[0].mxu0
      %v2198 = vadd.f32 %v2118, %v2197
      %v2199 = vpop.f32.mrb[0].mxu0
      %v2200 = vpop.f32.mrb[0].mxu0
      %v2201 = vadd.f32 %v2121, %v2200
      %v2202 = vpop.f32.mrb[0].mxu0
      %2203 = vmatprep.mubr.bf16.mxu0 0
      %2204 = vmatmul.mubr.bf16.gmra.mrb[0].mxu0 %v1228
      %v2205 = vpop.f32.mrb[0].mxu0
      %v2206 = vadd.f32 %v2126, %v2205
      %v2207 = vpop.f32.mrb[0].mxu0
      %v2208 = vpop.f32.mrb[0].mxu0
      %v2209 = vpop.f32.mrb[0].mxu0
      %2210 = vdwg.mxu0
      %vm2211 = vcmp.lt.s32.totalorder %v621, 8
      %vm2212 = vcmp.lt.s32.totalorder %v622, 8
      %vm2213 = vcmp.lt.s32.totalorder %v623, 8
      %vm2214 = vcmp.lt.s32.totalorder %v624, 8
      %vm2215 = vcmp.lt.s32.totalorder %v625, 8
      %vm2216 = vcmp.lt.s32.totalorder %v626, 8
      %vm2217 = vcmp.lt.s32.totalorder %v627, 8
      %vm2218 = vcmp.lt.s32.totalorder %v628, 8
      %vm2219 = vcmp.lt.s32.totalorder %v629, 8
      %vm2220 = vcmp.lt.s32.totalorder %v630, 8
      %vm2221 = vcmp.lt.s32.totalorder %v631, 8
      %v2222 = vsel %vm2211, 1, 0
      %v2223 = vsel %vm2212, 1, 0
      %v2224 = vsel %vm2213, 1, 0
      %v2225 = vsel %vm2214, 1, 0
      %v2226 = vsel %vm2215, 1, 0
      %v2227 = vsel %vm2216, 1, 0
      %v2228 = vsel %vm2217, 1, 0
      %v2229 = vsel %vm2218, 1, 0
      %v2230 = vsel %vm2219, 1, 0
      %v2231 = vsel %vm2220, 1, 0
      %v2232 = vsel %vm2221, 1, 0
      %vm2233 = vcmp.eq.s32.totalorder %v2222, 1
      %vm2234 = vcmp.eq.s32.totalorder %v2223, 1
      %vm2235 = vcmp.eq.s32.totalorder %v2224, 1
      %vm2236 = vcmp.eq.s32.totalorder %v2225, 1
      %vm2237 = vcmp.eq.s32.totalorder %v2226, 1
      %vm2238 = vcmp.eq.s32.totalorder %v2227, 1
      %vm2239 = vcmp.eq.s32.totalorder %v2228, 1
      %vm2240 = vcmp.eq.s32.totalorder %v2229, 1
      %vm2241 = vcmp.eq.s32.totalorder %v2230, 1
      %vm2242 = vcmp.eq.s32.totalorder %v2231, 1
      %vm2243 = vcmp.eq.s32.totalorder %v2232, 1
      %v2244 = vsel %vm2233, %v2166, 0.0
      %v2245 = vsel %vm2234, %v2169, 0.0
      %v2246 = vsel %vm2235, %v2174, 0.0
      %v2247 = vsel %vm2236, %v2177, 0.0
      %v2248 = vsel %vm2237, %v2182, 0.0
      %v2249 = vsel %vm2238, %v2185, 0.0
      %v2250 = vsel %vm2239, %v2190, 0.0
      %v2251 = vsel %vm2240, %v2193, 0.0
      %v2252 = vsel %vm2241, %v2198, 0.0
      %v2253 = vsel %vm2242, %v2201, 0.0
      %v2254 = vsel %vm2243, %v2206, 0.0
      %v2255 = vpack.c.bf16 %v2245, %v2244
      %v2256 = vpack.c.bf16 %v2247, %v2246
      %v2257 = vpack.c.bf16 %v2249, %v2248
      %v2258 = vpack.c.bf16 %v2251, %v2250
      %v2259 = vpack.c.bf16 %v2253, %v2252
      %v2260 = vpack.c.bf16 %v2254, %v2254
      %v2267 = vunpack.c.l.b16 %v2255
      %v2268 = vunpack.c.h.b16 %v2255
      %v2269 = vunpack.c.l.b16 %v2256
      %v2270 = vunpack.c.h.b16 %v2256
      %v2271 = vunpack.c.l.b16 %v2257
      %v2272 = vunpack.c.h.b16 %v2257
      %v2273 = vunpack.c.l.b16 %v2258
      %v2274 = vunpack.c.h.b16 %v2258
      %v2275 = vunpack.c.l.b16 %v2259
      %v2276 = vunpack.c.h.b16 %v2259
      %v2277 = vunpack.c.l.b16 %v2260
      %v2278 = vpack.c.b16 %v2267, %v2267
      %v2279 = vpack.c.b16 %v2268, %v2268
      %v2280 = vpack.c.b16 %v2269, %v2269
      %v2281 = vpack.c.b16 %v2270, %v2270
      %v2282 = vpack.c.b16 %v2271, %v2271
      %v2283 = vpack.c.b16 %v2272, %v2272
      %v2284 = vpack.c.b16 %v2273, %v2273
      %v2285 = vpack.c.b16 %v2274, %v2274
      %v2286 = vpack.c.b16 %v2275, %v2275
      %v2287 = vpack.c.b16 %v2276, %v2276
      %v2288 = vpack.c.b16 %v2277, %v2277
      %2300 = vst [vmem:[%s262] sm:$0xf] %v2278
      %2301 = vst [vmem:[%s262 + $0x4] sm:$0xf] %v2279
      %2302 = vst [vmem:[%s262 + $0x8] sm:$0xf] %v2280
      %2303 = vst [vmem:[%s262 + $0xc] sm:$0xf] %v2281
      %2304 = vst [vmem:[%s262 + $0x10] sm:$0xf] %v2282
      %2305 = vst [vmem:[%s262 + $0x14] sm:$0xf] %v2283
      %2306 = vst [vmem:[%s262 + $0x18] sm:$0xf] %v2284
      %2307 = vst [vmem:[%s262 + $0x1c] sm:$0xf] %v2285
      %2308 = vst [vmem:[%s262 + $0x20] sm:$0xf] %v2286
      %2309 = vst [vmem:[%s262 + $0x24] sm:$0xf] %v2287
      %2310 = vst [vmem:[%s262 + $0x28] sm:$0xf] %v2288
      %v2311 = vadd.f32 %v2244, %v2245
      %v2312 = vadd.f32 %v2311, %v2246
      %v2313 = vadd.f32 %v2312, %v2247
      %v2314 = vadd.f32 %v2313, %v2248
      %v2315 = vadd.f32 %v2314, %v2249
      %v2316 = vadd.f32 %v2315, %v2250
      %v2317 = vadd.f32 %v2316, %v2251
      %v2318 = vadd.f32 %v2317, %v2252
      %v2319 = vadd.f32 %v2318, %v2253
      %v2320 = vadd.f32 %v2319, %v2254
      %v2321 = vrot.slane %v2320, 4
      %v2322 = vadd.f32 %v2320, %v2321
      %v2323 = vrot.slane %v2322, 2
      %v2324 = vadd.f32 %v2322, %v2323
      %v2325 = vrot.slane %v2324, 1
      %v2326 = vadd.f32 %v2324, %v2325
      %2327 = vst [vmem:[%s265] sm:$0x1] %v2326
      %v2328 = vmul.f32 %v2244, %v2244
      %v2329 = vmul.f32 %v2245, %v2245
      %v2330 = vmul.f32 %v2246, %v2246
      %v2331 = vmul.f32 %v2247, %v2247
      %v2332 = vmul.f32 %v2248, %v2248
      %v2333 = vmul.f32 %v2249, %v2249
      %v2334 = vmul.f32 %v2250, %v2250
      %v2335 = vmul.f32 %v2251, %v2251
      %v2336 = vmul.f32 %v2252, %v2252
      %v2337 = vmul.f32 %v2253, %v2253
      %v2338 = vmul.f32 %v2254, %v2254
      %v2339 = vadd.f32 %v2328, %v2329
      %v2340 = vadd.f32 %v2339, %v2330
      %v2341 = vadd.f32 %v2340, %v2331
      %v2342 = vadd.f32 %v2341, %v2332
      %v2343 = vadd.f32 %v2342, %v2333
      %v2344 = vadd.f32 %v2343, %v2334
      %v2345 = vadd.f32 %v2344, %v2335
      %v2346 = vadd.f32 %v2345, %v2336
      %v2347 = vadd.f32 %v2346, %v2337
      %v2348 = vadd.f32 %v2347, %v2338
      %v2349 = vrot.slane %v2348, 4
      %v2350 = vadd.f32 %v2348, %v2349
      %v2351 = vrot.slane %v2350, 2
      %v2352 = vadd.f32 %v2350, %v2351
      %v2353 = vrot.slane %v2352, 1
      %v2354 = vadd.f32 %v2352, %v2353
      %2355 = vst [vmem:[%s268] sm:$0x1] %v2354
      %p2356 = scmp.lt.s32.totalorder %s18, 1
      %s2357 = scalar_select %p2356, %s18, 1
      %s2358 = smul.addr %s2357, 11
      %s2359 = smul.addr %s2358, 4
      %s2360 = scalar_lea.vmem %s4, %s2359
      %p2361 = scmp.lt.s32.totalorder %s18, 1
      %s2362 = scalar_select %p2361, %s18, 1
      %s2363 = scalar_lea.vmem %s5, %s2362
      %p2364 = scmp.lt.s32.totalorder %s18, 1
      %s2365 = scalar_select %p2364, %s18, 1
      %s2366 = scalar_lea.vmem %s6, %s2365
      // Predicated region
      $region37: #{basic_block_forward.4} parent=35 // pred_check
        %p2367 = pneg %p125
      $region38: #{basic_block_forward.4} parent=35 // pred_check_branch
        %2369 = sbr.rel (%p2367) target = $region40
      $region39: #{basic_block_forward.4} parent=35 // pred_region
        _
      $region40: #{basic_block_forward.4} parent=35 // pred_fallthru
        _
      // Predicated region
      $region41: #{basic_block_forward.4} parent=35 // pred_check
        %p2370 = pneg %p151
      $region42: #{basic_block_forward.4} parent=35 // pred_check_branch
        %2372 = sbr.rel (%p2370) target = $region44
      $region43: #{basic_block_forward.4} parent=35 // pred_region
        _
      $region44: #{basic_block_forward.4} parent=35 // pred_fallthru
        _
      // Predicated region
      $region45: #{basic_block_forward.4} parent=35 // pred_check
        %p2373 = pneg %p177
      $region46: #{basic_block_forward.4} parent=35 // pred_check_branch
        %2375 = sbr.rel (%p2373) target = $region48
      $region47: #{basic_block_forward.4} parent=35 // pred_region
        _
      $region48: #{basic_block_forward.4} parent=35 // pred_fallthru
        _
    $region36: #{basic_block_forward.4} parent=5 // pred_fallthru
      _
    %p2376 = scmp.le.s32.totalorder 2, %s13
    // Predicated region
    $region49: #{basic_block_forward.4} parent=5 // pred_check
      %p2377 = pneg %p2376
    $region50: #{basic_block_forward.4} parent=5 // pred_check_branch
      %2379 = sbr.rel (%p2377) target = $region52
    $region51: #{basic_block_forward.4} parent=5 // pred_region
      %s2380 = ssub.s32 %s13, 2
      // Predicated region
      $region53: #{basic_block_forward.4} parent=51 // pred_check
        %p2381 = pneg %p131
      $region54: #{basic_block_forward.4} parent=51 // pred_check_branch
        %2383 = sbr.rel (%p2381) target = $region56
      $region55: #{basic_block_forward.4} parent=51 // pred_region
        %p2384 = scmp.lt.s32.totalorder %s19, 1
        %s2385 = scalar_select %p2384, %s19, 1
        %s2386 = smul.addr %s2385, 11
        %s2387 = smul.addr %s2386, 4
        %s2388 = scalar_lea.vmem %s4, %s2387
      $region56: #{basic_block_forward.4} parent=51 // pred_fallthru
        _
      // Predicated region
      $region57: #{basic_block_forward.4} parent=51 // pred_check
        %p2389 = pneg %p157
      $region58: #{basic_block_forward.4} parent=51 // pred_check_branch
        %2391 = sbr.rel (%p2389) target = $region60
      $region59: #{basic_block_forward.4} parent=51 // pred_region
        %p2392 = scmp.lt.s32.totalorder %s19, 1
        %s2393 = scalar_select %p2392, %s19, 1
        %s2394 = scalar_lea.vmem %s5, %s2393
      $region60: #{basic_block_forward.4} parent=51 // pred_fallthru
        _
      // Predicated region
      $region61: #{basic_block_forward.4} parent=51 // pred_check
        %p2395 = pneg %p183
      $region62: #{basic_block_forward.4} parent=51 // pred_check_branch
        %2397 = sbr.rel (%p2395) target = $region64
      $region63: #{basic_block_forward.4} parent=51 // pred_region
        %p2398 = scmp.lt.s32.totalorder %s19, 1
        %s2399 = scalar_select %p2398, %s19, 1
        %s2400 = scalar_lea.vmem %s6, %s2399
      $region64: #{basic_block_forward.4} parent=51 // pred_fallthru
        _
    $region52: #{basic_block_forward.4} parent=5 // pred_fallthru
      _
  $region6: #{basic_block_forward.4} parent=0 // loop_footer
    %s17 = sadd.s32 1, %s13
  $region7: #{basic_block_forward.4} parent=0 // loop_footer_branch
    %12 = sbr.rel target = $region3
  $region8: #{basic_block_forward.4} parent=0 // loop_exit
    _

// kernel: basic_block_forward.3
$region0: #{basic_block_forward.3}
  #allocation0 [shape = 'u32[]', space=smem, size = 0x4, offset = 0x4, fixed_abs, tag = 'smem constant byte address 0x4 - core index']
  #allocation1 [shape = 'u32[144,128]{1,0:T(1,128)}', space=vmem, size = 0x12000, scoped, tag = 'internal scratch']
  %s0 = inlined_call_operand.vmem [shape: bf16[2,4,143,128], index: 0, kind: input, shape index: {}]
  %s1 = inlined_call_operand.vmem [shape: bf16[1152,128], index: 1, kind: input, shape index: {}]
  %s2 = inlined_call_operand.vmem [shape: bf16[128,128], index: 2, kind: input, shape index: {}]
  %s3 = inlined_call_operand.vmem [shape: bf16[2,121,128], index: 3, kind: output, shape index: {0}]
  %s4 = inlined_call_operand.vmem [shape: f32[2,1,128], index: 4, kind: output, shape index: {1}]
  %s5 = inlined_call_operand.vmem [shape: f32[2,1,128], index: 5, kind: output, shape index: {2}]
  %s6 = inlined_call_operand.vmem [shape: bf16[2,88,128], index: 6, kind: output, shape index: {3}]
  %s7 = inlined_call_operand.vmem [shape: f32[2,1,128], index: 7, kind: output, shape index: {4}]
  %s8 = inlined_call_operand.vmem [shape: f32[2,1,128], index: 8, kind: output, shape index: {5}]
  %9 = xla_tuple %s3, %s4, %s5, %s6, %s7, %s8
  %s10 = sld [smem:[#allocation0]]
  $region85: #{basic_block_forward.3} parent=0
    _
  %s12 = ssub.s32 1, %s10
  %s13 = scalar_select 0, %s12, %s10
  loop: start=0, step=1, limit=4
  $region2: #{basic_block_forward.3} parent=0 // loop_pre_header
    _
  $region3: #{basic_block_forward.3} parent=0 // loop_header
    %s15 = sphi 0, %s19
    %p16 = scmp.ge.s32.totalorder %s15, 4
    %s25 = sphi 0, %s27
    %s28 = sphi 0, %s25
    %s29 = sphi 0, %s28
    %s45 = sphi 0, %s29
    %s49 = sphi 0, %s49
    %s51 = sphi 0, %s49
    %s52 = sphi 0, %s51
    %s66 = sphi 0, %s52
    %s70 = sphi 0, %s70
    %s72 = sphi 0, %s70
    %s73 = sphi 0, %s72
    %s87 = sphi 0, %s73
    %s93 = sphi 0, %s95
    %s96 = sphi 0, %s93
    %s97 = sphi 0, %s96
    %s113 = sphi 0, %s97
    %s119 = sphi 0, %s121
    %s122 = sphi 0, %s119
    %s123 = sphi 0, %s122
    %s139 = sphi 0, %s123
    %s145 = sphi 0, %s147
    %s148 = sphi 0, %s145
    %s149 = sphi 0, %s148
    %s165 = sphi 0, %s149
    %s171 = sphi 0, %s173
    %s174 = sphi 0, %s171
    %s175 = sphi 0, %s174
    %s191 = sphi 0, %s175
    %s197 = sphi 0, %s199
    %s200 = sphi 0, %s197
    %s201 = sphi 0, %s200
    %s217 = sphi 0, %s201
    %s223 = sphi 0, %s225
    %s226 = sphi 0, %s223
    %s227 = sphi 0, %s226
    %s243 = sphi 0, %s227
  $region4: #{basic_block_forward.3} parent=0 // loop_header_branch
    %18 = sbr.rel (%p16) target = $region8
  $region5: #{basic_block_forward.3} parent=0 // loop_body
    %s20 = ssub.s32 %s15, 1
    %s21 = ssub.s32 %s15, 2
    %s22 = sadd.s32 %s15, 1
    %s23 = ssub.s32 %s15, %s22
    %p24 = scmp.eq.s32.totalorder %s23, 0
    %s26 = sadd.s32 %s25, 1
    %s27 = scalar_select %p24, %s25, %s26
    %p30 = pneg %p24
    %p31 = scmp.eq.s32.totalorder %s15, 1
    %p32 = por %p30, %p31
    %p33 = scmp.ne.s32.totalorder %s25, %s28
    %p34 = scmp.eq.s32.totalorder %s15, 0
    %p35 = por %p33, %p34
    %p36 = scmp.ne.s32.totalorder %s25, %s28
    %p37 = scmp.eq.s32.totalorder %s20, 1
    %p38 = por %p36, %p37
    %p39 = scmp.ne.s32.totalorder %s28, %s29
    %p40 = scmp.eq.s32.totalorder %s20, 0
    %p41 = por %p39, %p40
    %p42 = scmp.ne.s32.totalorder %s28, %s29
    %p43 = scmp.eq.s32.totalorder %s21, 1
    %p44 = por %p42, %p43
    %p46 = scmp.ne.s32.totalorder %s29, %s45
    %p47 = scmp.eq.s32.totalorder %s21, 0
    %p48 = por %p46, %p47
    %s50 = sadd.s32 %s49, 1
    %p53 = scmp.eq.s32.totalorder %s15, 1
    %p54 = scmp.ne.s32.totalorder %s49, %s51
    %p55 = scmp.eq.s32.totalorder %s15, 0
    %p56 = por %p54, %p55
    %p57 = scmp.ne.s32.totalorder %s49, %s51
    %p58 = scmp.eq.s32.totalorder %s20, 1
    %p59 = por %p57, %p58
    %p60 = scmp.ne.s32.totalorder %s51, %s52
    %p61 = scmp.eq.s32.totalorder %s20, 0
    %p62 = por %p60, %p61
    %p63 = scmp.ne.s32.totalorder %s51, %s52
    %p64 = scmp.eq.s32.totalorder %s21, 1
    %p65 = por %p63, %p64
    %p67 = scmp.ne.s32.totalorder %s52, %s66
    %p68 = scmp.eq.s32.totalorder %s21, 0
    %p69 = por %p67, %p68
    %s71 = sadd.s32 %s70, 1
    %p74 = scmp.eq.s32.totalorder %s15, 1
    %p75 = scmp.ne.s32.totalorder %s70, %s72
    %p76 = scmp.eq.s32.totalorder %s15, 0
    %p77 = por %p75, %p76
    %p78 = scmp.ne.s32.totalorder %s70, %s72
    %p79 = scmp.eq.s32.totalorder %s20, 1
    %p80 = por %p78, %p79
    %p81 = scmp.ne.s32.totalorder %s72, %s73
    %p82 = scmp.eq.s32.totalorder %s20, 0
    %p83 = por %p81, %p82
    %p84 = scmp.ne.s32.totalorder %s72, %s73
    %p85 = scmp.eq.s32.totalorder %s21, 1
    %p86 = por %p84, %p85
    %p88 = scmp.ne.s32.totalorder %s73, %s87
    %p89 = scmp.eq.s32.totalorder %s21, 0
    %p90 = por %p88, %p89
    %s91 = ssub.s32 %s15, %s22
    %p92 = scmp.eq.s32.totalorder %s91, 0
    %s94 = sadd.s32 %s93, 1
    %s95 = scalar_select %p92, %s93, %s94
    %p98 = pneg %p92
    %p99 = scmp.eq.s32.totalorder %s15, 1
    %p100 = por %p98, %p99
    %p101 = scmp.ne.s32.totalorder %s93, %s96
    %p102 = scmp.eq.s32.totalorder %s15, 0
    %p103 = por %p101, %p102
    %p104 = scmp.ne.s32.totalorder %s93, %s96
    %p105 = scmp.eq.s32.totalorder %s20, 1
    %p106 = por %p104, %p105
    %p107 = scmp.ne.s32.totalorder %s96, %s97
    %p108 = scmp.eq.s32.totalorder %s20, 0
    %p109 = por %p107, %p108
    %p110 = scmp.ne.s32.totalorder %s96, %s97
    %p111 = scmp.eq.s32.totalorder %s21, 1
    %p112 = por %p110, %p111
    %p114 = scmp.ne.s32.totalorder %s97, %s113
    %p115 = scmp.eq.s32.totalorder %s21, 0
    %p116 = por %p114, %p115
    %s117 = ssub.s32 %s15, %s22
    %p118 = scmp.eq.s32.totalorder %s117, 0
    %s120 = sadd.s32 %s119, 1
    %s121 = scalar_select %p118, %s119, %s120
    %p124 = pneg %p118
    %p125 = scmp.eq.s32.totalorder %s15, 1
    %p126 = por %p124, %p125
    %p127 = scmp.ne.s32.totalorder %s119, %s122
    %p128 = scmp.eq.s32.totalorder %s15, 0
    %p129 = por %p127, %p128
    %p130 = scmp.ne.s32.totalorder %s119, %s122
    %p131 = scmp.eq.s32.totalorder %s20, 1
    %p132 = por %p130, %p131
    %p133 = scmp.ne.s32.totalorder %s122, %s123
    %p134 = scmp.eq.s32.totalorder %s20, 0
    %p135 = por %p133, %p134
    %p136 = scmp.ne.s32.totalorder %s122, %s123
    %p137 = scmp.eq.s32.totalorder %s21, 1
    %p138 = por %p136, %p137
    %p140 = scmp.ne.s32.totalorder %s123, %s139
    %p141 = scmp.eq.s32.totalorder %s21, 0
    %p142 = por %p140, %p141
    %s143 = ssub.s32 %s15, %s22
    %p144 = scmp.eq.s32.totalorder %s143, 0
    %s146 = sadd.s32 %s145, 1
    %s147 = scalar_select %p144, %s145, %s146
    %p150 = pneg %p144
    %p151 = scmp.eq.s32.totalorder %s15, 1
    %p152 = por %p150, %p151
    %p153 = scmp.ne.s32.totalorder %s145, %s148
    %p154 = scmp.eq.s32.totalorder %s15, 0
    %p155 = por %p153, %p154
    %p156 = scmp.ne.s32.totalorder %s145, %s148
    %p157 = scmp.eq.s32.totalorder %s20, 1
    %p158 = por %p156, %p157
    %p159 = scmp.ne.s32.totalorder %s148, %s149
    %p160 = scmp.eq.s32.totalorder %s20, 0
    %p161 = por %p159, %p160
    %p162 = scmp.ne.s32.totalorder %s148, %s149
    %p163 = scmp.eq.s32.totalorder %s21, 1
    %p164 = por %p162, %p163
    %p166 = scmp.ne.s32.totalorder %s149, %s165
    %p167 = scmp.eq.s32.totalorder %s21, 0
    %p168 = por %p166, %p167
    %s169 = ssub.s32 %s15, %s22
    %p170 = scmp.eq.s32.totalorder %s169, 0
    %s172 = sadd.s32 %s171, 1
    %s173 = scalar_select %p170, %s171, %s172
    %p176 = pneg %p170
    %p177 = scmp.eq.s32.totalorder %s15, 1
    %p178 = por %p176, %p177
    %p179 = scmp.ne.s32.totalorder %s171, %s174
    %p180 = scmp.eq.s32.totalorder %s15, 0
    %p181 = por %p179, %p180
    %p182 = scmp.ne.s32.totalorder %s171, %s174
    %p183 = scmp.eq.s32.totalorder %s20, 1
    %p184 = por %p182, %p183
    %p185 = scmp.ne.s32.totalorder %s174, %s175
    %p186 = scmp.eq.s32.totalorder %s20, 0
    %p187 = por %p185, %p186
    %p188 = scmp.ne.s32.totalorder %s174, %s175
    %p189 = scmp.eq.s32.totalorder %s21, 1
    %p190 = por %p188, %p189
    %p192 = scmp.ne.s32.totalorder %s175, %s191
    %p193 = scmp.eq.s32.totalorder %s21, 0
    %p194 = por %p192, %p193
    %s195 = ssub.s32 %s15, %s22
    %p196 = scmp.eq.s32.totalorder %s195, 0
    %s198 = sadd.s32 %s197, 1
    %s199 = scalar_select %p196, %s197, %s198
    %p202 = pneg %p196
    %p203 = scmp.eq.s32.totalorder %s15, 1
    %p204 = por %p202, %p203
    %p205 = scmp.ne.s32.totalorder %s197, %s200
    %p206 = scmp.eq.s32.totalorder %s15, 0
    %p207 = por %p205, %p206
    %p208 = scmp.ne.s32.totalorder %s197, %s200
    %p209 = scmp.eq.s32.totalorder %s20, 1
    %p210 = por %p208, %p209
    %p211 = scmp.ne.s32.totalorder %s200, %s201
    %p212 = scmp.eq.s32.totalorder %s20, 0
    %p213 = por %p211, %p212
    %p214 = scmp.ne.s32.totalorder %s200, %s201
    %p215 = scmp.eq.s32.totalorder %s21, 1
    %p216 = por %p214, %p215
    %p218 = scmp.ne.s32.totalorder %s201, %s217
    %p219 = scmp.eq.s32.totalorder %s21, 0
    %p220 = por %p218, %p219
    %s221 = ssub.s32 %s15, %s22
    %p222 = scmp.eq.s32.totalorder %s221, 0
    %s224 = sadd.s32 %s223, 1
    %s225 = scalar_select %p222, %s223, %s224
    %p228 = pneg %p222
    %p229 = scmp.eq.s32.totalorder %s15, 1
    %p230 = por %p228, %p229
    %p231 = scmp.ne.s32.totalorder %s223, %s226
    %p232 = scmp.eq.s32.totalorder %s15, 0
    %p233 = por %p231, %p232
    %p234 = scmp.ne.s32.totalorder %s223, %s226
    %p235 = scmp.eq.s32.totalorder %s20, 1
    %p236 = por %p234, %p235
    %p237 = scmp.ne.s32.totalorder %s226, %s227
    %p238 = scmp.eq.s32.totalorder %s20, 0
    %p239 = por %p237, %p238
    %p240 = scmp.ne.s32.totalorder %s226, %s227
    %p241 = scmp.eq.s32.totalorder %s21, 1
    %p242 = por %p240, %p241
    %p244 = scmp.ne.s32.totalorder %s227, %s243
    %p245 = scmp.eq.s32.totalorder %s21, 0
    %p246 = por %p244, %p245
    %p247 = scmp.le.s32.totalorder 1, %s15
    %p248 = scmp.lt.s32.totalorder %s15, 3
    %p249 = pnand %p247, %p248
    %p250 = pneg %p249
    // Predicated region
    $region9: #{basic_block_forward.3} parent=5 // pred_check
      _
    $region10: #{basic_block_forward.3} parent=5 // pred_check_branch
      %252 = sbr.rel (%p249) target = $region12
    $region11: #{basic_block_forward.3} parent=5 // pred_region
      %s253 = ssub.s32 %s15, 1
      // Predicated region
      $region13: #{basic_block_forward.3} parent=11 // pred_check
        %p254 = pneg %p62
      $region14: #{basic_block_forward.3} parent=11 // pred_check_branch
        %256 = sbr.rel (%p254) target = $region16
      $region15: #{basic_block_forward.3} parent=11 // pred_region
        _
      $region16: #{basic_block_forward.3} parent=11 // pred_fallthru
        _
      // Predicated region
      $region17: #{basic_block_forward.3} parent=11 // pred_check
        %p257 = pneg %p83
      $region18: #{basic_block_forward.3} parent=11 // pred_check_branch
        %259 = sbr.rel (%p257) target = $region20
      $region19: #{basic_block_forward.3} parent=11 // pred_region
        _
      $region20: #{basic_block_forward.3} parent=11 // pred_fallthru
        _
    $region12: #{basic_block_forward.3} parent=5 // pred_fallthru
      _
    %p260 = scmp.lt.s32.totalorder %s15, 2
    // Predicated region
    $region21: #{basic_block_forward.3} parent=5 // pred_check
      %p261 = pneg %p260
    $region22: #{basic_block_forward.3} parent=5 // pred_check_branch
      %263 = sbr.rel (%p261) target = $region24
    $region23: #{basic_block_forward.3} parent=5 // pred_region
      // Predicated region
      $region25: #{basic_block_forward.3} parent=23 // pred_check
        %p264 = pneg %p35
      $region26: #{basic_block_forward.3} parent=23 // pred_check_branch
        %266 = sbr.rel (%p264) target = $region28
      $region27: #{basic_block_forward.3} parent=23 // pred_region
        %p267 = scmp.lt.s32.totalorder %s15, 1
        %s268 = scalar_select %p267, %s15, 1
        %s269 = smul.addr %s268, 72
        %s270 = smul.addr %s269, 4
        %s271 = scalar_lea.vmem %s0, %s270
      $region28: #{basic_block_forward.3} parent=23 // pred_fallthru
        _
    $region24: #{basic_block_forward.3} parent=5 // pred_fallthru
      _
    %p272 = scmp.le.s32.totalorder 1, %s15
    %p273 = scmp.lt.s32.totalorder %s15, 3
    %p274 = pnand %p272, %p273
    %p275 = pneg %p274
    // Predicated region
    $region29: #{basic_block_forward.3} parent=5 // pred_check
      _
    $region30: #{basic_block_forward.3} parent=5 // pred_check_branch
      %277 = sbr.rel (%p274) target = $region32
    $region31: #{basic_block_forward.3} parent=5 // pred_region
      %s278 = ssub.s32 %s15, 1
      %p279 = scmp.lt.s32.totalorder %s20, 1
      %s280 = scalar_select %p279, %s20, 1
      %s281 = smul.addr %s280, 72
      %s282 = smul.addr %s281, 4
      %s283 = scalar_lea.vmem %s0, %s282
      %p284 = pneg %p41
      %p285 = pneg %p38
      %p286 = pneg %p62
      %p287 = pneg %p59
      %p288 = pneg %p83
      %p289 = pneg %p80
      %p290 = pneg %p109
      %p291 = pneg %p106
      %p292 = scmp.lt.s32.totalorder %s20, 1
      %s293 = scalar_select %p292, %s20, 1
      %s294 = smul.addr %s293, 16
      %s295 = smul.addr %s294, 4
      %s296 = scalar_lea.vmem %s3, %s295
      %p297 = pneg %p135
      %p298 = pneg %p132
      %p299 = scmp.lt.s32.totalorder %s20, 1
      %s300 = scalar_select %p299, %s20, 1
      %s301 = scalar_lea.vmem %s4, %s300
      %p302 = pneg %p161
      %p303 = pneg %p158
      %p304 = scmp.lt.s32.totalorder %s20, 1
      %s305 = scalar_select %p304, %s20, 1
      %s306 = scalar_lea.vmem %s5, %s305
      %p307 = pneg %p187
      %p308 = pneg %p184
      %p309 = scmp.lt.s32.totalorder %s20, 1
      %s310 = scalar_select %p309, %s20, 1
      %s311 = smul.addr %s310, 11
      %s312 = smul.addr %s311, 4
      %s313 = scalar_lea.vmem %s6, %s312
      %p314 = pneg %p213
      %p315 = pneg %p210
      %p316 = scmp.lt.s32.totalorder %s20, 1
      %s317 = scalar_select %p316, %s20, 1
      %s318 = scalar_lea.vmem %s7, %s317
      %p319 = pneg %p239
      %p320 = pneg %p236
      %p321 = scmp.lt.s32.totalorder %s20, 1
      %s322 = scalar_select %p321, %s20, 1
      %s323 = scalar_lea.vmem %s8, %s322
      %p324 = scmp.lt.s32.totalorder %s20, 1
      %s325 = scalar_select %p324, %s20, 1
      %s326 = smul.addr %s325, 72
      %s327 = smul.addr %s326, 4
      %s328 = scalar_lea.vmem %s0, %s327
      %p329 = scmp.lt.s32.totalorder %s20, 1
      %s330 = scalar_select %p329, %s20, 1
      %s331 = smul.addr %s330, 16
      %s332 = smul.addr %s331, 4
      %s333 = scalar_lea.vmem %s3, %s332
      %p334 = scmp.lt.s32.totalorder %s20, 1
      %s335 = scalar_select %p334, %s20, 1
      %s336 = scalar_lea.vmem %s4, %s335
      %p337 = scmp.lt.s32.totalorder %s20, 1
      %s338 = scalar_select %p337, %s20, 1
      %s339 = scalar_lea.vmem %s5, %s338
      %p340 = scmp.lt.s32.totalorder %s20, 1
      %s341 = scalar_select %p340, %s20, 1
      %s342 = smul.addr %s341, 11
      %s343 = smul.addr %s342, 4
      %s344 = scalar_lea.vmem %s6, %s343
      %p345 = scmp.lt.s32.totalorder %s20, 1
      %s346 = scalar_select %p345, %s20, 1
      %s347 = scalar_lea.vmem %s7, %s346
      %p348 = scmp.lt.s32.totalorder %s20, 1
      %s349 = scalar_select %p348, %s20, 1
      %s350 = scalar_lea.vmem %s8, %s349
      %v352 = vld [vmem:[%s328] sm:$0xf]
      %v353 = vld [vmem:[%s328 + $0x4] sm:$0xf]
      %v354 = vld [vmem:[%s328 + $0x8] sm:$0xf]
      %v355 = vld [vmem:[%s328 + $0xc] sm:$0xf]
      %v356 = vld [vmem:[%s328 + $0x10] sm:$0xf]
      %v357 = vld [vmem:[%s328 + $0x14] sm:$0xf]
      %v358 = vld [vmem:[%s328 + $0x18] sm:$0xf]
      %v359 = vld [vmem:[%s328 + $0x1c] sm:$0xf]
      %v360 = vld [vmem:[%s328 + $0x20] sm:$0xf]
      %v361 = vld [vmem:[%s328 + $0x24] sm:$0xf]
      %v362 = vld [vmem:[%s328 + $0x28] sm:$0xf]
      %v363 = vld [vmem:[%s328 + $0x2c] sm:$0xf]
      %v364 = vld [vmem:[%s328 + $0x30] sm:$0xf]
      %v365 = vld [vmem:[%s328 + $0x34] sm:$0xf]
      %v366 = vld [vmem:[%s328 + $0x38] sm:$0xf]
      %v367 = vld [vmem:[%s328 + $0x3c] sm:$0x1]
      %s368 = scalar_lea.vmem %s328, 72
      %v369 = vld [vmem:[%s368] sm:$0xf]
      %v370 = vld [vmem:[%s368 + $0x4] sm:$0xf]
      %v371 = vld [vmem:[%s368 + $0x8] sm:$0xf]
      %v372 = vld [vmem:[%s368 + $0xc] sm:$0xf]
      %v373 = vld [vmem:[%s368 + $0x10] sm:$0xf]
      %v374 = vld [vmem:[%s368 + $0x14] sm:$0xf]
      %v375 = vld [vmem:[%s368 + $0x18] sm:$0xf]
      %v376 = vld [vmem:[%s368 + $0x1c] sm:$0xf]
      %v377 = vld [vmem:[%s368 + $0x20] sm:$0xf]
      %v378 = vld [vmem:[%s368 + $0x24] sm:$0xf]
      %v379 = vld [vmem:[%s368 + $0x28] sm:$0xf]
      %v380 = vld [vmem:[%s368 + $0x2c] sm:$0xf]
      %v381 = vld [vmem:[%s368 + $0x30] sm:$0xf]
      %v382 = vld [vmem:[%s368 + $0x34] sm:$0xf]
      %v383 = vld [vmem:[%s368 + $0x38] sm:$0xf]
      %v384 = vld [vmem:[%s368 + $0x3c] sm:$0x1]
      %s385 = scalar_lea.vmem %s328, 144
      %v386 = vld [vmem:[%s385] sm:$0xf]
      %v387 = vld [vmem:[%s385 + $0x4] sm:$0xf]
      %v388 = vld [vmem:[%s385 + $0x8] sm:$0xf]
      %v389 = vld [vmem:[%s385 + $0xc] sm:$0xf]
      %v390 = vld [vmem:[%s385 + $0x10] sm:$0xf]
      %v391 = vld [vmem:[%s385 + $0x14] sm:$0xf]
      %v392 = vld [vmem:[%s385 + $0x18] sm:$0xf]
      %v393 = vld [vmem:[%s385 + $0x1c] sm:$0xf]
      %v394 = vld [vmem:[%s385 + $0x20] sm:$0xf]
      %v395 = vld [vmem:[%s385 + $0x24] sm:$0xf]
      %v396 = vld [vmem:[%s385 + $0x28] sm:$0xf]
      %v397 = vld [vmem:[%s385 + $0x2c] sm:$0xf]
      %v398 = vld [vmem:[%s385 + $0x30] sm:$0xf]
      %v399 = vld [vmem:[%s385 + $0x34] sm:$0xf]
      %v400 = vld [vmem:[%s385 + $0x38] sm:$0xf]
      %v401 = vld [vmem:[%s385 + $0x3c] sm:$0x1]
      %s402 = scalar_lea.vmem %s328, 216
      %v403 = vld [vmem:[%s402] sm:$0xf]
      %v404 = vld [vmem:[%s402 + $0x4] sm:$0xf]
      %v405 = vld [vmem:[%s402 + $0x8] sm:$0xf]
      %v406 = vld [vmem:[%s402 + $0xc] sm:$0xf]
      %v407 = vld [vmem:[%s402 + $0x10] sm:$0xf]
      %v408 = vld [vmem:[%s402 + $0x14] sm:$0xf]
      %v409 = vld [vmem:[%s402 + $0x18] sm:$0xf]
      %v410 = vld [vmem:[%s402 + $0x1c] sm:$0xf]
      %v411 = vld [vmem:[%s402 + $0x20] sm:$0xf]
      %v412 = vld [vmem:[%s402 + $0x24] sm:$0xf]
      %v413 = vld [vmem:[%s402 + $0x28] sm:$0xf]
      %v414 = vld [vmem:[%s402 + $0x2c] sm:$0xf]
      %v415 = vld [vmem:[%s402 + $0x30] sm:$0xf]
      %v416 = vld [vmem:[%s402 + $0x34] sm:$0xf]
      %v417 = vld [vmem:[%s402 + $0x38] sm:$0xf]
      %v418 = vld [vmem:[%s402 + $0x3c] sm:$0x1]
      %v419 = vld [vmem:[%s328 + $0x4] sm:$0xe]
      %v420 = vld [vmem:[%s328 + $0x3c] sm:$0xf]
      %v421 = vld [vmem:[%s328 + $0x40] sm:$0x3]
      %v422 = vld [vmem:[%s368 + $0x4] sm:$0xe]
      %v423 = vld [vmem:[%s368 + $0x3c] sm:$0xf]
      %v424 = vld [vmem:[%s368 + $0x40] sm:$0x3]
      %v425 = vld [vmem:[%s328 + $0x4] sm:$0xc]
      %v426 = vld [vmem:[%s328 + $0x40] sm:$0x7]
      %v443 = vunpack.c.l.b16 %v352
      %v444 = vunpack.c.l.b16 %v353
      %v445 = vunpack.c.l.b16 %v354
      %v446 = vunpack.c.l.b16 %v355
      %v447 = vunpack.c.l.b16 %v356
      %v448 = vunpack.c.l.b16 %v357
      %v449 = vunpack.c.l.b16 %v358
      %v450 = vunpack.c.l.b16 %v359
      %v451 = vunpack.c.l.b16 %v360
      %v452 = vunpack.c.l.b16 %v361
      %v453 = vunpack.c.l.b16 %v362
      %v454 = vunpack.c.l.b16 %v363
      %v455 = vunpack.c.l.b16 %v364
      %v456 = vunpack.c.l.b16 %v365
      %v457 = vunpack.c.l.b16 %v366
      %v458 = vunpack.c.l.b16 %v367
      %v459 = vpack.c.b16 %v444, %v443
      %v460 = vpack.c.b16 %v446, %v445
      %v461 = vpack.c.b16 %v448, %v447
      %v462 = vpack.c.b16 %v450, %v449
      %v463 = vpack.c.b16 %v452, %v451
      %v464 = vpack.c.b16 %v454, %v453
      %v465 = vpack.c.b16 %v456, %v455
      %v466 = vpack.c.b16 %v458, %v457
      %v491 = vunpack.c.l.b16 %v369
      %v492 = vunpack.c.l.b16 %v370
      %v493 = vunpack.c.l.b16 %v371
      %v494 = vunpack.c.l.b16 %v372
      %v495 = vunpack.c.l.b16 %v373
      %v496 = vunpack.c.l.b16 %v374
      %v497 = vunpack.c.l.b16 %v375
      %v498 = vunpack.c.l.b16 %v376
      %v499 = vunpack.c.l.b16 %v377
      %v500 = vunpack.c.l.b16 %v378
      %v501 = vunpack.c.l.b16 %v379
      %v502 = vunpack.c.l.b16 %v380
      %v503 = vunpack.c.l.b16 %v381
      %v504 = vunpack.c.l.b16 %v382
      %v505 = vunpack.c.l.b16 %v383
      %v506 = vunpack.c.l.b16 %v384
      %v507 = vpack.c.b16 %v492, %v491
      %v508 = vpack.c.b16 %v494, %v493
      %v509 = vpack.c.b16 %v496, %v495
      %v510 = vpack.c.b16 %v498, %v497
      %v511 = vpack.c.b16 %v500, %v499
      %v512 = vpack.c.b16 %v502, %v501
      %v513 = vpack.c.b16 %v504, %v503
      %v514 = vpack.c.b16 %v506, %v505
      %vm523 = vsmask.f32 7424
      %v525 = vshrl.u32 %v459, 16
      %v527 = vshll.u32 %v459, 16
      %v529 = vrot.slane %v527, 1
      %v530 = vor.u32 %v525, %v529
      %v532 = vshll.u32 %v460, 16
      %v534 = vrot.slane %v532, 1
      %v535 = vsel %vm523, %v530, %v534
      %v536 = vshrl.u32 %v460, 16
      %v538 = vor.u32 %v536, %v534
      %v540 = vshll.u32 %v461, 16
      %v542 = vrot.slane %v540, 1
      %v543 = vsel %vm523, %v538, %v542
      %v544 = vshrl.u32 %v461, 16
      %v546 = vor.u32 %v544, %v542
      %v548 = vshll.u32 %v462, 16
      %v550 = vrot.slane %v548, 1
      %v551 = vsel %vm523, %v546, %v550
      %v552 = vshrl.u32 %v462, 16
      %v554 = vor.u32 %v552, %v550
      %v556 = vshll.u32 %v463, 16
      %v558 = vrot.slane %v556, 1
      %v559 = vsel %vm523, %v554, %v558
      %v560 = vshrl.u32 %v463, 16
      %v562 = vor.u32 %v560, %v558
      %v564 = vshll.u32 %v464, 16
      %v566 = vrot.slane %v564, 1
      %v567 = vsel %vm523, %v562, %v566
      %v568 = vshrl.u32 %v464, 16
      %v570 = vor.u32 %v568, %v566
      %v572 = vshll.u32 %v465, 16
      %v574 = vrot.slane %v572, 1
      %v575 = vsel %vm523, %v570, %v574
      %v576 = vshrl.u32 %v465, 16
      %v578 = vor.u32 %v576, %v574
      %v580 = vshll.u32 %v466, 16
      %v582 = vrot.slane %v580, 1
      %v583 = vsel %vm523, %v578, %v582
      %v584 = vshrl.u32 %v466, 16
      %v586 = vor.u32 %v584, %v582
      %v611 = vunpack.c.l.b16 %v386
      %v612 = vunpack.c.l.b16 %v387
      %v613 = vunpack.c.l.b16 %v388
      %v614 = vunpack.c.l.b16 %v389
      %v615 = vunpack.c.l.b16 %v390
      %v616 = vunpack.c.l.b16 %v391
      %v617 = vunpack.c.l.b16 %v392
      %v618 = vunpack.c.l.b16 %v393
      %v619 = vunpack.c.l.b16 %v394
      %v620 = vunpack.c.l.b16 %v395
      %v621 = vunpack.c.l.b16 %v396
      %v622 = vunpack.c.l.b16 %v397
      %v623 = vunpack.c.l.b16 %v398
      %v624 = vunpack.c.l.b16 %v399
      %v625 = vunpack.c.l.b16 %v400
      %v626 = vunpack.c.l.b16 %v401
      %v627 = vpack.c.b16 %v612, %v611
      %v628 = vpack.c.b16 %v614, %v613
      %v629 = vpack.c.b16 %v616, %v615
      %v630 = vpack.c.b16 %v618, %v617
      %v631 = vpack.c.b16 %v620, %v619
      %v632 = vpack.c.b16 %v622, %v621
      %v633 = vpack.c.b16 %v624, %v623
      %v634 = vpack.c.b16 %v626, %v625
      %v659 = vunpack.c.l.b16 %v403
      %v660 = vunpack.c.l.b16 %v404
      %v661 = vunpack.c.l.b16 %v405
      %v662 = vunpack.c.l.b16 %v406
      %v663 = vunpack.c.l.b16 %v407
      %v664 = vunpack.c.l.b16 %v408
      %v665 = vunpack.c.l.b16 %v409
      %v666 = vunpack.c.l.b16 %v410
      %v667 = vunpack.c.l.b16 %v411
      %v668 = vunpack.c.l.b16 %v412
      %v669 = vunpack.c.l.b16 %v413
      %v670 = vunpack.c.l.b16 %v414
      %v671 = vunpack.c.l.b16 %v415
      %v672 = vunpack.c.l.b16 %v416
      %v673 = vunpack.c.l.b16 %v417
      %v674 = vunpack.c.l.b16 %v418
      %v675 = vpack.c.b16 %v660, %v659
      %v676 = vpack.c.b16 %v662, %v661
      %v677 = vpack.c.b16 %v664, %v663
      %v678 = vpack.c.b16 %v666, %v665
      %v679 = vpack.c.b16 %v668, %v667
      %v680 = vpack.c.b16 %v670, %v669
      %v681 = vpack.c.b16 %v672, %v671
      %v682 = vpack.c.b16 %v674, %v673
      %v692 = vshrl.u32 %v627, 16
      %v694 = vshll.u32 %v627, 16
      %v696 = vrot.slane %v694, 1
      %v697 = vor.u32 %v692, %v696
      %v699 = vshll.u32 %v628, 16
      %v701 = vrot.slane %v699, 1
      %v702 = vsel %vm523, %v697, %v701
      %v703 = vshrl.u32 %v628, 16
      %v705 = vor.u32 %v703, %v701
      %v707 = vshll.u32 %v629, 16
      %v709 = vrot.slane %v707, 1
      %v710 = vsel %vm523, %v705, %v709
      %v711 = vshrl.u32 %v629, 16
      %v713 = vor.u32 %v711, %v709
      %v715 = vshll.u32 %v630, 16
      %v717 = vrot.slane %v715, 1
      %v718 = vsel %vm523, %v713, %v717
      %v719 = vshrl.u32 %v630, 16
      %v721 = vor.u32 %v719, %v717
      %v723 = vshll.u32 %v631, 16
      %v725 = vrot.slane %v723, 1
      %v726 = vsel %vm523, %v721, %v725
      %v727 = vshrl.u32 %v631, 16
      %v729 = vor.u32 %v727, %v725
      %v731 = vshll.u32 %v632, 16
      %v733 = vrot.slane %v731, 1
      %v734 = vsel %vm523, %v729, %v733
      %v735 = vshrl.u32 %v632, 16
      %v737 = vor.u32 %v735, %v733
      %v739 = vshll.u32 %v633, 16
      %v741 = vrot.slane %v739, 1
      %v742 = vsel %vm523, %v737, %v741
      %v743 = vshrl.u32 %v633, 16
      %v745 = vor.u32 %v743, %v741
      %v747 = vshll.u32 %v634, 16
      %v749 = vrot.slane %v747, 1
      %v750 = vsel %vm523, %v745, %v749
      %v751 = vshrl.u32 %v634, 16
      %v753 = vor.u32 %v751, %v749
      %v765 = vunpack.c.l.b16 %v419
      %v766 = vunpack.c.l.b16 %v420
      %v767 = vunpack.c.l.b16 %v421
      %v768 = vpack.c.b16 %v445, %v765
      %v769 = vpack.c.b16 %v447, %v446
      %v770 = vpack.c.b16 %v449, %v448
      %v771 = vpack.c.b16 %v451, %v450
      %v772 = vpack.c.b16 %v453, %v452
      %v773 = vpack.c.b16 %v455, %v454
      %v774 = vpack.c.b16 %v457, %v456
      %v775 = vpack.c.b16 %v767, %v766
      %vm776 = vsmask.f32 6400
      %v778 = vshrl.u32 %v768, 16
      %v780 = vrot.slane %v778, 1
      %v781 = vshll.u32 %v768, 16
      %v783 = vrot.slane %v781, 2
      %v784 = vor.u32 %v780, %v783
      %v786 = vshrl.u32 %v769, 16
      %v788 = vrot.slane %v786, 1
      %v789 = vshll.u32 %v769, 16
      %v791 = vrot.slane %v789, 2
      %v792 = vor.u32 %v788, %v791
      %v793 = vsel %vm776, %v784, %v792
      %v795 = vshrl.u32 %v770, 16
      %v797 = vrot.slane %v795, 1
      %v798 = vshll.u32 %v770, 16
      %v800 = vrot.slane %v798, 2
      %v801 = vor.u32 %v797, %v800
      %v802 = vsel %vm776, %v792, %v801
      %v804 = vshrl.u32 %v771, 16
      %v806 = vrot.slane %v804, 1
      %v807 = vshll.u32 %v771, 16
      %v809 = vrot.slane %v807, 2
      %v810 = vor.u32 %v806, %v809
      %v811 = vsel %vm776, %v801, %v810
      %v813 = vshrl.u32 %v772, 16
      %v815 = vrot.slane %v813, 1
      %v816 = vshll.u32 %v772, 16
      %v818 = vrot.slane %v816, 2
      %v819 = vor.u32 %v815, %v818
      %v820 = vsel %vm776, %v810, %v819
      %v822 = vshrl.u32 %v773, 16
      %v824 = vrot.slane %v822, 1
      %v825 = vshll.u32 %v773, 16
      %v827 = vrot.slane %v825, 2
      %v828 = vor.u32 %v824, %v827
      %v829 = vsel %vm776, %v819, %v828
      %v831 = vshrl.u32 %v774, 16
      %v833 = vrot.slane %v831, 1
      %v834 = vshll.u32 %v774, 16
      %v836 = vrot.slane %v834, 2
      %v837 = vor.u32 %v833, %v836
      %v838 = vsel %vm776, %v828, %v837
      %v840 = vshrl.u32 %v775, 16
      %v842 = vrot.slane %v840, 1
      %v843 = vshll.u32 %v775, 16
      %v845 = vrot.slane %v843, 2
      %v846 = vor.u32 %v842, %v845
      %v847 = vsel %vm776, %v837, %v846
      %v859 = vunpack.c.l.b16 %v422
      %v860 = vunpack.c.l.b16 %v423
      %v861 = vunpack.c.l.b16 %v424
      %v862 = vpack.c.b16 %v493, %v859
      %v863 = vpack.c.b16 %v495, %v494
      %v864 = vpack.c.b16 %v497, %v496
      %v865 = vpack.c.b16 %v499, %v498
      %v866 = vpack.c.b16 %v501, %v500
      %v867 = vpack.c.b16 %v503, %v502
      %v868 = vpack.c.b16 %v505, %v504
      %v869 = vpack.c.b16 %v861, %v860
      %v871 = vshrl.u32 %v862, 16
      %v873 = vrot.slane %v871, 1
      %v874 = vshll.u32 %v862, 16
      %v876 = vrot.slane %v874, 2
      %v877 = vor.u32 %v873, %v876
      %v879 = vshrl.u32 %v863, 16
      %v881 = vrot.slane %v879, 1
      %v882 = vshll.u32 %v863, 16
      %v884 = vrot.slane %v882, 2
      %v885 = vor.u32 %v881, %v884
      %v886 = vsel %vm776, %v877, %v885
      %v888 = vshrl.u32 %v864, 16
      %v890 = vrot.slane %v888, 1
      %v891 = vshll.u32 %v864, 16
      %v893 = vrot.slane %v891, 2
      %v894 = vor.u32 %v890, %v893
      %v895 = vsel %vm776, %v885, %v894
      %v897 = vshrl.u32 %v865, 16
      %v899 = vrot.slane %v897, 1
      %v900 = vshll.u32 %v865, 16
      %v902 = vrot.slane %v900, 2
      %v903 = vor.u32 %v899, %v902
      %v904 = vsel %vm776, %v894, %v903
      %v906 = vshrl.u32 %v866, 16
      %v908 = vrot.slane %v906, 1
      %v909 = vshll.u32 %v866, 16
      %v911 = vrot.slane %v909, 2
      %v912 = vor.u32 %v908, %v911
      %v913 = vsel %vm776, %v903, %v912
      %v915 = vshrl.u32 %v867, 16
      %v917 = vrot.slane %v915, 1
      %v918 = vshll.u32 %v867, 16
      %v920 = vrot.slane %v918, 2
      %v921 = vor.u32 %v917, %v920
      %v922 = vsel %vm776, %v912, %v921
      %v924 = vshrl.u32 %v868, 16
      %v926 = vrot.slane %v924, 1
      %v927 = vshll.u32 %v868, 16
      %v929 = vrot.slane %v927, 2
      %v930 = vor.u32 %v926, %v929
      %v931 = vsel %vm776, %v921, %v930
      %v933 = vshrl.u32 %v869, 16
      %v935 = vrot.slane %v933, 1
      %v936 = vshll.u32 %v869, 16
      %v938 = vrot.slane %v936, 2
      %v939 = vor.u32 %v935, %v938
      %v940 = vsel %vm776, %v930, %v939
      %v951 = vunpack.c.l.b16 %v425
      %v952 = vunpack.c.l.b16 %v426
      %v953 = vpack.c.b16 %v445, %v951
      %v954 = vpack.c.b16 %v952, %v766
      %vm955 = vcmask 1045504
      %v956 = vrot.slane %v953, 2
      %v957 = vrot.slane %v769, 2
      %v958 = vsel %vm955, %v956, %v957
      %v959 = vrot.slane %v770, 2
      %v960 = vsel %vm955, %v957, %v959
      %v961 = vrot.slane %v771, 2
      %v962 = vsel %vm955, %v959, %v961
      %v963 = vrot.slane %v772, 2
      %v964 = vsel %vm955, %v961, %v963
      %v965 = vrot.slane %v773, 2
      %v966 = vsel %vm955, %v963, %v965
      %v967 = vrot.slane %v774, 2
      %v968 = vsel %vm955, %v965, %v967
      %v969 = vrot.slane %v954, 2
      %v970 = vsel %vm955, %v967, %v969
      %v979 = vld [vmem:[%s1] sm:$0xf]
      %v980 = vld [vmem:[%s1 + $0x4] sm:$0xf]
      %v981 = vld [vmem:[%s1 + $0x8] sm:$0xf]
      %v982 = vld [vmem:[%s1 + $0xc] sm:$0xf]
      %v983 = vld [vmem:[%s1 + $0x10] sm:$0xf]
      %v984 = vld [vmem:[%s1 + $0x14] sm:$0xf]
      %v985 = vld [vmem:[%s1 + $0x18] sm:$0xf]
      %v986 = vld [vmem:[%s1 + $0x1c] sm:$0xf]
      %v987 = vld [vmem:[%s1 + $0x20] sm:$0xf]
      %v988 = vld [vmem:[%s1 + $0x24] sm:$0xf]
      %v989 = vld [vmem:[%s1 + $0x28] sm:$0xf]
      %v990 = vld [vmem:[%s1 + $0x2c] sm:$0xf]
      %v991 = vld [vmem:[%s1 + $0x30] sm:$0xf]
      %v992 = vld [vmem:[%s1 + $0x34] sm:$0xf]
      %v993 = vld [vmem:[%s1 + $0x38] sm:$0xf]
      %v994 = vld [vmem:[%s1 + $0x3c] sm:$0xf]
      %v995 = vld [vmem:[%s1 + $0x40] sm:$0xf]
      %v996 = vld [vmem:[%s1 + $0x44] sm:$0xf]
      %v997 = vld [vmem:[%s1 + $0x48] sm:$0xf]
      %v998 = vld [vmem:[%s1 + $0x4c] sm:$0xf]
      %v999 = vld [vmem:[%s1 + $0x50] sm:$0xf]
      %v1000 = vld [vmem:[%s1 + $0x54] sm:$0xf]
      %v1001 = vld [vmem:[%s1 + $0x58] sm:$0xf]
      %v1002 = vld [vmem:[%s1 + $0x5c] sm:$0xf]
      %v1003 = vld [vmem:[%s1 + $0x60] sm:$0xf]
      %v1004 = vld [vmem:[%s1 + $0x64] sm:$0xf]
      %v1005 = vld [vmem:[%s1 + $0x68] sm:$0xf]
      %v1006 = vld [vmem:[%s1 + $0x6c] sm:$0xf]
      %v1007 = vld [vmem:[%s1 + $0x70] sm:$0xf]
      %v1008 = vld [vmem:[%s1 + $0x74] sm:$0xf]
      %v1009 = vld [vmem:[%s1 + $0x78] sm:$0xf]
      %v1010 = vld [vmem:[%s1 + $0x7c] sm:$0xf]
      %v1011 = vld [vmem:[%s1 + $0x80] sm:$0xf]
      %v1012 = vld [vmem:[%s1 + $0x84] sm:$0xf]
      %v1013 = vld [vmem:[%s1 + $0x88] sm:$0xf]
      %v1014 = vld [vmem:[%s1 + $0x8c] sm:$0xf]
      %v1015 = vld [vmem:[%s1 + $0x90] sm:$0xf]
      %v1016 = vld [vmem:[%s1 + $0x94] sm:$0xf]
      %v1017 = vld [vmem:[%s1 + $0x98] sm:$0xf]
      %v1018 = vld [vmem:[%s1 + $0x9c] sm:$0xf]
      %v1019 = vld [vmem:[%s1 + $0xa0] sm:$0xf]
      %v1020 = vld [vmem:[%s1 + $0xa4] sm:$0xf]
      %v1021 = vld [vmem:[%s1 + $0xa8] sm:$0xf]
      %v1022 = vld [vmem:[%s1 + $0xac] sm:$0xf]
      %v1023 = vld [vmem:[%s1 + $0xb0] sm:$0xf]
      %v1024 = vld [vmem:[%s1 + $0xb4] sm:$0xf]
      %v1025 = vld [vmem:[%s1 + $0xb8] sm:$0xf]
      %v1026 = vld [vmem:[%s1 + $0xbc] sm:$0xf]
      %v1027 = vld [vmem:[%s1 + $0xc0] sm:$0xf]
      %v1028 = vld [vmem:[%s1 + $0xc4] sm:$0xf]
      %v1029 = vld [vmem:[%s1 + $0xc8] sm:$0xf]
      %v1030 = vld [vmem:[%s1 + $0xcc] sm:$0xf]
      %v1031 = vld [vmem:[%s1 + $0xd0] sm:$0xf]
      %v1032 = vld [vmem:[%s1 + $0xd4] sm:$0xf]
      %v1033 = vld [vmem:[%s1 + $0xd8] sm:$0xf]
      %v1034 = vld [vmem:[%s1 + $0xdc] sm:$0xf]
      %v1035 = vld [vmem:[%s1 + $0xe0] sm:$0xf]
      %v1036 = vld [vmem:[%s1 + $0xe4] sm:$0xf]
      %v1037 = vld [vmem:[%s1 + $0xe8] sm:$0xf]
      %v1038 = vld [vmem:[%s1 + $0xec] sm:$0xf]
      %v1039 = vld [vmem:[%s1 + $0xf0] sm:$0xf]
      %v1040 = vld [vmem:[%s1 + $0xf4] sm:$0xf]
      %v1041 = vld [vmem:[%s1 + $0xf8] sm:$0xf]
      %v1042 = vld [vmem:[%s1 + $0xfc] sm:$0xf]
      %v1043 = vld [vmem:[%s1 + $0x100] sm:$0xf]
      %v1044 = vld [vmem:[%s1 + $0x104] sm:$0xf]
      %v1045 = vld [vmem:[%s1 + $0x108] sm:$0xf]
      %v1046 = vld [vmem:[%s1 + $0x10c] sm:$0xf]
      %v1047 = vld [vmem:[%s1 + $0x110] sm:$0xf]
      %v1048 = vld [vmem:[%s1 + $0x114] sm:$0xf]
      %v1049 = vld [vmem:[%s1 + $0x118] sm:$0xf]
      %v1050 = vld [vmem:[%s1 + $0x11c] sm:$0xf]
      %v1051 = vld [vmem:[%s1 + $0x120] sm:$0xf]
      %v1052 = vld [vmem:[%s1 + $0x124] sm:$0xf]
      %v1053 = vld [vmem:[%s1 + $0x128] sm:$0xf]
      %v1054 = vld [vmem:[%s1 + $0x12c] sm:$0xf]
      %v1055 = vld [vmem:[%s1 + $0x130] sm:$0xf]
      %v1056 = vld [vmem:[%s1 + $0x134] sm:$0xf]
      %v1057 = vld [vmem:[%s1 + $0x138] sm:$0xf]
      %v1058 = vld [vmem:[%s1 + $0x13c] sm:$0xf]
      %v1059 = vld [vmem:[%s1 + $0x140] sm:$0xf]
      %v1060 = vld [vmem:[%s1 + $0x144] sm:$0xf]
      %v1061 = vld [vmem:[%s1 + $0x148] sm:$0xf]
      %v1062 = vld [vmem:[%s1 + $0x14c] sm:$0xf]
      %v1063 = vld [vmem:[%s1 + $0x150] sm:$0xf]
      %v1064 = vld [vmem:[%s1 + $0x154] sm:$0xf]
      %v1065 = vld [vmem:[%s1 + $0x158] sm:$0xf]
      %v1066 = vld [vmem:[%s1 + $0x15c] sm:$0xf]
      %v1067 = vld [vmem:[%s1 + $0x160] sm:$0xf]
      %v1068 = vld [vmem:[%s1 + $0x164] sm:$0xf]
      %v1069 = vld [vmem:[%s1 + $0x168] sm:$0xf]
      %v1070 = vld [vmem:[%s1 + $0x16c] sm:$0xf]
      %v1071 = vld [vmem:[%s1 + $0x170] sm:$0xf]
      %v1072 = vld [vmem:[%s1 + $0x174] sm:$0xf]
      %v1073 = vld [vmem:[%s1 + $0x178] sm:$0xf]
      %v1074 = vld [vmem:[%s1 + $0x17c] sm:$0xf]
      %v1075 = vld [vmem:[%s1 + $0x180] sm:$0xf]
      %v1076 = vld [vmem:[%s1 + $0x184] sm:$0xf]
      %v1077 = vld [vmem:[%s1 + $0x188] sm:$0xf]
      %v1078 = vld [vmem:[%s1 + $0x18c] sm:$0xf]
      %v1079 = vld [vmem:[%s1 + $0x190] sm:$0xf]
      %v1080 = vld [vmem:[%s1 + $0x194] sm:$0xf]
      %v1081 = vld [vmem:[%s1 + $0x198] sm:$0xf]
      %v1082 = vld [vmem:[%s1 + $0x19c] sm:$0xf]
      %v1083 = vld [vmem:[%s1 + $0x1a0] sm:$0xf]
      %v1084 = vld [vmem:[%s1 + $0x1a4] sm:$0xf]
      %v1085 = vld [vmem:[%s1 + $0x1a8] sm:$0xf]
      %v1086 = vld [vmem:[%s1 + $0x1ac] sm:$0xf]
      %v1087 = vld [vmem:[%s1 + $0x1b0] sm:$0xf]
      %v1088 = vld [vmem:[%s1 + $0x1b4] sm:$0xf]
      %v1089 = vld [vmem:[%s1 + $0x1b8] sm:$0xf]
      %v1090 = vld [vmem:[%s1 + $0x1bc] sm:$0xf]
      %v1091 = vld [vmem:[%s1 + $0x1c0] sm:$0xf]
      %v1092 = vld [vmem:[%s1 + $0x1c4] sm:$0xf]
      %v1093 = vld [vmem:[%s1 + $0x1c8] sm:$0xf]
      %v1094 = vld [vmem:[%s1 + $0x1cc] sm:$0xf]
      %v1095 = vld [vmem:[%s1 + $0x1d0] sm:$0xf]
      %v1096 = vld [vmem:[%s1 + $0x1d4] sm:$0xf]
      %v1097 = vld [vmem:[%s1 + $0x1d8] sm:$0xf]
      %v1098 = vld [vmem:[%s1 + $0x1dc] sm:$0xf]
      %v1099 = vld [vmem:[%s1 + $0x1e0] sm:$0xf]
      %v1100 = vld [vmem:[%s1 + $0x1e4] sm:$0xf]
      %v1101 = vld [vmem:[%s1 + $0x1e8] sm:$0xf]
      %v1102 = vld [vmem:[%s1 + $0x1ec] sm:$0xf]
      %v1103 = vld [vmem:[%s1 + $0x1f0] sm:$0xf]
      %v1104 = vld [vmem:[%s1 + $0x1f4] sm:$0xf]
      %v1105 = vld [vmem:[%s1 + $0x1f8] sm:$0xf]
      %v1106 = vld [vmem:[%s1 + $0x1fc] sm:$0xf]
      %v1107 = vld [vmem:[%s1 + $0x200] sm:$0xf]
      %v1108 = vld [vmem:[%s1 + $0x204] sm:$0xf]
      %v1109 = vld [vmem:[%s1 + $0x208] sm:$0xf]
      %v1110 = vld [vmem:[%s1 + $0x20c] sm:$0xf]
      %v1111 = vld [vmem:[%s1 + $0x210] sm:$0xf]
      %v1112 = vld [vmem:[%s1 + $0x214] sm:$0xf]
      %v1113 = vld [vmem:[%s1 + $0x218] sm:$0xf]
      %v1114 = vld [vmem:[%s1 + $0x21c] sm:$0xf]
      %v1115 = vld [vmem:[%s1 + $0x220] sm:$0xf]
      %v1116 = vld [vmem:[%s1 + $0x224] sm:$0xf]
      %v1117 = vld [vmem:[%s1 + $0x228] sm:$0xf]
      %v1118 = vld [vmem:[%s1 + $0x22c] sm:$0xf]
      %v1119 = vld [vmem:[%s1 + $0x230] sm:$0xf]
      %v1120 = vld [vmem:[%s1 + $0x234] sm:$0xf]
      %v1121 = vld [vmem:[%s1 + $0x238] sm:$0xf]
      %v1122 = vld [vmem:[%s1 + $0x23c] sm:$0xf]
      %v1267 = vunpack.c.l.b16 %v979
      %v1268 = vunpack.c.l.b16 %v980
      %v1269 = vunpack.c.l.b16 %v981
      %v1270 = vunpack.c.l.b16 %v982
      %v1271 = vunpack.c.l.b16 %v983
      %v1272 = vunpack.c.l.b16 %v984
      %v1273 = vunpack.c.l.b16 %v985
      %v1274 = vunpack.c.l.b16 %v986
      %v1275 = vunpack.c.l.b16 %v987
      %v1276 = vunpack.c.l.b16 %v988
      %v1277 = vunpack.c.l.b16 %v989
      %v1278 = vunpack.c.l.b16 %v990
      %v1279 = vunpack.c.l.b16 %v991
      %v1280 = vunpack.c.l.b16 %v992
      %v1281 = vunpack.c.l.b16 %v993
      %v1282 = vunpack.c.l.b16 %v994
      %v1283 = vunpack.c.l.b16 %v995
      %v1284 = vunpack.c.l.b16 %v996
      %v1285 = vunpack.c.l.b16 %v997
      %v1286 = vunpack.c.l.b16 %v998
      %v1287 = vunpack.c.l.b16 %v999
      %v1288 = vunpack.c.l.b16 %v1000
      %v1289 = vunpack.c.l.b16 %v1001
      %v1290 = vunpack.c.l.b16 %v1002
      %v1291 = vunpack.c.l.b16 %v1003
      %v1292 = vunpack.c.l.b16 %v1004
      %v1293 = vunpack.c.l.b16 %v1005
      %v1294 = vunpack.c.l.b16 %v1006
      %v1295 = vunpack.c.l.b16 %v1007
      %v1296 = vunpack.c.l.b16 %v1008
      %v1297 = vunpack.c.l.b16 %v1009
      %v1298 = vunpack.c.l.b16 %v1010
      %v1299 = vunpack.c.l.b16 %v1011
      %v1300 = vunpack.c.l.b16 %v1012
      %v1301 = vunpack.c.l.b16 %v1013
      %v1302 = vunpack.c.l.b16 %v1014
      %v1303 = vunpack.c.l.b16 %v1015
      %v1304 = vunpack.c.l.b16 %v1016
      %v1305 = vunpack.c.l.b16 %v1017
      %v1306 = vunpack.c.l.b16 %v1018
      %v1307 = vunpack.c.l.b16 %v1019
      %v1308 = vunpack.c.l.b16 %v1020
      %v1309 = vunpack.c.l.b16 %v1021
      %v1310 = vunpack.c.l.b16 %v1022
      %v1311 = vunpack.c.l.b16 %v1023
      %v1312 = vunpack.c.l.b16 %v1024
      %v1313 = vunpack.c.l.b16 %v1025
      %v1314 = vunpack.c.l.b16 %v1026
      %v1315 = vunpack.c.l.b16 %v1027
      %v1316 = vunpack.c.l.b16 %v1028
      %v1317 = vunpack.c.l.b16 %v1029
      %v1318 = vunpack.c.l.b16 %v1030
      %v1319 = vunpack.c.l.b16 %v1031
      %v1320 = vunpack.c.l.b16 %v1032
      %v1321 = vunpack.c.l.b16 %v1033
      %v1322 = vunpack.c.l.b16 %v1034
      %v1323 = vunpack.c.l.b16 %v1035
      %v1324 = vunpack.c.l.b16 %v1036
      %v1325 = vunpack.c.l.b16 %v1037
      %v1326 = vunpack.c.l.b16 %v1038
      %v1327 = vunpack.c.l.b16 %v1039
      %v1328 = vunpack.c.l.b16 %v1040
      %v1329 = vunpack.c.l.b16 %v1041
      %v1330 = vunpack.c.l.b16 %v1042
      %v1331 = vunpack.c.l.b16 %v1043
      %v1332 = vunpack.c.l.b16 %v1044
      %v1333 = vunpack.c.l.b16 %v1045
      %v1334 = vunpack.c.l.b16 %v1046
      %v1335 = vunpack.c.l.b16 %v1047
      %v1336 = vunpack.c.l.b16 %v1048
      %v1337 = vunpack.c.l.b16 %v1049
      %v1338 = vunpack.c.l.b16 %v1050
      %v1339 = vunpack.c.l.b16 %v1051
      %v1340 = vunpack.c.l.b16 %v1052
      %v1341 = vunpack.c.l.b16 %v1053
      %v1342 = vunpack.c.l.b16 %v1054
      %v1343 = vunpack.c.l.b16 %v1055
      %v1344 = vunpack.c.l.b16 %v1056
      %v1345 = vunpack.c.l.b16 %v1057
      %v1346 = vunpack.c.l.b16 %v1058
      %v1347 = vunpack.c.l.b16 %v1059
      %v1348 = vunpack.c.l.b16 %v1060
      %v1349 = vunpack.c.l.b16 %v1061
      %v1350 = vunpack.c.l.b16 %v1062
      %v1351 = vunpack.c.l.b16 %v1063
      %v1352 = vunpack.c.l.b16 %v1064
      %v1353 = vunpack.c.l.b16 %v1065
      %v1354 = vunpack.c.l.b16 %v1066
      %v1355 = vunpack.c.l.b16 %v1067
      %v1356 = vunpack.c.l.b16 %v1068
      %v1357 = vunpack.c.l.b16 %v1069
      %v1358 = vunpack.c.l.b16 %v1070
      %v1359 = vunpack.c.l.b16 %v1071
      %v1360 = vunpack.c.l.b16 %v1072
      %v1361 = vunpack.c.l.b16 %v1073
      %v1362 = vunpack.c.l.b16 %v1074
      %v1363 = vunpack.c.l.b16 %v1075
      %v1364 = vunpack.c.l.b16 %v1076
      %v1365 = vunpack.c.l.b16 %v1077
      %v1366 = vunpack.c.l.b16 %v1078
      %v1367 = vunpack.c.l.b16 %v1079
      %v1368 = vunpack.c.l.b16 %v1080
      %v1369 = vunpack.c.l.b16 %v1081
      %v1370 = vunpack.c.l.b16 %v1082
      %v1371 = vunpack.c.l.b16 %v1083
      %v1372 = vunpack.c.l.b16 %v1084
      %v1373 = vunpack.c.l.b16 %v1085
      %v1374 = vunpack.c.l.b16 %v1086
      %v1375 = vunpack.c.l.b16 %v1087
      %v1376 = vunpack.c.l.b16 %v1088
      %v1377 = vunpack.c.l.b16 %v1089
      %v1378 = vunpack.c.l.b16 %v1090
      %v1379 = vunpack.c.l.b16 %v1091
      %v1380 = vunpack.c.l.b16 %v1092
      %v1381 = vunpack.c.l.b16 %v1093
      %v1382 = vunpack.c.l.b16 %v1094
      %v1383 = vunpack.c.l.b16 %v1095
      %v1384 = vunpack.c.l.b16 %v1096
      %v1385 = vunpack.c.l.b16 %v1097
      %v1386 = vunpack.c.l.b16 %v1098
      %v1387 = vunpack.c.l.b16 %v1099
      %v1388 = vunpack.c.l.b16 %v1100
      %v1389 = vunpack.c.l.b16 %v1101
      %v1390 = vunpack.c.l.b16 %v1102
      %v1391 = vunpack.c.l.b16 %v1103
      %v1392 = vunpack.c.l.b16 %v1104
      %v1393 = vunpack.c.l.b16 %v1105
      %v1394 = vunpack.c.l.b16 %v1106
      %v1395 = vunpack.c.l.b16 %v1107
      %v1396 = vunpack.c.l.b16 %v1108
      %v1397 = vunpack.c.l.b16 %v1109
      %v1398 = vunpack.c.l.b16 %v1110
      %v1399 = vunpack.c.l.b16 %v1111
      %v1400 = vunpack.c.l.b16 %v1112
      %v1401 = vunpack.c.l.b16 %v1113
      %v1402 = vunpack.c.l.b16 %v1114
      %v1403 = vunpack.c.l.b16 %v1115
      %v1404 = vunpack.c.l.b16 %v1116
      %v1405 = vunpack.c.l.b16 %v1117
      %v1406 = vunpack.c.l.b16 %v1118
      %v1407 = vunpack.c.l.b16 %v1119
      %v1408 = vunpack.c.l.b16 %v1120
      %v1409 = vunpack.c.l.b16 %v1121
      %v1410 = vunpack.c.l.b16 %v1122
      %v1411 = vpack.c.b16 %v1268, %v1267
      %v1412 = vpack.c.b16 %v1270, %v1269
      %v1413 = vpack.c.b16 %v1272, %v1271
      %v1414 = vpack.c.b16 %v1274, %v1273
      %v1415 = vpack.c.b16 %v1276, %v1275
      %v1416 = vpack.c.b16 %v1278, %v1277
      %v1417 = vpack.c.b16 %v1280, %v1279
      %v1418 = vpack.c.b16 %v1282, %v1281
      %v1419 = vpack.c.b16 %v1284, %v1283
      %v1420 = vpack.c.b16 %v1286, %v1285
      %v1421 = vpack.c.b16 %v1288, %v1287
      %v1422 = vpack.c.b16 %v1290, %v1289
      %v1423 = vpack.c.b16 %v1292, %v1291
      %v1424 = vpack.c.b16 %v1294, %v1293
      %v1425 = vpack.c.b16 %v1296, %v1295
      %v1426 = vpack.c.b16 %v1298, %v1297
      %v1427 = vpack.c.b16 %v1300, %v1299
      %v1428 = vpack.c.b16 %v1302, %v1301
      %v1429 = vpack.c.b16 %v1304, %v1303
      %v1430 = vpack.c.b16 %v1306, %v1305
      %v1431 = vpack.c.b16 %v1308, %v1307
      %v1432 = vpack.c.b16 %v1310, %v1309
      %v1433 = vpack.c.b16 %v1312, %v1311
      %v1434 = vpack.c.b16 %v1314, %v1313
      %v1435 = vpack.c.b16 %v1316, %v1315
      %v1436 = vpack.c.b16 %v1318, %v1317
      %v1437 = vpack.c.b16 %v1320, %v1319
      %v1438 = vpack.c.b16 %v1322, %v1321
      %v1439 = vpack.c.b16 %v1324, %v1323
      %v1440 = vpack.c.b16 %v1326, %v1325
      %v1441 = vpack.c.b16 %v1328, %v1327
      %v1442 = vpack.c.b16 %v1330, %v1329
      %v1443 = vpack.c.b16 %v1332, %v1331
      %v1444 = vpack.c.b16 %v1334, %v1333
      %v1445 = vpack.c.b16 %v1336, %v1335
      %v1446 = vpack.c.b16 %v1338, %v1337
      %v1447 = vpack.c.b16 %v1340, %v1339
      %v1448 = vpack.c.b16 %v1342, %v1341
      %v1449 = vpack.c.b16 %v1344, %v1343
      %v1450 = vpack.c.b16 %v1346, %v1345
      %v1451 = vpack.c.b16 %v1348, %v1347
      %v1452 = vpack.c.b16 %v1350, %v1349
      %v1453 = vpack.c.b16 %v1352, %v1351
      %v1454 = vpack.c.b16 %v1354, %v1353
      %v1455 = vpack.c.b16 %v1356, %v1355
      %v1456 = vpack.c.b16 %v1358, %v1357
      %v1457 = vpack.c.b16 %v1360, %v1359
      %v1458 = vpack.c.b16 %v1362, %v1361
      %v1459 = vpack.c.b16 %v1364, %v1363
      %v1460 = vpack.c.b16 %v1366, %v1365
      %v1461 = vpack.c.b16 %v1368, %v1367
      %v1462 = vpack.c.b16 %v1370, %v1369
      %v1463 = vpack.c.b16 %v1372, %v1371
      %v1464 = vpack.c.b16 %v1374, %v1373
      %v1465 = vpack.c.b16 %v1376, %v1375
      %v1466 = vpack.c.b16 %v1378, %v1377
      %v1467 = vpack.c.b16 %v1380, %v1379
      %v1468 = vpack.c.b16 %v1382, %v1381
      %v1469 = vpack.c.b16 %v1384, %v1383
      %v1470 = vpack.c.b16 %v1386, %v1385
      %v1471 = vpack.c.b16 %v1388, %v1387
      %v1472 = vpack.c.b16 %v1390, %v1389
      %v1473 = vpack.c.b16 %v1392, %v1391
      %v1474 = vpack.c.b16 %v1394, %v1393
      %v1475 = vpack.c.b16 %v1396, %v1395
      %v1476 = vpack.c.b16 %v1398, %v1397
      %v1477 = vpack.c.b16 %v1400, %v1399
      %v1478 = vpack.c.b16 %v1402, %v1401
      %v1479 = vpack.c.b16 %v1404, %v1403
      %v1480 = vpack.c.b16 %v1406, %v1405
      %v1481 = vpack.c.b16 %v1408, %v1407
      %v1482 = vpack.c.b16 %v1410, %v1409
      %1555 = vmatprep.subr.bf16.mxu0 0
      %1556 = vmatpush1.bf16.msra.mxu0 %v1411
      %1557 = vmatprep.subr.bf16.mxu0 0
      %1558 = vmatpush1.bf16.msra.mxu0 %v1412
      %1559 = vmatprep.subr.bf16.mxu0 0
      %1560 = vmatpush1.bf16.msra.mxu0 %v1413
      %1561 = vmatprep.subr.bf16.mxu0 0
      %1562 = vmatpush1.bf16.msra.mxu0 %v1414
      %1563 = vmatprep.subr.bf16.mxu0 0
      %1564 = vmatpush1.bf16.msra.mxu0 %v1415
      %1565 = vmatprep.subr.bf16.mxu0 0
      %1566 = vmatpush1.bf16.msra.mxu0 %v1416
      %1567 = vmatprep.subr.bf16.mxu0 0
      %1568 = vmatpush1.bf16.msra.mxu0 %v1417
      %1569 = vmatprep.subr.bf16.mxu0 0
      %1570 = vmatpush1.bf16.msra.mxu0 %v1418
      %1571 = vmatprep.subr.bf16.mxu0 0
      %1572 = vmatpush1.bf16.msra.mxu0 %v1419
      %1573 = vmatprep.subr.bf16.mxu0 0
      %1574 = vmatpush1.bf16.msra.mxu0 %v1420
      %1575 = vmatprep.subr.bf16.mxu0 0
      %1576 = vmatpush1.bf16.msra.mxu0 %v1421
      %1577 = vmatprep.subr.bf16.mxu0 0
      %1578 = vmatpush1.bf16.msra.mxu0 %v1422
      %1579 = vmatprep.subr.bf16.mxu0 0
      %1580 = vmatpush1.bf16.msra.mxu0 %v1423
      %1581 = vmatprep.subr.bf16.mxu0 0
      %1582 = vmatpush1.bf16.msra.mxu0 %v1424
      %1583 = vmatprep.subr.bf16.mxu0 0
      %1584 = vmatpush1.bf16.msra.mxu0 %v1425
      %1585 = vmatprep.subr.bf16.mxu0 0
      %1586 = vmatpush1.bf16.msra.mxu0 %v1426
      %1587 = vmatprep.mubr.bf16.mxu0 %v507
      %1588 = vmatmul.mubr.bf16.gmra.mrb[0].mxu0 %v459
      %v1589 = vpop.f32.mrb[0].mxu0
      %v1590 = vadd.f32 0.0, %v1589
      %v1591 = vpop.f32.mrb[0].mxu0
      %v1592 = vpop.f32.mrb[0].mxu0
      %v1593 = vadd.f32 0.0, %v1592
      %v1594 = vpop.f32.mrb[0].mxu0
      %1595 = vmatprep.mubr.bf16.mxu0 %v508
      %1596 = vmatmul.mubr.bf16.gmra.mrb[0].mxu0 %v460
      %v1597 = vpop.f32.mrb[0].mxu0
      %v1598 = vadd.f32 0.0, %v1597
      %v1599 = vpop.f32.mrb[0].mxu0
      %v1600 = vpop.f32.mrb[0].mxu0
      %v1601 = vadd.f32 0.0, %v1600
      %v1602 = vpop.f32.mrb[0].mxu0
      %1603 = vmatprep.mubr.bf16.mxu0 %v509
      %1604 = vmatmul.mubr.bf16.gmra.mrb[0].mxu0 %v461
      %v1605 = vpop.f32.mrb[0].mxu0
      %v1606 = vadd.f32 0.0, %v1605
      %v1607 = vpop.f32.mrb[0].mxu0
      %v1608 = vpop.f32.mrb[0].mxu0
      %v1609 = vadd.f32 0.0, %v1608
      %v1610 = vpop.f32.mrb[0].mxu0
      %1611 = vmatprep.mubr.bf16.mxu0 %v510
      %1612 = vmatmul.mubr.bf16.gmra.mrb[0].mxu0 %v462
      %v1613 = vpop.f32.mrb[0].mxu0
      %v1614 = vadd.f32 0.0, %v1613
      %v1615 = vpop.f32.mrb[0].mxu0
      %v1616 = vpop.f32.mrb[0].mxu0
      %v1617 = vadd.f32 0.0, %v1616
      %v1618 = vpop.f32.mrb[0].mxu0
      %1619 = vmatprep.mubr.bf16.mxu0 %v511
      %1620 = vmatmul.mubr.bf16.gmra.mrb[0].mxu0 %v463
      %v1621 = vpop.f32.mrb[0].mxu0
      %v1622 = vadd.f32 0.0, %v1621
      %v1623 = vpop.f32.mrb[0].mxu0
      %v1624 = vpop.f32.mrb[0].mxu0
      %v1625 = vadd.f32 0.0, %v1624
      %v1626 = vpop.f32.mrb[0].mxu0
      %1627 = vmatprep.mubr.bf16.mxu0 %v512
      %1628 = vmatmul.mubr.bf16.gmra.mrb[0].mxu0 %v464
      %v1629 = vpop.f32.mrb[0].mxu0
      %v1630 = vadd.f32 0.0, %v1629
      %v1631 = vpop.f32.mrb[0].mxu0
      %v1632 = vpop.f32.mrb[0].mxu0
      %v1633 = vadd.f32 0.0, %v1632
      %v1634 = vpop.f32.mrb[0].mxu0
      %1635 = vmatprep.mubr.bf16.mxu0 %v513
      %1636 = vmatmul.mubr.bf16.gmra.mrb[0].mxu0 %v465
      %v1637 = vpop.f32.mrb[0].mxu0
      %v1638 = vadd.f32 0.0, %v1637
      %v1639 = vpop.f32.mrb[0].mxu0
      %v1640 = vpop.f32.mrb[0].mxu0
      %v1641 = vadd.f32 0.0, %v1640
      %v1642 = vpop.f32.mrb[0].mxu0
      %1643 = vmatprep.mubr.bf16.mxu0 %v514
      %1644 = vmatmul.mubr.bf16.gmra.mrb[0].mxu0 %v466
      %v1645 = vpop.f32.mrb[0].mxu0
      %v1646 = vadd.f32 0.0, %v1645
      %v1647 = vpop.f32.mrb[0].mxu0
      %v1648 = vpop.f32.mrb[0].mxu0
      %v1649 = vadd.f32 0.0, %v1648
      %v1650 = vpop.f32.mrb[0].mxu0
      %1651 = vdwg.mxu0
      %1652 = vmatprep.subr.bf16.mxu0 0
      %1653 = vmatpush1.bf16.msra.mxu0 %v1427
      %1654 = vmatprep.subr.bf16.mxu0 0
      %1655 = vmatpush1.bf16.msra.mxu0 %v1428
      %1656 = vmatprep.subr.bf16.mxu0 0
      %1657 = vmatpush1.bf16.msra.mxu0 %v1429
      %1658 = vmatprep.subr.bf16.mxu0 0
      %1659 = vmatpush1.bf16.msra.mxu0 %v1430
      %1660 = vmatprep.subr.bf16.mxu0 0
      %1661 = vmatpush1.bf16.msra.mxu0 %v1431
      %1662 = vmatprep.subr.bf16.mxu0 0
      %1663 = vmatpush1.bf16.msra.mxu0 %v1432
      %1664 = vmatprep.subr.bf16.mxu0 0
      %1665 = vmatpush1.bf16.msra.mxu0 %v1433
      %1666 = vmatprep.subr.bf16.mxu0 0
      %1667 = vmatpush1.bf16.msra.mxu0 %v1434
      %1668 = vmatprep.subr.bf16.mxu0 0
      %1669 = vmatpush1.bf16.msra.mxu0 %v1435
      %1670 = vmatprep.subr.bf16.mxu0 0
      %1671 = vmatpush1.bf16.msra.mxu0 %v1436
      %1672 = vmatprep.subr.bf16.mxu0 0
      %1673 = vmatpush1.bf16.msra.mxu0 %v1437
      %1674 = vmatprep.subr.bf16.mxu0 0
      %1675 = vmatpush1.bf16.msra.mxu0 %v1438
      %1676 = vmatprep.subr.bf16.mxu0 0
      %1677 = vmatpush1.bf16.msra.mxu0 %v1439
      %1678 = vmatprep.subr.bf16.mxu0 0
      %1679 = vmatpush1.bf16.msra.mxu0 %v1440
      %1680 = vmatprep.subr.bf16.mxu0 0
      %1681 = vmatpush1.bf16.msra.mxu0 %v1441
      %1682 = vmatprep.subr.bf16.mxu0 0
      %1683 = vmatpush1.bf16.msra.mxu0 %v1442
      %1684 = vmatprep.mubr.bf16.mxu0 %v627
      %1685 = vmatmul.mubr.bf16.gmra.mrb[0].mxu0 %v535
      %v1686 = vpop.f32.mrb[0].mxu0
      %v1687 = vadd.f32 %v1590, %v1686
      %v1688 = vpop.f32.mrb[0].mxu0
      %v1689 = vpop.f32.mrb[0].mxu0
      %v1690 = vadd.f32 %v1593, %v1689
      %v1691 = vpop.f32.mrb[0].mxu0
      %1692 = vmatprep.mubr.bf16.mxu0 %v628
      %1693 = vmatmul.mubr.bf16.gmra.mrb[0].mxu0 %v543
      %v1694 = vpop.f32.mrb[0].mxu0
      %v1695 = vadd.f32 %v1598, %v1694
      %v1696 = vpop.f32.mrb[0].mxu0
      %v1697 = vpop.f32.mrb[0].mxu0
      %v1698 = vadd.f32 %v1601, %v1697
      %v1699 = vpop.f32.mrb[0].mxu0
      %1700 = vmatprep.mubr.bf16.mxu0 %v629
      %1701 = vmatmul.mubr.bf16.gmra.mrb[0].mxu0 %v551
      %v1702 = vpop.f32.mrb[0].mxu0
      %v1703 = vadd.f32 %v1606, %v1702
      %v1704 = vpop.f32.mrb[0].mxu0
      %v1705 = vpop.f32.mrb[0].mxu0
      %v1706 = vadd.f32 %v1609, %v1705
      %v1707 = vpop.f32.mrb[0].mxu0
      %1708 = vmatprep.mubr.bf16.mxu0 %v630
      %1709 = vmatmul.mubr.bf16.gmra.mrb[0].mxu0 %v559
      %v1710 = vpop.f32.mrb[0].mxu0
      %v1711 = vadd.f32 %v1614, %v1710
      %v1712 = vpop.f32.mrb[0].mxu0
      %v1713 = vpop.f32.mrb[0].mxu0
      %v1714 = vadd.f32 %v1617, %v1713
      %v1715 = vpop.f32.mrb[0].mxu0
      %1716 = vmatprep.mubr.bf16.mxu0 %v631
      %1717 = vmatmul.mubr.bf16.gmra.mrb[0].mxu0 %v567
      %v1718 = vpop.f32.mrb[0].mxu0
      %v1719 = vadd.f32 %v1622, %v1718
      %v1720 = vpop.f32.mrb[0].mxu0
      %v1721 = vpop.f32.mrb[0].mxu0
      %v1722 = vadd.f32 %v1625, %v1721
      %v1723 = vpop.f32.mrb[0].mxu0
      %1724 = vmatprep.mubr.bf16.mxu0 %v632
      %1725 = vmatmul.mubr.bf16.gmra.mrb[0].mxu0 %v575
      %v1726 = vpop.f32.mrb[0].mxu0
      %v1727 = vadd.f32 %v1630, %v1726
      %v1728 = vpop.f32.mrb[0].mxu0
      %v1729 = vpop.f32.mrb[0].mxu0
      %v1730 = vadd.f32 %v1633, %v1729
      %v1731 = vpop.f32.mrb[0].mxu0
      %1732 = vmatprep.mubr.bf16.mxu0 %v633
      %1733 = vmatmul.mubr.bf16.gmra.mrb[0].mxu0 %v583
      %v1734 = vpop.f32.mrb[0].mxu0
      %v1735 = vadd.f32 %v1638, %v1734
      %v1736 = vpop.f32.mrb[0].mxu0
      %v1737 = vpop.f32.mrb[0].mxu0
      %v1738 = vadd.f32 %v1641, %v1737
      %v1739 = vpop.f32.mrb[0].mxu0
      %1740 = vmatprep.mubr.bf16.mxu0 %v634
      %1741 = vmatmul.mubr.bf16.gmra.mrb[0].mxu0 %v586
      %v1742 = vpop.f32.mrb[0].mxu0
      %v1743 = vadd.f32 %v1646, %v1742
      %v1744 = vpop.f32.mrb[0].mxu0
      %v1745 = vpop.f32.mrb[0].mxu0
      %v1746 = vadd.f32 %v1649, %v1745
      %v1747 = vpop.f32.mrb[0].mxu0
      %1748 = vdwg.mxu0
      %1749 = vmatprep.subr.bf16.mxu0 0
      %1750 = vmatpush1.bf16.msra.mxu0 %v1443
      %1751 = vmatprep.subr.bf16.mxu0 0
      %1752 = vmatpush1.bf16.msra.mxu0 %v1444
      %1753 = vmatprep.subr.bf16.mxu0 0
      %1754 = vmatpush1.bf16.msra.mxu0 %v1445
      %1755 = vmatprep.subr.bf16.mxu0 0
      %1756 = vmatpush1.bf16.msra.mxu0 %v1446
      %1757 = vmatprep.subr.bf16.mxu0 0
      %1758 = vmatpush1.bf16.msra.mxu0 %v1447
      %1759 = vmatprep.subr.bf16.mxu0 0
      %1760 = vmatpush1.bf16.msra.mxu0 %v1448
      %1761 = vmatprep.subr.bf16.mxu0 0
      %1762 = vmatpush1.bf16.msra.mxu0 %v1449
      %1763 = vmatprep.subr.bf16.mxu0 0
      %1764 = vmatpush1.bf16.msra.mxu0 %v1450
      %1765 = vmatprep.subr.bf16.mxu0 0
      %1766 = vmatpush1.bf16.msra.mxu0 %v1451
      %1767 = vmatprep.subr.bf16.mxu0 0
      %1768 = vmatpush1.bf16.msra.mxu0 %v1452
      %1769 = vmatprep.subr.bf16.mxu0 0
      %1770 = vmatpush1.bf16.msra.mxu0 %v1453
      %1771 = vmatprep.subr.bf16.mxu0 0
      %1772 = vmatpush1.bf16.msra.mxu0 %v1454
      %1773 = vmatprep.subr.bf16.mxu0 0
      %1774 = vmatpush1.bf16.msra.mxu0 %v1455
      %1775 = vmatprep.subr.bf16.mxu0 0
      %1776 = vmatpush1.bf16.msra.mxu0 %v1456
      %1777 = vmatprep.subr.bf16.mxu0 0
      %1778 = vmatpush1.bf16.msra.mxu0 %v1457
      %1779 = vmatprep.subr.bf16.mxu0 0
      %1780 = vmatpush1.bf16.msra.mxu0 %v1458
      %1781 = vmatprep.mubr.bf16.mxu0 %v702
      %1782 = vmatmul.mubr.bf16.gmra.mrb[0].mxu0 %v675
      %v1783 = vpop.f32.mrb[0].mxu0
      %v1784 = vadd.f32 %v1687, %v1783
      %v1785 = vpop.f32.mrb[0].mxu0
      %v1786 = vpop.f32.mrb[0].mxu0
      %v1787 = vadd.f32 %v1690, %v1786
      %v1788 = vpop.f32.mrb[0].mxu0
      %1789 = vmatprep.mubr.bf16.mxu0 %v710
      %1790 = vmatmul.mubr.bf16.gmra.mrb[0].mxu0 %v676
      %v1791 = vpop.f32.mrb[0].mxu0
      %v1792 = vadd.f32 %v1695, %v1791
      %v1793 = vpop.f32.mrb[0].mxu0
      %v1794 = vpop.f32.mrb[0].mxu0
      %v1795 = vadd.f32 %v1698, %v1794
      %v1796 = vpop.f32.mrb[0].mxu0
      %1797 = vmatprep.mubr.bf16.mxu0 %v718
      %1798 = vmatmul.mubr.bf16.gmra.mrb[0].mxu0 %v677
      %v1799 = vpop.f32.mrb[0].mxu0
      %v1800 = vadd.f32 %v1703, %v1799
      %v1801 = vpop.f32.mrb[0].mxu0
      %v1802 = vpop.f32.mrb[0].mxu0
      %v1803 = vadd.f32 %v1706, %v1802
      %v1804 = vpop.f32.mrb[0].mxu0
      %1805 = vmatprep.mubr.bf16.mxu0 %v726
      %1806 = vmatmul.mubr.bf16.gmra.mrb[0].mxu0 %v678
      %v1807 = vpop.f32.mrb[0].mxu0
      %v1808 = vadd.f32 %v1711, %v1807
      %v1809 = vpop.f32.mrb[0].mxu0
      %v1810 = vpop.f32.mrb[0].mxu0
      %v1811 = vadd.f32 %v1714, %v1810
      %v1812 = vpop.f32.mrb[0].mxu0
      %1813 = vmatprep.mubr.bf16.mxu0 %v734
      %1814 = vmatmul.mubr.bf16.gmra.mrb[0].mxu0 %v679
      %v1815 = vpop.f32.mrb[0].mxu0
      %v1816 = vadd.f32 %v1719, %v1815
      %v1817 = vpop.f32.mrb[0].mxu0
      %v1818 = vpop.f32.mrb[0].mxu0
      %v1819 = vadd.f32 %v1722, %v1818
      %v1820 = vpop.f32.mrb[0].mxu0
      %1821 = vmatprep.mubr.bf16.mxu0 %v742
      %1822 = vmatmul.mubr.bf16.gmra.mrb[0].mxu0 %v680
      %v1823 = vpop.f32.mrb[0].mxu0
      %v1824 = vadd.f32 %v1727, %v1823
      %v1825 = vpop.f32.mrb[0].mxu0
      %v1826 = vpop.f32.mrb[0].mxu0
      %v1827 = vadd.f32 %v1730, %v1826
      %v1828 = vpop.f32.mrb[0].mxu0
      %1829 = vmatprep.mubr.bf16.mxu0 %v750
      %1830 = vmatmul.mubr.bf16.gmra.mrb[0].mxu0 %v681
      %v1831 = vpop.f32.mrb[0].mxu0
      %v1832 = vadd.f32 %v1735, %v1831
      %v1833 = vpop.f32.mrb[0].mxu0
      %v1834 = vpop.f32.mrb[0].mxu0
      %v1835 = vadd.f32 %v1738, %v1834
      %v1836 = vpop.f32.mrb[0].mxu0
      %1837 = vmatprep.mubr.bf16.mxu0 %v753
      %1838 = vmatmul.mubr.bf16.gmra.mrb[0].mxu0 %v682
      %v1839 = vpop.f32.mrb[0].mxu0
      %v1840 = vadd.f32 %v1743, %v1839
      %v1841 = vpop.f32.mrb[0].mxu0
      %v1842 = vpop.f32.mrb[0].mxu0
      %v1843 = vadd.f32 %v1746, %v1842
      %v1844 = vpop.f32.mrb[0].mxu0
      %1845 = vdwg.mxu0
      %1846 = vmatprep.subr.bf16.mxu0 0
      %1847 = vmatpush1.bf16.msra.mxu0 %v1459
      %1848 = vmatprep.subr.bf16.mxu0 0
      %1849 = vmatpush1.bf16.msra.mxu0 %v1460
      %1850 = vmatprep.subr.bf16.mxu0 0
      %1851 = vmatpush1.bf16.msra.mxu0 %v1461
      %1852 = vmatprep.subr.bf16.mxu0 0
      %1853 = vmatpush1.bf16.msra.mxu0 %v1462
      %1854 = vmatprep.subr.bf16.mxu0 0
      %1855 = vmatpush1.bf16.msra.mxu0 %v1463
      %1856 = vmatprep.subr.bf16.mxu0 0
      %1857 = vmatpush1.bf16.msra.mxu0 %v1464
      %1858 = vmatprep.subr.bf16.mxu0 0
      %1859 = vmatpush1.bf16.msra.mxu0 %v1465
      %1860 = vmatprep.subr.bf16.mxu0 0
      %1861 = vmatpush1.bf16.msra.mxu0 %v1466
      %1862 = vmatprep.subr.bf16.mxu0 0
      %1863 = vmatpush1.bf16.msra.mxu0 %v1467
      %1864 = vmatprep.subr.bf16.mxu0 0
      %1865 = vmatpush1.bf16.msra.mxu0 %v1468
      %1866 = vmatprep.subr.bf16.mxu0 0
      %1867 = vmatpush1.bf16.msra.mxu0 %v1469
      %1868 = vmatprep.subr.bf16.mxu0 0
      %1869 = vmatpush1.bf16.msra.mxu0 %v1470
      %1870 = vmatprep.subr.bf16.mxu0 0
      %1871 = vmatpush1.bf16.msra.mxu0 %v1471
      %1872 = vmatprep.subr.bf16.mxu0 0
      %1873 = vmatpush1.bf16.msra.mxu0 %v1472
      %1874 = vmatprep.subr.bf16.mxu0 0
      %1875 = vmatpush1.bf16.msra.mxu0 %v1473
      %1876 = vmatprep.subr.bf16.mxu0 0
      %1877 = vmatpush1.bf16.msra.mxu0 %v1474
      %1878 = vmatprep.mubr.bf16.mxu0 %v886
      %1879 = vmatmul.mubr.bf16.gmra.mrb[0].mxu0 %v793
      %v1880 = vpop.f32.mrb[0].mxu0
      %v1881 = vadd.f32 %v1784, %v1880
      %v1882 = vpop.f32.mrb[0].mxu0
      %v1883 = vpop.f32.mrb[0].mxu0
      %v1884 = vadd.f32 %v1787, %v1883
      %v1885 = vpop.f32.mrb[0].mxu0
      %1886 = vmatprep.mubr.bf16.mxu0 %v895
      %1887 = vmatmul.mubr.bf16.gmra.mrb[0].mxu0 %v802
      %v1888 = vpop.f32.mrb[0].mxu0
      %v1889 = vadd.f32 %v1792, %v1888
      %v1890 = vpop.f32.mrb[0].mxu0
      %v1891 = vpop.f32.mrb[0].mxu0
      %v1892 = vadd.f32 %v1795, %v1891
      %v1893 = vpop.f32.mrb[0].mxu0
      %1894 = vmatprep.mubr.bf16.mxu0 %v904
      %1895 = vmatmul.mubr.bf16.gmra.mrb[0].mxu0 %v811
      %v1896 = vpop.f32.mrb[0].mxu0
      %v1897 = vadd.f32 %v1800, %v1896
      %v1898 = vpop.f32.mrb[0].mxu0
      %v1899 = vpop.f32.mrb[0].mxu0
      %v1900 = vadd.f32 %v1803, %v1899
      %v1901 = vpop.f32.mrb[0].mxu0
      %1902 = vmatprep.mubr.bf16.mxu0 %v913
      %1903 = vmatmul.mubr.bf16.gmra.mrb[0].mxu0 %v820
      %v1904 = vpop.f32.mrb[0].mxu0
      %v1905 = vadd.f32 %v1808, %v1904
      %v1906 = vpop.f32.mrb[0].mxu0
      %v1907 = vpop.f32.mrb[0].mxu0
      %v1908 = vadd.f32 %v1811, %v1907
      %v1909 = vpop.f32.mrb[0].mxu0
      %1910 = vmatprep.mubr.bf16.mxu0 %v922
      %1911 = vmatmul.mubr.bf16.gmra.mrb[0].mxu0 %v829
      %v1912 = vpop.f32.mrb[0].mxu0
      %v1913 = vadd.f32 %v1816, %v1912
      %v1914 = vpop.f32.mrb[0].mxu0
      %v1915 = vpop.f32.mrb[0].mxu0
      %v1916 = vadd.f32 %v1819, %v1915
      %v1917 = vpop.f32.mrb[0].mxu0
      %1918 = vmatprep.mubr.bf16.mxu0 %v931
      %1919 = vmatmul.mubr.bf16.gmra.mrb[0].mxu0 %v838
      %v1920 = vpop.f32.mrb[0].mxu0
      %v1921 = vadd.f32 %v1824, %v1920
      %v1922 = vpop.f32.mrb[0].mxu0
      %v1923 = vpop.f32.mrb[0].mxu0
      %v1924 = vadd.f32 %v1827, %v1923
      %v1925 = vpop.f32.mrb[0].mxu0
      %1926 = vmatprep.mubr.bf16.mxu0 %v940
      %1927 = vmatmul.mubr.bf16.gmra.mrb[0].mxu0 %v847
      %v1928 = vpop.f32.mrb[0].mxu0
      %v1929 = vadd.f32 %v1832, %v1928
      %v1930 = vpop.f32.mrb[0].mxu0
      %v1931 = vpop.f32.mrb[0].mxu0
      %v1932 = vadd.f32 %v1835, %v1931
      %v1933 = vpop.f32.mrb[0].mxu0
      %1934 = vmatprep.mubr.bf16.mxu0 %v939
      %1935 = vmatmul.mubr.bf16.gmra.mrb[0].mxu0 %v846
      %v1936 = vpop.f32.mrb[0].mxu0
      %v1937 = vadd.f32 %v1840, %v1936
      %v1938 = vpop.f32.mrb[0].mxu0
      %v1939 = vpop.f32.mrb[0].mxu0
      %v1940 = vadd.f32 %v1843, %v1939
      %v1941 = vpop.f32.mrb[0].mxu0
      %1942 = vdwg.mxu0
      %1943 = vmatprep.subr.bf16.mxu0 0
      %1944 = vmatpush1.bf16.msra.mxu0 %v1475
      %1945 = vmatprep.subr.bf16.mxu0 0
      %1946 = vmatpush1.bf16.msra.mxu0 %v1476
      %1947 = vmatprep.subr.bf16.mxu0 0
      %1948 = vmatpush1.bf16.msra.mxu0 %v1477
      %1949 = vmatprep.subr.bf16.mxu0 0
      %1950 = vmatpush1.bf16.msra.mxu0 %v1478
      %1951 = vmatprep.subr.bf16.mxu0 0
      %1952 = vmatpush1.bf16.msra.mxu0 %v1479
      %1953 = vmatprep.subr.bf16.mxu0 0
      %1954 = vmatpush1.bf16.msra.mxu0 %v1480
      %1955 = vmatprep.subr.bf16.mxu0 0
      %1956 = vmatpush1.bf16.msra.mxu0 %v1481
      %1957 = vmatprep.subr.bf16.mxu0 0
      %1958 = vmatpush1.bf16.msra.mxu0 %v1482
      %1959 = vmatprep.subr.bf16.mxu0 0
      %1960 = vmatpush1.bf16.msra.mxu0 0
      %1961 = vmatprep.subr.bf16.mxu0 0
      %1962 = vmatpush1.bf16.msra.mxu0 0
      %1963 = vmatprep.subr.bf16.mxu0 0
      %1964 = vmatpush1.bf16.msra.mxu0 0
      %1965 = vmatprep.subr.bf16.mxu0 0
      %1966 = vmatpush1.bf16.msra.mxu0 0
      %1967 = vmatprep.subr.bf16.mxu0 0
      %1968 = vmatpush1.bf16.msra.mxu0 0
      %1969 = vmatprep.subr.bf16.mxu0 0
      %1970 = vmatpush1.bf16.msra.mxu0 0
      %1971 = vmatprep.subr.bf16.mxu0 0
      %1972 = vmatpush1.bf16.msra.mxu0 0
      %1973 = vmatprep.subr.bf16.mxu0 0
      %1974 = vmatpush1.bf16.msra.mxu0 0
      %1975 = vmatprep.mubr.bf16.mxu0 0
      %1976 = vmatmul.mubr.bf16.gmra.mrb[0].mxu0 %v958
      %v1977 = vpop.f32.mrb[0].mxu0
      %v1978 = vadd.f32 %v1881, %v1977
      %v1979 = vpop.f32.mrb[0].mxu0
      %v1980 = vpop.f32.mrb[0].mxu0
      %v1981 = vadd.f32 %v1884, %v1980
      %v1982 = vpop.f32.mrb[0].mxu0
      %1983 = vmatprep.mubr.bf16.mxu0 0
      %1984 = vmatmul.mubr.bf16.gmra.mrb[0].mxu0 %v960
      %v1985 = vpop.f32.mrb[0].mxu0
      %v1986 = vadd.f32 %v1889, %v1985
      %v1987 = vpop.f32.mrb[0].mxu0
      %v1988 = vpop.f32.mrb[0].mxu0
      %v1989 = vadd.f32 %v1892, %v1988
      %v1990 = vpop.f32.mrb[0].mxu0
      %1991 = vmatprep.mubr.bf16.mxu0 0
      %1992 = vmatmul.mubr.bf16.gmra.mrb[0].mxu0 %v962
      %v1993 = vpop.f32.mrb[0].mxu0
      %v1994 = vadd.f32 %v1897, %v1993
      %v1995 = vpop.f32.mrb[0].mxu0
      %v1996 = vpop.f32.mrb[0].mxu0
      %v1997 = vadd.f32 %v1900, %v1996
      %v1998 = vpop.f32.mrb[0].mxu0
      %1999 = vmatprep.mubr.bf16.mxu0 0
      %2000 = vmatmul.mubr.bf16.gmra.mrb[0].mxu0 %v964
      %v2001 = vpop.f32.mrb[0].mxu0
      %v2002 = vadd.f32 %v1905, %v2001
      %v2003 = vpop.f32.mrb[0].mxu0
      %v2004 = vpop.f32.mrb[0].mxu0
      %v2005 = vadd.f32 %v1908, %v2004
      %v2006 = vpop.f32.mrb[0].mxu0
      %2007 = vmatprep.mubr.bf16.mxu0 0
      %2008 = vmatmul.mubr.bf16.gmra.mrb[0].mxu0 %v966
      %v2009 = vpop.f32.mrb[0].mxu0
      %v2010 = vadd.f32 %v1913, %v2009
      %v2011 = vpop.f32.mrb[0].mxu0
      %v2012 = vpop.f32.mrb[0].mxu0
      %v2013 = vadd.f32 %v1916, %v2012
      %v2014 = vpop.f32.mrb[0].mxu0
      %2015 = vmatprep.mubr.bf16.mxu0 0
      %2016 = vmatmul.mubr.bf16.gmra.mrb[0].mxu0 %v968
      %v2017 = vpop.f32.mrb[0].mxu0
      %v2018 = vadd.f32 %v1921, %v2017
      %v2019 = vpop.f32.mrb[0].mxu0
      %v2020 = vpop.f32.mrb[0].mxu0
      %v2021 = vadd.f32 %v1924, %v2020
      %v2022 = vpop.f32.mrb[0].mxu0
      %2023 = vmatprep.mubr.bf16.mxu0 0
      %2024 = vmatmul.mubr.bf16.gmra.mrb[0].mxu0 %v970
      %v2025 = vpop.f32.mrb[0].mxu0
      %v2026 = vadd.f32 %v1929, %v2025
      %v2027 = vpop.f32.mrb[0].mxu0
      %v2028 = vpop.f32.mrb[0].mxu0
      %v2029 = vadd.f32 %v1932, %v2028
      %v2030 = vpop.f32.mrb[0].mxu0
      %2031 = vmatprep.mubr.bf16.mxu0 0
      %2032 = vmatmul.mubr.bf16.gmra.mrb[0].mxu0 %v969
      %v2033 = vpop.f32.mrb[0].mxu0
      %v2034 = vadd.f32 %v1937, %v2033
      %v2035 = vpop.f32.mrb[0].mxu0
      %v2036 = vpop.f32.mrb[0].mxu0
      %v2037 = vadd.f32 %v1940, %v2036
      %v2038 = vpop.f32.mrb[0].mxu0
      %2039 = vdwg.mxu0
      %v2040 = vlaneseq
      %v2041 = vshrl.u32 %v2040, 7
      %v2042 = vadd.s32 %v2041, 8
      %v2043 = vadd.s32 %v2041, 16
      %v2044 = vadd.s32 %v2041, 24
      %v2045 = vadd.s32 %v2041, 32
      %v2046 = vadd.s32 %v2041, 40
      %v2047 = vadd.s32 %v2041, 48
      %v2048 = vadd.s32 %v2041, 56
      %v2049 = vadd.s32 %v2041, 64
      %v2050 = vadd.s32 %v2041, 72
      %v2051 = vadd.s32 %v2041, 80
      %v2052 = vadd.s32 %v2041, 88
      %v2053 = vadd.s32 %v2041, 96
      %v2054 = vadd.s32 %v2041, 104
      %v2055 = vadd.s32 %v2041, 112
      %v2056 = vadd.s32 %v2041, 120
      %vm2057 = vcmp.lt.s32.totalorder %v2041, 0
      %v2058 = vsub.s32 0, %v2041
      %v2059 = vsel %vm2057, %v2058, %v2041
      %v2060 = vmul.u32.u64.compose %v2059, 3123612579
      %v2061 = vextract.low.u32 %v2060
      %v2062 = vextract.high.u32 %v2060
      %v2063 = vshrl.u32 %v2062, 3
      %v2064 = vmul.u32 %v2063, 11
      %v2065 = vsub.s32 %v2059, %v2064
      %v2066 = vsub.s32 0, %v2065
      %v2067 = vsel %vm2057, %v2066, %v2065
      %vm2068 = vcmp.lt.s32.totalorder %v2042, 0
      %v2069 = vsub.s32 0, %v2042
      %v2070 = vsel %vm2068, %v2069, %v2042
      %v2071 = vmul.u32.u64.compose %v2070, 3123612579
      %v2072 = vextract.low.u32 %v2071
      %v2073 = vextract.high.u32 %v2071
      %v2074 = vshrl.u32 %v2073, 3
      %v2075 = vmul.u32 %v2074, 11
      %v2076 = vsub.s32 %v2070, %v2075
      %v2077 = vsub.s32 0, %v2076
      %v2078 = vsel %vm2068, %v2077, %v2076
      %vm2079 = vcmp.lt.s32.totalorder %v2043, 0
      %v2080 = vsub.s32 0, %v2043
      %v2081 = vsel %vm2079, %v2080, %v2043
      %v2082 = vmul.u32.u64.compose %v2081, 3123612579
      %v2083 = vextract.low.u32 %v2082
      %v2084 = vextract.high.u32 %v2082
      %v2085 = vshrl.u32 %v2084, 3
      %v2086 = vmul.u32 %v2085, 11
      %v2087 = vsub.s32 %v2081, %v2086
      %v2088 = vsub.s32 0, %v2087
      %v2089 = vsel %vm2079, %v2088, %v2087
      %vm2090 = vcmp.lt.s32.totalorder %v2044, 0
      %v2091 = vsub.s32 0, %v2044
      %v2092 = vsel %vm2090, %v2091, %v2044
      %v2093 = vmul.u32.u64.compose %v2092, 3123612579
      %v2094 = vextract.low.u32 %v2093
      %v2095 = vextract.high.u32 %v2093
      %v2096 = vshrl.u32 %v2095, 3
      %v2097 = vmul.u32 %v2096, 11
      %v2098 = vsub.s32 %v2092, %v2097
      %v2099 = vsub.s32 0, %v2098
      %v2100 = vsel %vm2090, %v2099, %v2098
      %vm2101 = vcmp.lt.s32.totalorder %v2045, 0
      %v2102 = vsub.s32 0, %v2045
      %v2103 = vsel %vm2101, %v2102, %v2045
      %v2104 = vmul.u32.u64.compose %v2103, 3123612579
      %v2105 = vextract.low.u32 %v2104
      %v2106 = vextract.high.u32 %v2104
      %v2107 = vshrl.u32 %v2106, 3
      %v2108 = vmul.u32 %v2107, 11
      %v2109 = vsub.s32 %v2103, %v2108
      %v2110 = vsub.s32 0, %v2109
      %v2111 = vsel %vm2101, %v2110, %v2109
      %vm2112 = vcmp.lt.s32.totalorder %v2046, 0
      %v2113 = vsub.s32 0, %v2046
      %v2114 = vsel %vm2112, %v2113, %v2046
      %v2115 = vmul.u32.u64.compose %v2114, 3123612579
      %v2116 = vextract.low.u32 %v2115
      %v2117 = vextract.high.u32 %v2115
      %v2118 = vshrl.u32 %v2117, 3
      %v2119 = vmul.u32 %v2118, 11
      %v2120 = vsub.s32 %v2114, %v2119
      %v2121 = vsub.s32 0, %v2120
      %v2122 = vsel %vm2112, %v2121, %v2120
      %vm2123 = vcmp.lt.s32.totalorder %v2047, 0
      %v2124 = vsub.s32 0, %v2047
      %v2125 = vsel %vm2123, %v2124, %v2047
      %v2126 = vmul.u32.u64.compose %v2125, 3123612579
      %v2127 = vextract.low.u32 %v2126
      %v2128 = vextract.high.u32 %v2126
      %v2129 = vshrl.u32 %v2128, 3
      %v2130 = vmul.u32 %v2129, 11
      %v2131 = vsub.s32 %v2125, %v2130
      %v2132 = vsub.s32 0, %v2131
      %v2133 = vsel %vm2123, %v2132, %v2131
      %vm2134 = vcmp.lt.s32.totalorder %v2048, 0
      %v2135 = vsub.s32 0, %v2048
      %v2136 = vsel %vm2134, %v2135, %v2048
      %v2137 = vmul.u32.u64.compose %v2136, 3123612579
      %v2138 = vextract.low.u32 %v2137
      %v2139 = vextract.high.u32 %v2137
      %v2140 = vshrl.u32 %v2139, 3
      %v2141 = vmul.u32 %v2140, 11
      %v2142 = vsub.s32 %v2136, %v2141
      %v2143 = vsub.s32 0, %v2142
      %v2144 = vsel %vm2134, %v2143, %v2142
      %vm2145 = vcmp.lt.s32.totalorder %v2049, 0
      %v2146 = vsub.s32 0, %v2049
      %v2147 = vsel %vm2145, %v2146, %v2049
      %v2148 = vmul.u32.u64.compose %v2147, 3123612579
      %v2149 = vextract.low.u32 %v2148
      %v2150 = vextract.high.u32 %v2148
      %v2151 = vshrl.u32 %v2150, 3
      %v2152 = vmul.u32 %v2151, 11
      %v2153 = vsub.s32 %v2147, %v2152
      %v2154 = vsub.s32 0, %v2153
      %v2155 = vsel %vm2145, %v2154, %v2153
      %vm2156 = vcmp.lt.s32.totalorder %v2050, 0
      %v2157 = vsub.s32 0, %v2050
      %v2158 = vsel %vm2156, %v2157, %v2050
      %v2159 = vmul.u32.u64.compose %v2158, 3123612579
      %v2160 = vextract.low.u32 %v2159
      %v2161 = vextract.high.u32 %v2159
      %v2162 = vshrl.u32 %v2161, 3
      %v2163 = vmul.u32 %v2162, 11
      %v2164 = vsub.s32 %v2158, %v2163
      %v2165 = vsub.s32 0, %v2164
      %v2166 = vsel %vm2156, %v2165, %v2164
      %vm2167 = vcmp.lt.s32.totalorder %v2051, 0
      %v2168 = vsub.s32 0, %v2051
      %v2169 = vsel %vm2167, %v2168, %v2051
      %v2170 = vmul.u32.u64.compose %v2169, 3123612579
      %v2171 = vextract.low.u32 %v2170
      %v2172 = vextract.high.u32 %v2170
      %v2173 = vshrl.u32 %v2172, 3
      %v2174 = vmul.u32 %v2173, 11
      %v2175 = vsub.s32 %v2169, %v2174
      %v2176 = vsub.s32 0, %v2175
      %v2177 = vsel %vm2167, %v2176, %v2175
      %vm2178 = vcmp.lt.s32.totalorder %v2052, 0
      %v2179 = vsub.s32 0, %v2052
      %v2180 = vsel %vm2178, %v2179, %v2052
      %v2181 = vmul.u32.u64.compose %v2180, 3123612579
      %v2182 = vextract.low.u32 %v2181
      %v2183 = vextract.high.u32 %v2181
      %v2184 = vshrl.u32 %v2183, 3
      %v2185 = vmul.u32 %v2184, 11
      %v2186 = vsub.s32 %v2180, %v2185
      %v2187 = vsub.s32 0, %v2186
      %v2188 = vsel %vm2178, %v2187, %v2186
      %vm2189 = vcmp.lt.s32.totalorder %v2053, 0
      %v2190 = vsub.s32 0, %v2053
      %v2191 = vsel %vm2189, %v2190, %v2053
      %v2192 = vmul.u32.u64.compose %v2191, 3123612579
      %v2193 = vextract.low.u32 %v2192
      %v2194 = vextract.high.u32 %v2192
      %v2195 = vshrl.u32 %v2194, 3
      %v2196 = vmul.u32 %v2195, 11
      %v2197 = vsub.s32 %v2191, %v2196
      %v2198 = vsub.s32 0, %v2197
      %v2199 = vsel %vm2189, %v2198, %v2197
      %vm2200 = vcmp.lt.s32.totalorder %v2054, 0
      %v2201 = vsub.s32 0, %v2054
      %v2202 = vsel %vm2200, %v2201, %v2054
      %v2203 = vmul.u32.u64.compose %v2202, 3123612579
      %v2204 = vextract.low.u32 %v2203
      %v2205 = vextract.high.u32 %v2203
      %v2206 = vshrl.u32 %v2205, 3
      %v2207 = vmul.u32 %v2206, 11
      %v2208 = vsub.s32 %v2202, %v2207
      %v2209 = vsub.s32 0, %v2208
      %v2210 = vsel %vm2200, %v2209, %v2208
      %vm2211 = vcmp.lt.s32.totalorder %v2055, 0
      %v2212 = vsub.s32 0, %v2055
      %v2213 = vsel %vm2211, %v2212, %v2055
      %v2214 = vmul.u32.u64.compose %v2213, 3123612579
      %v2215 = vextract.low.u32 %v2214
      %v2216 = vextract.high.u32 %v2214
      %v2217 = vshrl.u32 %v2216, 3
      %v2218 = vmul.u32 %v2217, 11
      %v2219 = vsub.s32 %v2213, %v2218
      %v2220 = vsub.s32 0, %v2219
      %v2221 = vsel %vm2211, %v2220, %v2219
      %vm2222 = vcmp.lt.s32.totalorder %v2056, 0
      %v2223 = vsub.s32 0, %v2056
      %v2224 = vsel %vm2222, %v2223, %v2056
      %v2225 = vmul.u32.u64.compose %v2224, 3123612579
      %v2226 = vextract.low.u32 %v2225
      %v2227 = vextract.high.u32 %v2225
      %v2228 = vshrl.u32 %v2227, 3
      %v2229 = vmul.u32 %v2228, 11
      %v2230 = vsub.s32 %v2224, %v2229
      %v2231 = vsub.s32 0, %v2230
      %v2232 = vsel %vm2222, %v2231, %v2230
      %vm2233 = vcmp.ne.s32.totalorder %v2067, 0
      %vm2234 = vcmp.ne.s32.totalorder %v2078, 0
      %vm2235 = vcmp.ne.s32.totalorder %v2089, 0
      %vm2236 = vcmp.ne.s32.totalorder %v2100, 0
      %vm2237 = vcmp.ne.s32.totalorder %v2111, 0
      %vm2238 = vcmp.ne.s32.totalorder %v2122, 0
      %vm2239 = vcmp.ne.s32.totalorder %v2133, 0
      %vm2240 = vcmp.ne.s32.totalorder %v2144, 0
      %vm2241 = vcmp.ne.s32.totalorder %v2155, 0
      %vm2242 = vcmp.ne.s32.totalorder %v2166, 0
      %vm2243 = vcmp.ne.s32.totalorder %v2177, 0
      %vm2244 = vcmp.ne.s32.totalorder %v2188, 0
      %vm2245 = vcmp.ne.s32.totalorder %v2199, 0
      %vm2246 = vcmp.ne.s32.totalorder %v2210, 0
      %vm2247 = vcmp.ne.s32.totalorder %v2221, 0
      %vm2248 = vcmp.ne.s32.totalorder %v2232, 0
      %vm2249 = vcmp.lt.s32.totalorder %v2067, 0
      %vm2250 = vcmp.lt.s32.totalorder %v2078, 0
      %vm2251 = vcmp.lt.s32.totalorder %v2089, 0
      %vm2252 = vcmp.lt.s32.totalorder %v2100, 0
      %vm2253 = vcmp.lt.s32.totalorder %v2111, 0
      %vm2254 = vcmp.lt.s32.totalorder %v2122, 0
      %vm2255 = vcmp.lt.s32.totalorder %v2133, 0
      %vm2256 = vcmp.lt.s32.totalorder %v2144, 0
      %vm2257 = vcmp.lt.s32.totalorder %v2155, 0
      %vm2258 = vcmp.lt.s32.totalorder %v2166, 0
      %vm2259 = vcmp.lt.s32.totalorder %v2177, 0
      %vm2260 = vcmp.lt.s32.totalorder %v2188, 0
      %vm2261 = vcmp.lt.s32.totalorder %v2199, 0
      %vm2262 = vcmp.lt.s32.totalorder %v2210, 0
      %vm2263 = vcmp.lt.s32.totalorder %v2221, 0
      %vm2264 = vcmp.lt.s32.totalorder %v2232, 0
      %vm2265 = vmand %vm2249, %vm2233
      %vm2266 = vmand %vm2250, %vm2234
      %vm2267 = vmand %vm2251, %vm2235
      %vm2268 = vmand %vm2252, %vm2236
      %vm2269 = vmand %vm2253, %vm2237
      %vm2270 = vmand %vm2254, %vm2238
      %vm2271 = vmand %vm2255, %vm2239
      %vm2272 = vmand %vm2256, %vm2240
      %vm2273 = vmand %vm2257, %vm2241
      %vm2274 = vmand %vm2258, %vm2242
      %vm2275 = vmand %vm2259, %vm2243
      %vm2276 = vmand %vm2260, %vm2244
      %vm2277 = vmand %vm2261, %vm2245
      %vm2278 = vmand %vm2262, %vm2246
      %vm2279 = vmand %vm2263, %vm2247
      %vm2280 = vmand %vm2264, %vm2248
      %v2281 = vadd.s32 %v2067, 11
      %v2282 = vadd.s32 %v2078, 11
      %v2283 = vadd.s32 %v2089, 11
      %v2284 = vadd.s32 %v2100, 11
      %v2285 = vadd.s32 %v2111, 11
      %v2286 = vadd.s32 %v2122, 11
      %v2287 = vadd.s32 %v2133, 11
      %v2288 = vadd.s32 %v2144, 11
      %v2289 = vadd.s32 %v2155, 11
      %v2290 = vadd.s32 %v2166, 11
      %v2291 = vadd.s32 %v2177, 11
      %v2292 = vadd.s32 %v2188, 11
      %v2293 = vadd.s32 %v2199, 11
      %v2294 = vadd.s32 %v2210, 11
      %v2295 = vadd.s32 %v2221, 11
      %v2296 = vadd.s32 %v2232, 11
      %v2297 = vsel %vm2265, %v2281, %v2067
      %v2298 = vsel %vm2266, %v2282, %v2078
      %v2299 = vsel %vm2267, %v2283, %v2089
      %v2300 = vsel %vm2268, %v2284, %v2100
      %v2301 = vsel %vm2269, %v2285, %v2111
      %v2302 = vsel %vm2270, %v2286, %v2122
      %v2303 = vsel %vm2271, %v2287, %v2133
      %v2304 = vsel %vm2272, %v2288, %v2144
      %v2305 = vsel %vm2273, %v2289, %v2155
      %v2306 = vsel %vm2274, %v2290, %v2166
      %v2307 = vsel %vm2275, %v2291, %v2177
      %v2308 = vsel %vm2276, %v2292, %v2188
      %v2309 = vsel %vm2277, %v2293, %v2199
      %v2310 = vsel %vm2278, %v2294, %v2210
      %v2311 = vsel %vm2279, %v2295, %v2221
      %v2312 = vsel %vm2280, %v2296, %v2232
      %vm2313 = vcmp.ge.s32.totalorder %v2297, 1
      %vm2314 = vcmp.ge.s32.totalorder %v2298, 1
      %vm2315 = vcmp.ge.s32.totalorder %v2299, 1
      %vm2316 = vcmp.ge.s32.totalorder %v2300, 1
      %vm2317 = vcmp.ge.s32.totalorder %v2301, 1
      %vm2318 = vcmp.ge.s32.totalorder %v2302, 1
      %vm2319 = vcmp.ge.s32.totalorder %v2303, 1
      %vm2320 = vcmp.ge.s32.totalorder %v2304, 1
      %vm2321 = vcmp.ge.s32.totalorder %v2305, 1
      %vm2322 = vcmp.ge.s32.totalorder %v2306, 1
      %vm2323 = vcmp.ge.s32.totalorder %v2307, 1
      %vm2324 = vcmp.ge.s32.totalorder %v2308, 1
      %vm2325 = vcmp.ge.s32.totalorder %v2309, 1
      %vm2326 = vcmp.ge.s32.totalorder %v2310, 1
      %vm2327 = vcmp.ge.s32.totalorder %v2311, 1
      %vm2328 = vcmp.ge.s32.totalorder %v2312, 1
      %vm2329 = vcmp.le.s32.totalorder %v2297, 8
      %vm2330 = vcmp.le.s32.totalorder %v2298, 8
      %vm2331 = vcmp.le.s32.totalorder %v2299, 8
      %vm2332 = vcmp.le.s32.totalorder %v2300, 8
      %vm2333 = vcmp.le.s32.totalorder %v2301, 8
      %vm2334 = vcmp.le.s32.totalorder %v2302, 8
      %vm2335 = vcmp.le.s32.totalorder %v2303, 8
      %vm2336 = vcmp.le.s32.totalorder %v2304, 8
      %vm2337 = vcmp.le.s32.totalorder %v2305, 8
      %vm2338 = vcmp.le.s32.totalorder %v2306, 8
      %vm2339 = vcmp.le.s32.totalorder %v2307, 8
      %vm2340 = vcmp.le.s32.totalorder %v2308, 8
      %vm2341 = vcmp.le.s32.totalorder %v2309, 8
      %vm2342 = vcmp.le.s32.totalorder %v2310, 8
      %vm2343 = vcmp.le.s32.totalorder %v2311, 8
      %vm2344 = vcmp.le.s32.totalorder %v2312, 8
      %vm2345 = vmand %vm2313, %vm2329
      %vm2346 = vmand %vm2314, %vm2330
      %vm2347 = vmand %vm2315, %vm2331
      %vm2348 = vmand %vm2316, %vm2332
      %vm2349 = vmand %vm2317, %vm2333
      %vm2350 = vmand %vm2318, %vm2334
      %vm2351 = vmand %vm2319, %vm2335
      %vm2352 = vmand %vm2320, %vm2336
      %vm2353 = vmand %vm2321, %vm2337
      %vm2354 = vmand %vm2322, %vm2338
      %vm2355 = vmand %vm2323, %vm2339
      %vm2356 = vmand %vm2324, %vm2340
      %vm2357 = vmand %vm2325, %vm2341
      %vm2358 = vmand %vm2326, %vm2342
      %vm2359 = vmand %vm2327, %vm2343
      %vm2360 = vmand %vm2328, %vm2344
      %vm2361 = vcmp.ge.s32.totalorder %v2041, 11
      %vm2362 = vcmp.ge.s32.totalorder %v2042, 11
      %vm2363 = vcmp.ge.s32.totalorder %v2043, 11
      %vm2364 = vcmp.ge.s32.totalorder %v2044, 11
      %vm2365 = vcmp.ge.s32.totalorder %v2045, 11
      %vm2366 = vcmp.ge.s32.totalorder %v2046, 11
      %vm2367 = vcmp.ge.s32.totalorder %v2047, 11
      %vm2368 = vcmp.ge.s32.totalorder %v2048, 11
      %vm2369 = vcmp.ge.s32.totalorder %v2049, 11
      %vm2370 = vcmp.ge.s32.totalorder %v2050, 11
      %vm2371 = vcmp.ge.s32.totalorder %v2051, 11
      %vm2372 = vcmp.ge.s32.totalorder %v2052, 11
      %vm2373 = vcmp.ge.s32.totalorder %v2053, 11
      %vm2374 = vcmp.ge.s32.totalorder %v2054, 11
      %vm2375 = vcmp.ge.s32.totalorder %v2055, 11
      %vm2376 = vcmp.ge.s32.totalorder %v2056, 11
      %vm2377 = vmand %vm2345, %vm2361
      %vm2378 = vmand %vm2346, %vm2362
      %vm2379 = vmand %vm2347, %vm2363
      %vm2380 = vmand %vm2348, %vm2364
      %vm2381 = vmand %vm2349, %vm2365
      %vm2382 = vmand %vm2350, %vm2366
      %vm2383 = vmand %vm2351, %vm2367
      %vm2384 = vmand %vm2352, %vm2368
      %vm2385 = vmand %vm2353, %vm2369
      %vm2386 = vmand %vm2354, %vm2370
      %vm2387 = vmand %vm2355, %vm2371
      %vm2388 = vmand %vm2356, %vm2372
      %vm2389 = vmand %vm2357, %vm2373
      %vm2390 = vmand %vm2358, %vm2374
      %vm2391 = vmand %vm2359, %vm2375
      %vm2392 = vmand %vm2360, %vm2376
      %vm2393 = vcmp.lt.s32.totalorder %v2041, 99
      %vm2394 = vcmp.lt.s32.totalorder %v2042, 99
      %vm2395 = vcmp.lt.s32.totalorder %v2043, 99
      %vm2396 = vcmp.lt.s32.totalorder %v2044, 99
      %vm2397 = vcmp.lt.s32.totalorder %v2045, 99
      %vm2398 = vcmp.lt.s32.totalorder %v2046, 99
      %vm2399 = vcmp.lt.s32.totalorder %v2047, 99
      %vm2400 = vcmp.lt.s32.totalorder %v2048, 99
      %vm2401 = vcmp.lt.s32.totalorder %v2049, 99
      %vm2402 = vcmp.lt.s32.totalorder %v2050, 99
      %vm2403 = vcmp.lt.s32.totalorder %v2051, 99
      %vm2404 = vcmp.lt.s32.totalorder %v2052, 99
      %vm2405 = vcmp.lt.s32.totalorder %v2053, 99
      %vm2406 = vcmp.lt.s32.totalorder %v2054, 99
      %vm2407 = vcmp.lt.s32.totalorder %v2055, 99
      %vm2408 = vcmp.lt.s32.totalorder %v2056, 99
      %vm2409 = vmand %vm2377, %vm2393
      %vm2410 = vmand %vm2378, %vm2394
      %vm2411 = vmand %vm2379, %vm2395
      %vm2412 = vmand %vm2380, %vm2396
      %vm2413 = vmand %vm2381, %vm2397
      %vm2414 = vmand %vm2382, %vm2398
      %vm2415 = vmand %vm2383, %vm2399
      %vm2416 = vmand %vm2384, %vm2400
      %vm2417 = vmand %vm2385, %vm2401
      %vm2418 = vmand %vm2386, %vm2402
      %vm2419 = vmand %vm2387, %vm2403
      %vm2420 = vmand %vm2388, %vm2404
      %vm2421 = vmand %vm2389, %vm2405
      %vm2422 = vmand %vm2390, %vm2406
      %vm2423 = vmand %vm2391, %vm2407
      %vm2424 = vmand %vm2392, %vm2408
      %v2425 = vsel %vm2409, 1, 0
      %v2426 = vsel %vm2410, 1, 0
      %v2427 = vsel %vm2411, 1, 0
      %v2428 = vsel %vm2412, 1, 0
      %v2429 = vsel %vm2413, 1, 0
      %v2430 = vsel %vm2414, 1, 0
      %v2431 = vsel %vm2415, 1, 0
      %v2432 = vsel %vm2416, 1, 0
      %v2433 = vsel %vm2417, 1, 0
      %v2434 = vsel %vm2418, 1, 0
      %v2435 = vsel %vm2419, 1, 0
      %v2436 = vsel %vm2420, 1, 0
      %v2437 = vsel %vm2421, 1, 0
      %v2438 = vsel %vm2422, 1, 0
      %v2439 = vsel %vm2423, 1, 0
      %v2440 = vsel %vm2424, 1, 0
      %vm2441 = vcmp.eq.s32.totalorder %v2425, 1
      %vm2442 = vcmp.eq.s32.totalorder %v2426, 1
      %vm2443 = vcmp.eq.s32.totalorder %v2427, 1
      %vm2444 = vcmp.eq.s32.totalorder %v2428, 1
      %vm2445 = vcmp.eq.s32.totalorder %v2429, 1
      %vm2446 = vcmp.eq.s32.totalorder %v2430, 1
      %vm2447 = vcmp.eq.s32.totalorder %v2431, 1
      %vm2448 = vcmp.eq.s32.totalorder %v2432, 1
      %vm2449 = vcmp.eq.s32.totalorder %v2433, 1
      %vm2450 = vcmp.eq.s32.totalorder %v2434, 1
      %vm2451 = vcmp.eq.s32.totalorder %v2435, 1
      %vm2452 = vcmp.eq.s32.totalorder %v2436, 1
      %vm2453 = vcmp.eq.s32.totalorder %v2437, 1
      %vm2454 = vcmp.eq.s32.totalorder %v2438, 1
      %vm2455 = vcmp.eq.s32.totalorder %v2439, 1
      %vm2456 = vcmp.eq.s32.totalorder %v2440, 1
      %v2457 = vsel %vm2441, %v1978, 0.0
      %v2458 = vsel %vm2442, %v1981, 0.0
      %v2459 = vsel %vm2443, %v1986, 0.0
      %v2460 = vsel %vm2444, %v1989, 0.0
      %v2461 = vsel %vm2445, %v1994, 0.0
      %v2462 = vsel %vm2446, %v1997, 0.0
      %v2463 = vsel %vm2447, %v2002, 0.0
      %v2464 = vsel %vm2448, %v2005, 0.0
      %v2465 = vsel %vm2449, %v2010, 0.0
      %v2466 = vsel %vm2450, %v2013, 0.0
      %v2467 = vsel %vm2451, %v2018, 0.0
      %v2468 = vsel %vm2452, %v2021, 0.0
      %v2469 = vsel %vm2453, %v2026, 0.0
      %v2470 = vsel %vm2454, %v2029, 0.0
      %v2471 = vsel %vm2455, %v2034, 0.0
      %v2472 = vsel %vm2456, %v2037, 0.0
      %v2473 = vpack.c.bf16 %v2458, %v2457
      %v2474 = vpack.c.bf16 %v2460, %v2459
      %v2475 = vpack.c.bf16 %v2462, %v2461
      %v2476 = vpack.c.bf16 %v2464, %v2463
      %v2477 = vpack.c.bf16 %v2466, %v2465
      %v2478 = vpack.c.bf16 %v2468, %v2467
      %v2479 = vpack.c.bf16 %v2470, %v2469
      %v2480 = vpack.c.bf16 %v2472, %v2471
      %v2489 = vunpack.c.l.b16 %v2473
      %v2490 = vunpack.c.h.b16 %v2473
      %v2491 = vunpack.c.l.b16 %v2474
      %v2492 = vunpack.c.h.b16 %v2474
      %v2493 = vunpack.c.l.b16 %v2475
      %v2494 = vunpack.c.h.b16 %v2475
      %v2495 = vunpack.c.l.b16 %v2476
      %v2496 = vunpack.c.h.b16 %v2476
      %v2497 = vunpack.c.l.b16 %v2477
      %v2498 = vunpack.c.h.b16 %v2477
      %v2499 = vunpack.c.l.b16 %v2478
      %v2500 = vunpack.c.h.b16 %v2478
      %v2501 = vunpack.c.l.b16 %v2479
      %v2502 = vunpack.c.h.b16 %v2479
      %v2503 = vunpack.c.l.b16 %v2480
      %v2504 = vunpack.c.h.b16 %v2480
      %v2505 = vpack.c.b16 %v2489, %v2489
      %v2506 = vpack.c.b16 %v2490, %v2490
      %v2507 = vpack.c.b16 %v2491, %v2491
      %v2508 = vpack.c.b16 %v2492, %v2492
      %v2509 = vpack.c.b16 %v2493, %v2493
      %v2510 = vpack.c.b16 %v2494, %v2494
      %v2511 = vpack.c.b16 %v2495, %v2495
      %v2512 = vpack.c.b16 %v2496, %v2496
      %v2513 = vpack.c.b16 %v2497, %v2497
      %v2514 = vpack.c.b16 %v2498, %v2498
      %v2515 = vpack.c.b16 %v2499, %v2499
      %v2516 = vpack.c.b16 %v2500, %v2500
      %v2517 = vpack.c.b16 %v2501, %v2501
      %v2518 = vpack.c.b16 %v2502, %v2502
      %v2519 = vpack.c.b16 %v2503, %v2503
      %v2520 = vpack.c.b16 %v2504, %v2504
      %2537 = vst [vmem:[%s333] sm:$0xf] %v2505
      %2538 = vst [vmem:[%s333 + $0x4] sm:$0xf] %v2506
      %2539 = vst [vmem:[%s333 + $0x8] sm:$0xf] %v2507
      %2540 = vst [vmem:[%s333 + $0xc] sm:$0xf] %v2508
      %2541 = vst [vmem:[%s333 + $0x10] sm:$0xf] %v2509
      %2542 = vst [vmem:[%s333 + $0x14] sm:$0xf] %v2510
      %2543 = vst [vmem:[%s333 + $0x18] sm:$0xf] %v2511
      %2544 = vst [vmem:[%s333 + $0x1c] sm:$0xf] %v2512
      %2545 = vst [vmem:[%s333 + $0x20] sm:$0xf] %v2513
      %2546 = vst [vmem:[%s333 + $0x24] sm:$0xf] %v2514
      %2547 = vst [vmem:[%s333 + $0x28] sm:$0xf] %v2515
      %2548 = vst [vmem:[%s333 + $0x2c] sm:$0xf] %v2516
      %2549 = vst [vmem:[%s333 + $0x30] sm:$0xf] %v2517
      %2550 = vst [vmem:[%s333 + $0x34] sm:$0xf] %v2518
      %2551 = vst [vmem:[%s333 + $0x38] sm:$0xf] %v2519
      %vm2552 = vcmask 1040384
      %vm2553 = vsmask.f32 256
      %vm2554 = vmand %vm2552, %vm2553
      %v2555 = vld [vmem:[%s333 + $0x3c] sm:$0x1]
      %v2556 = vsel %vm2554, %v2520, %v2555
      %2557 = vst [vmem:[%s333 + $0x3c] sm:$0x1] %v2556
      %v2558 = vadd.f32 %v2457, %v2458
      %v2559 = vadd.f32 %v2558, %v2459
      %v2560 = vadd.f32 %v2559, %v2460
      %v2561 = vadd.f32 %v2560, %v2461
      %v2562 = vadd.f32 %v2561, %v2462
      %v2563 = vadd.f32 %v2562, %v2463
      %v2564 = vadd.f32 %v2563, %v2464
      %v2565 = vadd.f32 %v2564, %v2465
      %v2566 = vadd.f32 %v2565, %v2466
      %v2567 = vadd.f32 %v2566, %v2467
      %v2568 = vadd.f32 %v2567, %v2468
      %v2569 = vadd.f32 %v2568, %v2469
      %v2570 = vadd.f32 %v2569, %v2470
      %v2571 = vadd.f32 %v2570, %v2471
      %vm2572 = vcmask 1040384
      %v2573 = vsel %vm2572, %v2472, 0.0
      %v2574 = vadd.f32 %v2571, %v2573
      %v2575 = vrot.slane %v2574, 4
      %v2576 = vadd.f32 %v2574, %v2575
      %v2577 = vrot.slane %v2576, 2
      %v2578 = vadd.f32 %v2576, %v2577
      %v2579 = vrot.slane %v2578, 1
      %v2580 = vadd.f32 %v2578, %v2579
      %2581 = vst [vmem:[%s336] sm:$0x1] %v2580
      %v2582 = vmul.f32 %v2457, %v2457
      %v2583 = vmul.f32 %v2458, %v2458
      %v2584 = vmul.f32 %v2459, %v2459
      %v2585 = vmul.f32 %v2460, %v2460
      %v2586 = vmul.f32 %v2461, %v2461
      %v2587 = vmul.f32 %v2462, %v2462
      %v2588 = vmul.f32 %v2463, %v2463
      %v2589 = vmul.f32 %v2464, %v2464
      %v2590 = vmul.f32 %v2465, %v2465
      %v2591 = vmul.f32 %v2466, %v2466
      %v2592 = vmul.f32 %v2467, %v2467
      %v2593 = vmul.f32 %v2468, %v2468
      %v2594 = vmul.f32 %v2469, %v2469
      %v2595 = vmul.f32 %v2470, %v2470
      %v2596 = vmul.f32 %v2471, %v2471
      %v2597 = vmul.f32 %v2472, %v2472
      %v2598 = vadd.f32 %v2582, %v2583
      %v2599 = vadd.f32 %v2598, %v2584
      %v2600 = vadd.f32 %v2599, %v2585
      %v2601 = vadd.f32 %v2600, %v2586
      %v2602 = vadd.f32 %v2601, %v2587
      %v2603 = vadd.f32 %v2602, %v2588
      %v2604 = vadd.f32 %v2603, %v2589
      %v2605 = vadd.f32 %v2604, %v2590
      %v2606 = vadd.f32 %v2605, %v2591
      %v2607 = vadd.f32 %v2606, %v2592
      %v2608 = vadd.f32 %v2607, %v2593
      %v2609 = vadd.f32 %v2608, %v2594
      %v2610 = vadd.f32 %v2609, %v2595
      %v2611 = vadd.f32 %v2610, %v2596
      %v2612 = vsel %vm2572, %v2597, 0.0
      %v2613 = vadd.f32 %v2611, %v2612
      %v2614 = vrot.slane %v2613, 4
      %v2615 = vadd.f32 %v2613, %v2614
      %v2616 = vrot.slane %v2615, 2
      %v2617 = vadd.f32 %v2615, %v2616
      %v2618 = vrot.slane %v2617, 1
      %v2619 = vadd.f32 %v2617, %v2618
      %2620 = vst [vmem:[%s339] sm:$0x1] %v2619
      %v2621 = vld [vmem:[%s402 + $0x4] sm:$0xc]
      %v2622 = vld [vmem:[%s402 + $0x8] sm:$0xf]
      %v2623 = vld [vmem:[%s402 + $0xc] sm:$0xf]
      %v2624 = vld [vmem:[%s402 + $0x10] sm:$0xf]
      %v2625 = vld [vmem:[%s402 + $0x14] sm:$0xf]
      %v2626 = vld [vmem:[%s402 + $0x18] sm:$0xf]
      %v2627 = vld [vmem:[%s402 + $0x1c] sm:$0xf]
      %v2628 = vld [vmem:[%s402 + $0x20] sm:$0xf]
      %v2629 = vld [vmem:[%s402 + $0x24] sm:$0xf]
      %v2630 = vld [vmem:[%s402 + $0x28] sm:$0xf]
      %v2631 = vld [vmem:[%s402 + $0x2c] sm:$0xf]
      %v2632 = vld [vmem:[%s402 + $0x30] sm:$0x3]
      %v2633 = vld [vmem:[%s2] sm:$0xf]
      %v2634 = vld [vmem:[%s2 + $0x4] sm:$0xf]
      %v2635 = vld [vmem:[%s2 + $0x8] sm:$0xf]
      %v2636 = vld [vmem:[%s2 + $0xc] sm:$0xf]
      %v2637 = vld [vmem:[%s2 + $0x10] sm:$0xf]
      %v2638 = vld [vmem:[%s2 + $0x14] sm:$0xf]
      %v2639 = vld [vmem:[%s2 + $0x18] sm:$0xf]
      %v2640 = vld [vmem:[%s2 + $0x1c] sm:$0xf]
      %v2641 = vld [vmem:[%s2 + $0x20] sm:$0xf]
      %v2642 = vld [vmem:[%s2 + $0x24] sm:$0xf]
      %v2643 = vld [vmem:[%s2 + $0x28] sm:$0xf]
      %v2644 = vld [vmem:[%s2 + $0x2c] sm:$0xf]
      %v2645 = vld [vmem:[%s2 + $0x30] sm:$0xf]
      %v2646 = vld [vmem:[%s2 + $0x34] sm:$0xf]
      %v2647 = vld [vmem:[%s2 + $0x38] sm:$0xf]
      %v2648 = vld [vmem:[%s2 + $0x3c] sm:$0xf]
      %v2661 = vunpack.c.l.b16 %v2621
      %v2662 = vunpack.c.l.b16 %v2622
      %v2663 = vunpack.c.l.b16 %v2623
      %v2664 = vunpack.c.l.b16 %v2624
      %v2665 = vunpack.c.l.b16 %v2625
      %v2666 = vunpack.c.l.b16 %v2626
      %v2667 = vunpack.c.l.b16 %v2627
      %v2668 = vunpack.c.l.b16 %v2628
      %v2669 = vunpack.c.l.b16 %v2629
      %v2670 = vunpack.c.l.b16 %v2630
      %v2671 = vunpack.c.l.b16 %v2631
      %v2672 = vunpack.c.l.b16 %v2632
      %v2673 = vpack.c.b16 %v2662, %v2661
      %v2674 = vpack.c.b16 %v2664, %v2663
      %v2675 = vpack.c.b16 %v2666, %v2665
      %v2676 = vpack.c.b16 %v2668, %v2667
      %v2677 = vpack.c.b16 %v2670, %v2669
      %v2678 = vpack.c.b16 %v2672, %v2671
      %v2679 = vrot.slane %v2673, 2
      %v2680 = vrot.slane %v2674, 2
      %v2681 = vsel %vm955, %v2679, %v2680
      %v2682 = vrot.slane %v2675, 2
      %v2683 = vsel %vm955, %v2680, %v2682
      %v2684 = vrot.slane %v2676, 2
      %v2685 = vsel %vm955, %v2682, %v2684
      %v2686 = vrot.slane %v2677, 2
      %v2687 = vsel %vm955, %v2684, %v2686
      %v2688 = vrot.slane %v2678, 2
      %v2689 = vsel %vm955, %v2686, %v2688
      %v2712 = vunpack.c.l.b16 %v2633
      %v2713 = vunpack.c.l.b16 %v2634
      %v2714 = vunpack.c.l.b16 %v2635
      %v2715 = vunpack.c.l.b16 %v2636
      %v2716 = vunpack.c.l.b16 %v2637
      %v2717 = vunpack.c.l.b16 %v2638
      %v2718 = vunpack.c.l.b16 %v2639
      %v2719 = vunpack.c.l.b16 %v2640
      %v2720 = vunpack.c.l.b16 %v2641
      %v2721 = vunpack.c.l.b16 %v2642
      %v2722 = vunpack.c.l.b16 %v2643
      %v2723 = vunpack.c.l.b16 %v2644
      %v2724 = vunpack.c.l.b16 %v2645
      %v2725 = vunpack.c.l.b16 %v2646
      %v2726 = vunpack.c.l.b16 %v2647
      %v2727 = vunpack.c.l.b16 %v2648
      %v2728 = vpack.c.b16 %v2713, %v2712
      %v2729 = vpack.c.b16 %v2715, %v2714
      %v2730 = vpack.c.b16 %v2717, %v2716
      %v2731 = vpack.c.b16 %v2719, %v2718
      %v2732 = vpack.c.b16 %v2721, %v2720
      %v2733 = vpack.c.b16 %v2723, %v2722
      %v2734 = vpack.c.b16 %v2725, %v2724
      %v2735 = vpack.c.b16 %v2727, %v2726
      %2744 = vmatprep.subr.bf16.mxu0 0
      %2745 = vmatpush1.bf16.msra.mxu0 %v2728
      %2746 = vmatprep.subr.bf16.mxu0 0
      %2747 = vmatpush1.bf16.msra.mxu0 %v2729
      %2748 = vmatprep.subr.bf16.mxu0 0
      %2749 = vmatpush1.bf16.msra.mxu0 %v2730
      %2750 = vmatprep.subr.bf16.mxu0 0
      %2751 = vmatpush1.bf16.msra.mxu0 %v2731
      %2752 = vmatprep.subr.bf16.mxu0 0
      %2753 = vmatpush1.bf16.msra.mxu0 %v2732
      %2754 = vmatprep.subr.bf16.mxu0 0
      %2755 = vmatpush1.bf16.msra.mxu0 %v2733
      %2756 = vmatprep.subr.bf16.mxu0 0
      %2757 = vmatpush1.bf16.msra.mxu0 %v2734
      %2758 = vmatprep.subr.bf16.mxu0 0
      %2759 = vmatpush1.bf16.msra.mxu0 %v2735
      %2760 = vmatprep.subr.bf16.mxu0 0
      %2761 = vmatpush1.bf16.msra.mxu0 0
      %2762 = vmatprep.subr.bf16.mxu0 0
      %2763 = vmatpush1.bf16.msra.mxu0 0
      %2764 = vmatprep.subr.bf16.mxu0 0
      %2765 = vmatpush1.bf16.msra.mxu0 0
      %2766 = vmatprep.subr.bf16.mxu0 0
      %2767 = vmatpush1.bf16.msra.mxu0 0
      %2768 = vmatprep.subr.bf16.mxu0 0
      %2769 = vmatpush1.bf16.msra.mxu0 0
      %2770 = vmatprep.subr.bf16.mxu0 0
      %2771 = vmatpush1.bf16.msra.mxu0 0
      %2772 = vmatprep.subr.bf16.mxu0 0
      %2773 = vmatpush1.bf16.msra.mxu0 0
      %2774 = vmatprep.subr.bf16.mxu0 0
      %2775 = vmatpush1.bf16.msra.mxu0 0
      %2776 = vmatprep.mubr.bf16.mxu0 0
      %2777 = vmatmul.mubr.bf16.gmra.mrb[0].mxu0 %v2681
      %v2778 = vpop.f32.mrb[0].mxu0
      %v2779 = vadd.f32 0.0, %v2778
      %v2780 = vpop.f32.mrb[0].mxu0
      %v2781 = vpop.f32.mrb[0].mxu0
      %v2782 = vadd.f32 0.0, %v2781
      %v2783 = vpop.f32.mrb[0].mxu0
      %2784 = vmatprep.mubr.bf16.mxu0 0
      %2785 = vmatmul.mubr.bf16.gmra.mrb[0].mxu0 %v2683
      %v2786 = vpop.f32.mrb[0].mxu0
      %v2787 = vadd.f32 0.0, %v2786
      %v2788 = vpop.f32.mrb[0].mxu0
      %v2789 = vpop.f32.mrb[0].mxu0
      %v2790 = vadd.f32 0.0, %v2789
      %v2791 = vpop.f32.mrb[0].mxu0
      %2792 = vmatprep.mubr.bf16.mxu0 0
      %2793 = vmatmul.mubr.bf16.gmra.mrb[0].mxu0 %v2685
      %v2794 = vpop.f32.mrb[0].mxu0
      %v2795 = vadd.f32 0.0, %v2794
      %v2796 = vpop.f32.mrb[0].mxu0
      %v2797 = vpop.f32.mrb[0].mxu0
      %v2798 = vadd.f32 0.0, %v2797
      %v2799 = vpop.f32.mrb[0].mxu0
      %2800 = vmatprep.mubr.bf16.mxu0 0
      %2801 = vmatmul.mubr.bf16.gmra.mrb[0].mxu0 %v2687
      %v2802 = vpop.f32.mrb[0].mxu0
      %v2803 = vadd.f32 0.0, %v2802
      %v2804 = vpop.f32.mrb[0].mxu0
      %v2805 = vpop.f32.mrb[0].mxu0
      %v2806 = vadd.f32 0.0, %v2805
      %v2807 = vpop.f32.mrb[0].mxu0
      %2808 = vmatprep.mubr.bf16.mxu0 0
      %2809 = vmatmul.mubr.bf16.gmra.mrb[0].mxu0 %v2689
      %v2810 = vpop.f32.mrb[0].mxu0
      %v2811 = vadd.f32 0.0, %v2810
      %v2812 = vpop.f32.mrb[0].mxu0
      %v2813 = vpop.f32.mrb[0].mxu0
      %v2814 = vadd.f32 0.0, %v2813
      %v2815 = vpop.f32.mrb[0].mxu0
      %2816 = vmatprep.mubr.bf16.mxu0 0
      %2817 = vmatmul.mubr.bf16.gmra.mrb[0].mxu0 %v2688
      %v2818 = vpop.f32.mrb[0].mxu0
      %v2819 = vadd.f32 0.0, %v2818
      %v2820 = vpop.f32.mrb[0].mxu0
      %v2821 = vpop.f32.mrb[0].mxu0
      %v2822 = vpop.f32.mrb[0].mxu0
      %2823 = vdwg.mxu0
      %vm2824 = vcmp.lt.s32.totalorder %v2297, 8
      %vm2825 = vcmp.lt.s32.totalorder %v2298, 8
      %vm2826 = vcmp.lt.s32.totalorder %v2299, 8
      %vm2827 = vcmp.lt.s32.totalorder %v2300, 8
      %vm2828 = vcmp.lt.s32.totalorder %v2301, 8
      %vm2829 = vcmp.lt.s32.totalorder %v2302, 8
      %vm2830 = vcmp.lt.s32.totalorder %v2303, 8
      %vm2831 = vcmp.lt.s32.totalorder %v2304, 8
      %vm2832 = vcmp.lt.s32.totalorder %v2305, 8
      %vm2833 = vcmp.lt.s32.totalorder %v2306, 8
      %vm2834 = vcmp.lt.s32.totalorder %v2307, 8
      %v2835 = vsel %vm2824, 1, 0
      %v2836 = vsel %vm2825, 1, 0
      %v2837 = vsel %vm2826, 1, 0
      %v2838 = vsel %vm2827, 1, 0
      %v2839 = vsel %vm2828, 1, 0
      %v2840 = vsel %vm2829, 1, 0
      %v2841 = vsel %vm2830, 1, 0
      %v2842 = vsel %vm2831, 1, 0
      %v2843 = vsel %vm2832, 1, 0
      %v2844 = vsel %vm2833, 1, 0
      %v2845 = vsel %vm2834, 1, 0
      %vm2846 = vcmp.eq.s32.totalorder %v2835, 1
      %vm2847 = vcmp.eq.s32.totalorder %v2836, 1
      %vm2848 = vcmp.eq.s32.totalorder %v2837, 1
      %vm2849 = vcmp.eq.s32.totalorder %v2838, 1
      %vm2850 = vcmp.eq.s32.totalorder %v2839, 1
      %vm2851 = vcmp.eq.s32.totalorder %v2840, 1
      %vm2852 = vcmp.eq.s32.totalorder %v2841, 1
      %vm2853 = vcmp.eq.s32.totalorder %v2842, 1
      %vm2854 = vcmp.eq.s32.totalorder %v2843, 1
      %vm2855 = vcmp.eq.s32.totalorder %v2844, 1
      %vm2856 = vcmp.eq.s32.totalorder %v2845, 1
      %v2857 = vsel %vm2846, %v2779, 0.0
      %v2858 = vsel %vm2847, %v2782, 0.0
      %v2859 = vsel %vm2848, %v2787, 0.0
      %v2860 = vsel %vm2849, %v2790, 0.0
      %v2861 = vsel %vm2850, %v2795, 0.0
      %v2862 = vsel %vm2851, %v2798, 0.0
      %v2863 = vsel %vm2852, %v2803, 0.0
      %v2864 = vsel %vm2853, %v2806, 0.0
      %v2865 = vsel %vm2854, %v2811, 0.0
      %v2866 = vsel %vm2855, %v2814, 0.0
      %v2867 = vsel %vm2856, %v2819, 0.0
      %v2868 = vpack.c.bf16 %v2858, %v2857
      %v2869 = vpack.c.bf16 %v2860, %v2859
      %v2870 = vpack.c.bf16 %v2862, %v2861
      %v2871 = vpack.c.bf16 %v2864, %v2863
      %v2872 = vpack.c.bf16 %v2866, %v2865
      %v2873 = vpack.c.bf16 %v2867, %v2867
      %v2880 = vunpack.c.l.b16 %v2868
      %v2881 = vunpack.c.h.b16 %v2868
      %v2882 = vunpack.c.l.b16 %v2869
      %v2883 = vunpack.c.h.b16 %v2869
      %v2884 = vunpack.c.l.b16 %v2870
      %v2885 = vunpack.c.h.b16 %v2870
      %v2886 = vunpack.c.l.b16 %v2871
      %v2887 = vunpack.c.h.b16 %v2871
      %v2888 = vunpack.c.l.b16 %v2872
      %v2889 = vunpack.c.h.b16 %v2872
      %v2890 = vunpack.c.l.b16 %v2873
      %v2891 = vpack.c.b16 %v2880, %v2880
      %v2892 = vpack.c.b16 %v2881, %v2881
      %v2893 = vpack.c.b16 %v2882, %v2882
      %v2894 = vpack.c.b16 %v2883, %v2883
      %v2895 = vpack.c.b16 %v2884, %v2884
      %v2896 = vpack.c.b16 %v2885, %v2885
      %v2897 = vpack.c.b16 %v2886, %v2886
      %v2898 = vpack.c.b16 %v2887, %v2887
      %v2899 = vpack.c.b16 %v2888, %v2888
      %v2900 = vpack.c.b16 %v2889, %v2889
      %v2901 = vpack.c.b16 %v2890, %v2890
      %2913 = vst [vmem:[%s344] sm:$0xf] %v2891
      %2914 = vst [vmem:[%s344 + $0x4] sm:$0xf] %v2892
      %2915 = vst [vmem:[%s344 + $0x8] sm:$0xf] %v2893
      %2916 = vst [vmem:[%s344 + $0xc] sm:$0xf] %v2894
      %2917 = vst [vmem:[%s344 + $0x10] sm:$0xf] %v2895
      %2918 = vst [vmem:[%s344 + $0x14] sm:$0xf] %v2896
      %2919 = vst [vmem:[%s344 + $0x18] sm:$0xf] %v2897
      %2920 = vst [vmem:[%s344 + $0x1c] sm:$0xf] %v2898
      %2921 = vst [vmem:[%s344 + $0x20] sm:$0xf] %v2899
      %2922 = vst [vmem:[%s344 + $0x24] sm:$0xf] %v2900
      %2923 = vst [vmem:[%s344 + $0x28] sm:$0xf] %v2901
      %v2924 = vadd.f32 %v2857, %v2858
      %v2925 = vadd.f32 %v2924, %v2859
      %v2926 = vadd.f32 %v2925, %v2860
      %v2927 = vadd.f32 %v2926, %v2861
      %v2928 = vadd.f32 %v2927, %v2862
      %v2929 = vadd.f32 %v2928, %v2863
      %v2930 = vadd.f32 %v2929, %v2864
      %v2931 = vadd.f32 %v2930, %v2865
      %v2932 = vadd.f32 %v2931, %v2866
      %v2933 = vadd.f32 %v2932, %v2867
      %v2934 = vrot.slane %v2933, 4
      %v2935 = vadd.f32 %v2933, %v2934
      %v2936 = vrot.slane %v2935, 2
      %v2937 = vadd.f32 %v2935, %v2936
      %v2938 = vrot.slane %v2937, 1
      %v2939 = vadd.f32 %v2937, %v2938
      %2940 = vst [vmem:[%s347] sm:$0x1] %v2939
      %v2941 = vmul.f32 %v2857, %v2857
      %v2942 = vmul.f32 %v2858, %v2858
      %v2943 = vmul.f32 %v2859, %v2859
      %v2944 = vmul.f32 %v2860, %v2860
      %v2945 = vmul.f32 %v2861, %v2861
      %v2946 = vmul.f32 %v2862, %v2862
      %v2947 = vmul.f32 %v2863, %v2863
      %v2948 = vmul.f32 %v2864, %v2864
      %v2949 = vmul.f32 %v2865, %v2865
      %v2950 = vmul.f32 %v2866, %v2866
      %v2951 = vmul.f32 %v2867, %v2867
      %v2952 = vadd.f32 %v2941, %v2942
      %v2953 = vadd.f32 %v2952, %v2943
      %v2954 = vadd.f32 %v2953, %v2944
      %v2955 = vadd.f32 %v2954, %v2945
      %v2956 = vadd.f32 %v2955, %v2946
      %v2957 = vadd.f32 %v2956, %v2947
      %v2958 = vadd.f32 %v2957, %v2948
      %v2959 = vadd.f32 %v2958, %v2949
      %v2960 = vadd.f32 %v2959, %v2950
      %v2961 = vadd.f32 %v2960, %v2951
      %v2962 = vrot.slane %v2961, 4
      %v2963 = vadd.f32 %v2961, %v2962
      %v2964 = vrot.slane %v2963, 2
      %v2965 = vadd.f32 %v2963, %v2964
      %v2966 = vrot.slane %v2965, 1
      %v2967 = vadd.f32 %v2965, %v2966
      %2968 = vst [vmem:[%s350] sm:$0x1] %v2967
      %p2969 = scmp.lt.s32.totalorder %s20, 1
      %s2970 = scalar_select %p2969, %s20, 1
      %s2971 = smul.addr %s2970, 16
      %s2972 = smul.addr %s2971, 4
      %s2973 = scalar_lea.vmem %s3, %s2972
      %p2974 = scmp.lt.s32.totalorder %s20, 1
      %s2975 = scalar_select %p2974, %s20, 1
      %s2976 = scalar_lea.vmem %s4, %s2975
      %p2977 = scmp.lt.s32.totalorder %s20, 1
      %s2978 = scalar_select %p2977, %s20, 1
      %s2979 = scalar_lea.vmem %s5, %s2978
      %p2980 = scmp.lt.s32.totalorder %s20, 1
      %s2981 = scalar_select %p2980, %s20, 1
      %s2982 = smul.addr %s2981, 11
      %s2983 = smul.addr %s2982, 4
      %s2984 = scalar_lea.vmem %s6, %s2983
      %p2985 = scmp.lt.s32.totalorder %s20, 1
      %s2986 = scalar_select %p2985, %s20, 1
      %s2987 = scalar_lea.vmem %s7, %s2986
      %p2988 = scmp.lt.s32.totalorder %s20, 1
      %s2989 = scalar_select %p2988, %s20, 1
      %s2990 = scalar_lea.vmem %s8, %s2989
      // Predicated region
      $region33: #{basic_block_forward.3} parent=31 // pred_check
        %p2991 = pneg %p106
      $region34: #{basic_block_forward.3} parent=31 // pred_check_branch
        %2993 = sbr.rel (%p2991) target = $region36
      $region35: #{basic_block_forward.3} parent=31 // pred_region
        _
      $region36: #{basic_block_forward.3} parent=31 // pred_fallthru
        _
      // Predicated region
      $region37: #{basic_block_forward.3} parent=31 // pred_check
        %p2994 = pneg %p132
      $region38: #{basic_block_forward.3} parent=31 // pred_check_branch
        %2996 = sbr.rel (%p2994) target = $region40
      $region39: #{basic_block_forward.3} parent=31 // pred_region
        _
      $region40: #{basic_block_forward.3} parent=31 // pred_fallthru
        _
      // Predicated region
      $region41: #{basic_block_forward.3} parent=31 // pred_check
        %p2997 = pneg %p158
      $region42: #{basic_block_forward.3} parent=31 // pred_check_branch
        %2999 = sbr.rel (%p2997) target = $region44
      $region43: #{basic_block_forward.3} parent=31 // pred_region
        _
      $region44: #{basic_block_forward.3} parent=31 // pred_fallthru
        _
      // Predicated region
      $region45: #{basic_block_forward.3} parent=31 // pred_check
        %p3000 = pneg %p184
      $region46: #{basic_block_forward.3} parent=31 // pred_check_branch
        %3002 = sbr.rel (%p3000) target = $region48
      $region47: #{basic_block_forward.3} parent=31 // pred_region
        _
      $region48: #{basic_block_forward.3} parent=31 // pred_fallthru
        _
      // Predicated region
      $region49: #{basic_block_forward.3} parent=31 // pred_check
        %p3003 = pneg %p210
      $region50: #{basic_block_forward.3} parent=31 // pred_check_branch
        %3005 = sbr.rel (%p3003) target = $region52
      $region51: #{basic_block_forward.3} parent=31 // pred_region
        _
      $region52: #{basic_block_forward.3} parent=31 // pred_fallthru
        _
      // Predicated region
      $region53: #{basic_block_forward.3} parent=31 // pred_check
        %p3006 = pneg %p236
      $region54: #{basic_block_forward.3} parent=31 // pred_check_branch
        %3008 = sbr.rel (%p3006) target = $region56
      $region55: #{basic_block_forward.3} parent=31 // pred_region
        _
      $region56: #{basic_block_forward.3} parent=31 // pred_fallthru
        _
    $region32: #{basic_block_forward.3} parent=5 // pred_fallthru
      _
    %p3009 = scmp.le.s32.totalorder 2, %s15
    // Predicated region
    $region57: #{basic_block_forward.3} parent=5 // pred_check
      %p3010 = pneg %p3009
    $region58: #{basic_block_forward.3} parent=5 // pred_check_branch
      %3012 = sbr.rel (%p3010) target = $region60
    $region59: #{basic_block_forward.3} parent=5 // pred_region
      %s3013 = ssub.s32 %s15, 2
      // Predicated region
      $region61: #{basic_block_forward.3} parent=59 // pred_check
        %p3014 = pneg %p112
      $region62: #{basic_block_forward.3} parent=59 // pred_check_branch
        %3016 = sbr.rel (%p3014) target = $region64
      $region63: #{basic_block_forward.3} parent=59 // pred_region
        %p3017 = scmp.lt.s32.totalorder %s21, 1
        %s3018 = scalar_select %p3017, %s21, 1
        %s3019 = smul.addr %s3018, 16
        %s3020 = smul.addr %s3019, 4
        %s3021 = scalar_lea.vmem %s3, %s3020
      $region64: #{basic_block_forward.3} parent=59 // pred_fallthru
        _
      // Predicated region
      $region65: #{basic_block_forward.3} parent=59 // pred_check
        %p3022 = pneg %p138
      $region66: #{basic_block_forward.3} parent=59 // pred_check_branch
        %3024 = sbr.rel (%p3022) target = $region68
      $region67: #{basic_block_forward.3} parent=59 // pred_region
        %p3025 = scmp.lt.s32.totalorder %s21, 1
        %s3026 = scalar_select %p3025, %s21, 1
        %s3027 = scalar_lea.vmem %s4, %s3026
      $region68: #{basic_block_forward.3} parent=59 // pred_fallthru
        _
      // Predicated region
      $region69: #{basic_block_forward.3} parent=59 // pred_check
        %p3028 = pneg %p164
      $region70: #{basic_block_forward.3} parent=59 // pred_check_branch
        %3030 = sbr.rel (%p3028) target = $region72
      $region71: #{basic_block_forward.3} parent=59 // pred_region
        %p3031 = scmp.lt.s32.totalorder %s21, 1
        %s3032 = scalar_select %p3031, %s21, 1
        %s3033 = scalar_lea.vmem %s5, %s3032
      $region72: #{basic_block_forward.3} parent=59 // pred_fallthru
        _
      // Predicated region
      $region73: #{basic_block_forward.3} parent=59 // pred_check
        %p3034 = pneg %p190
      $region74: #{basic_block_forward.3} parent=59 // pred_check_branch
        %3036 = sbr.rel (%p3034) target = $region76
      $region75: #{basic_block_forward.3} parent=59 // pred_region
        %p3037 = scmp.lt.s32.totalorder %s21, 1
        %s3038 = scalar_select %p3037, %s21, 1
        %s3039 = smul.addr %s3038, 11
        %s3040 = smul.addr %s3039, 4
        %s3041 = scalar_lea.vmem %s6, %s3040
      $region76: #{basic_block_forward.3} parent=59 // pred_fallthru
        _
      // Predicated region
      $region77: #{basic_block_forward.3} parent=59 // pred_check
        %p3042 = pneg %p216
      $region78: #{basic_block_forward.3} parent=59 // pred_check_branch
        %3044 = sbr.rel (%p3042) target = $region80
      $region79: #{basic_block_forward.3} parent=59 // pred_region
        %p3045 = scmp.lt.s32.totalorder %s21, 1
        %s3046 = scalar_select %p3045, %s21, 1
        %s3047 = scalar_lea.vmem %s7, %s3046
      $region80: #{basic_block_forward.3} parent=59 // pred_fallthru
        _
      // Predicated region
      $region81: #{basic_block_forward.3} parent=59 // pred_check
        %p3048 = pneg %p242
      $region82: #{basic_block_forward.3} parent=59 // pred_check_branch
        %3050 = sbr.rel (%p3048) target = $region84
      $region83: #{basic_block_forward.3} parent=59 // pred_region
        %p3051 = scmp.lt.s32.totalorder %s21, 1
        %s3052 = scalar_select %p3051, %s21, 1
        %s3053 = scalar_lea.vmem %s8, %s3052
      $region84: #{basic_block_forward.3} parent=59 // pred_fallthru
        _
    $region60: #{basic_block_forward.3} parent=5 // pred_fallthru
      _
  $region6: #{basic_block_forward.3} parent=0 // loop_footer
    %s19 = sadd.s32 1, %s15
  $region7: #{basic_block_forward.3} parent=0 // loop_footer_branch
    %14 = sbr.rel target = $region3
  $region8: #{basic_block_forward.3} parent=0 // loop_exit
    _

</llo_original>
